<compile_context>
chip_gen: v6e
topology: v6e:2x2x1
jax: 0.10.0
libtpu: 0.0.40
codegen_flags: <defaults>
</compile_context>

<pallas_src>
import jax
import jax.numpy as jnp
from jax.experimental import pallas as pl
from jax.experimental.pallas import tpu as pltpu

# ------------------------- small, module-consistent config -------------------
BATCH = 2
IMG_C, IMG_H, IMG_W = 3, 16, 16
BACKBONE_FEATS = 64          # stand-in feature dim for VGG19 / PC-DARTS output
EMBED_SIZE = 32
HIDDEN_SIZE = 32             # QstEncoder.view(1, -1, hidden) => embed == hidden
WORD_EMBED_SIZE = 16
NUM_LAYERS = 1               # the .view(1, ...) in QstEncoder implies 1 layer
QST_VOCAB = 40
ANS_VOCAB = 24
SEQ_LEN = 8

QST_PAD = 128                # lane-dense padded output widths
ANS_PAD = 128

_VMEM = pl.BlockSpec(memory_space=pltpu.MemorySpace.VMEM)
_SMEM = pl.BlockSpec(memory_space=pltpu.MemorySpace.SMEM)


# ------------------------------ fused Pallas kernel ----------------------------
def vqa_fused_kernel(qst_ref,                     # SMEM (B, T) int32 question ids
                     img_ref,                     # (B, C*H*W)
                     wb_ref,                      # (C*H*W, F)  backbone substitute
                     w_imgfc_ref, b_imgfc_ref,    # (F, E), (1, E)
                     wv_ref,                      # (V, Ew)     word2vec table
                     wih_ref, whh_ref, b_lstm_ref,  # (Ew, 4H), (H, 4H), (1, 4H)
                     w_q1_ref, b_q1_ref,          # (2H, E), (1, E)
                     w_q2_ref, b_q2_ref,          # (H, QST_PAD), (1, QST_PAD)
                     w_a1_ref, b_a1_ref,          # (E, ANS_VOCAB), (1, ANS_VOCAB)
                     w_a2_ref, b_a2_ref,          # (ANS_VOCAB, ANS_PAD), (1, ANS_PAD)
                     ans_ref,                     # out (B, ANS_PAD)
                     qout_ref):                   # out (B*T, QST_PAD), batch-major
    B, T = qst_ref.shape
    V = wv_ref.shape[0]
    H = whh_ref.shape[0]

    # ---- ImgEncoder: backbone substitute -> fc -> L2 normalize -----------------
    # TODO(synk): the pretrained VGG19 / PC-DARTS backbone is not defined in the
    # source module; it is replaced by a single synthetic linear feature
    # extractor (wb).  fc + L2 row-normalization match ImgEncoderFixed.forward.
    feat = jnp.dot(img_ref[...], wb_ref[...], preferred_element_type=jnp.float32)
    y = (jnp.dot(feat, w_imgfc_ref[...], preferred_element_type=jnp.float32)
         + b_imgfc_ref[...])
    inv_norm = jax.lax.rsqrt(jnp.sum(y * y, axis=-1, keepdims=True) + 1e-12)
    img_feature = y * inv_norm                                          # (B, E)

    # ---- word embedding gather (one-hot @ table on the MXU), tanh hoisted ------
    lane_iota = jax.lax.broadcasted_iota(jnp.int32, (1, V), 1)
    onehot_rows = []
    for t in range(T):                     # t-major rows: row = t*B + b
        for b in range(B):
            onehot_rows.append((lane_iota == qst_ref[b, t]).astype(jnp.float32))
    onehot = jnp.concatenate(onehot_rows, axis=0)                       # (T*B, V)
    x_all = jnp.tanh(jnp.dot(onehot, wv_ref[...],
                             preferred_element_type=jnp.float32))       # (T*B, Ew)

    # ---- LSTM (num_layers=1), h0 = c0 = img_feature (embed == hidden) ----------
    bias = b_lstm_ref[...]                 # read / broadcast once, outside the loop
    w_ih = wih_ref[...]
    w_hh = whh_ref[...]
    h = img_feature
    c = img_feature
    h_seq = []
    for t in range(T):                     # statically unrolled recurrence (T=8)
        x_t = x_all[t * B:(t + 1) * B, :]
        gates = (jnp.dot(x_t, w_ih, preferred_element_type=jnp.float32)
                 + jnp.dot(h, w_hh, preferred_element_type=jnp.float32)
                 + bias)
        i = jax.nn.sigmoid(gates[:, 0:H])  # PyTorch LSTM gate order: i, f, g, o
        f = jax.nn.sigmoid(gates[:, H:2 * H])
        g = jnp.tanh(gates[:, 2 * H:3 * H])
        o = jax.nn.sigmoid(gates[:, 3 * H:4 * H])
        c = f * c + i * g
        h = o * jnp.tanh(c)
        h_seq.append(h)

    # ---- qst_out = fc2(tanh(out)) for all steps in ONE matmul, batch-major -----
    hs = jnp.concatenate([h_seq[t][b:b + 1, :] for b in range(B) for t in range(T)],
                         axis=0)                                        # (B*T, H)
    qout_ref[...] = (jnp.dot(jnp.tanh(hs), w_q2_ref[...],
                             preferred_element_type=jnp.float32) + b_q2_ref[...])

    # ---- qst_feature = fc1(tanh(cat(hidden, cell))) -----------------------------
    qst_feature = (jnp.dot(jnp.tanh(jnp.concatenate([h, c], axis=-1)), w_q1_ref[...],
                           preferred_element_type=jnp.float32) + b_q1_ref[...])

    # ---- VqaModel head: mul -> tanh -> (dropout=id) -> fc1 -> tanh -> fc2 -------
    combined = jnp.tanh(img_feature * qst_feature)
    z = jnp.tanh(jnp.dot(combined, w_a1_ref[...],
                         preferred_element_type=jnp.float32) + b_a1_ref[...])
    ans_ref[...] = (jnp.dot(z, w_a2_ref[...],
                            preferred_element_type=jnp.float32) + b_a2_ref[...])


# ------------------------------ wrapper ----------------------------------------
@jax.jit
def vqa_forward(params, img, qst):
    B = img.shape[0]
    T = qst.shape[1]
    img_flat = img.reshape(B, -1).astype(jnp.float32)

    ans_pad, qout_pad = pl.pallas_call(
        vqa_fused_kernel,
        out_shape=(jax.ShapeDtypeStruct((B, ANS_PAD), jnp.float32),
                   jax.ShapeDtypeStruct((B * T, QST_PAD), jnp.float32)),
        in_specs=[_SMEM] + [_VMEM] * 16,
        out_specs=(_VMEM, _VMEM),
    )(qst.astype(jnp.int32), img_flat,
      params["w_backbone"], params["w_img_fc"], params["b_img_fc"],
      params["word2vec"],
      params["w_ih"], params["w_hh"], params["b_lstm"],
      params["w_fc1_q"], params["b_fc1_q"],
      params["w_fc2_q_pad"], params["b_fc2_q_pad"],
      params["w_fc1"], params["b_fc1"],
      params["w_fc2_pad"], params["b_fc2_pad"])

    ans_out = ans_pad[:, :ANS_VOCAB]                                    # (B, ans)
    qst_out = qout_pad.reshape(B, T, QST_PAD)[:, :, :QST_VOCAB]         # (B, T, V)
    return ans_out, qst_out


# ------------------------------ parameters -------------------------------------
def init_params(key):
    ks = jax.random.split(key, 11)

    def lin(k, fan_in, fan_out):
        scale = 1.0 / jnp.sqrt(jnp.float32(fan_in))
        return jax.random.uniform(k, (fan_in, fan_out), jnp.float32, -scale, scale)

    p = {}
    # ImgEncoder (backbone substitute + fc + L2 norm)
    p["w_backbone"] = lin(ks[0], IMG_C * IMG_H * IMG_W, BACKBONE_FEATS)
    p["w_img_fc"] = lin(ks[1], BACKBONE_FEATS, EMBED_SIZE)
    p["b_img_fc"] = jnp.zeros((1, EMBED_SIZE), jnp.float32)
    # QstEncoder
    p["word2vec"] = jax.random.normal(ks[2], (QST_VOCAB, WORD_EMBED_SIZE), jnp.float32) * 0.1
    p["w_ih"] = lin(ks[3], WORD_EMBED_SIZE, 4 * HIDDEN_SIZE)            # (Ew, 4H)
    p["w_hh"] = lin(ks[4], HIDDEN_SIZE, 4 * HIDDEN_SIZE)                # (H, 4H)
    p["b_lstm"] = (jax.random.uniform(ks[5], (1, 4 * HIDDEN_SIZE), jnp.float32, -0.1, 0.1)
                   + jax.random.uniform(ks[6], (1, 4 * HIDDEN_SIZE), jnp.float32, -0.1, 0.1))
    p["w_fc1_q"] = lin(ks[7], 2 * NUM_LAYERS * HIDDEN_SIZE, EMBED_SIZE)
    p["b_fc1_q"] = jnp.zeros((1, EMBED_SIZE), jnp.float32)
    p["w_fc2_q"] = lin(ks[8], HIDDEN_SIZE, QST_VOCAB)
    p["b_fc2_q"] = jnp.zeros((1, QST_VOCAB), jnp.float32)
    # VqaModel head
    p["w_fc1"] = lin(ks[9], EMBED_SIZE, ANS_VOCAB)
    p["b_fc1"] = jnp.zeros((1, ANS_VOCAB), jnp.float32)
    p["w_fc2"] = lin(ks[10], ANS_VOCAB, ANS_VOCAB)
    p["b_fc2"] = jnp.zeros((1, ANS_VOCAB), jnp.float32)

    # lane-dense (128-wide) padded copies of the output-producing weights so the
    # kernel's stores are unmasked; padding is sliced off in the wrapper.
    def pad_cols(w, n):
        return jnp.pad(w, ((0, 0), (0, n - w.shape[1])))
    p["w_fc2_q_pad"] = pad_cols(p["w_fc2_q"], QST_PAD)
    p["b_fc2_q_pad"] = pad_cols(p["b_fc2_q"], QST_PAD)
    p["w_fc2_pad"] = pad_cols(p["w_fc2"], ANS_PAD)
    p["b_fc2_pad"] = pad_cols(p["b_fc2"], ANS_PAD)
    return p


# ------------------------------ pure-JAX reference ------------------------------
@jax.jit
def vqa_forward_ref(params, img, qst):
    hi = jax.lax.Precision.HIGHEST
    B = img.shape[0]
    T = qst.shape[1]
    H = HIDDEN_SIZE

    x = img.reshape(B, -1).astype(jnp.float32)
    feat = jnp.dot(x, params["w_backbone"], precision=hi)
    y = jnp.dot(feat, params["w_img_fc"], precision=hi) + params["b_img_fc"]
    img_feature = y / jnp.sqrt(jnp.sum(y * y, axis=-1, keepdims=True) + 1e-12)

    emb = jnp.tanh(jnp.take(params["word2vec"], qst, axis=0))           # (B, T, Ew)
    h = img_feature
    c = img_feature
    outs = []
    for t in range(T):
        gates = (jnp.dot(emb[:, t, :], params["w_ih"], precision=hi)
                 + jnp.dot(h, params["w_hh"], precision=hi) + params["b_lstm"])
        i = jax.nn.sigmoid(gates[:, 0:H])
        f = jax.nn.sigmoid(gates[:, H:2 * H])
        g = jnp.tanh(gates[:, 2 * H:3 * H])
        o = jax.nn.sigmoid(gates[:, 3 * H:4 * H])
        c = f * c + i * g
        h = o * jnp.tanh(c)
        outs.append(h)

    qst_feature = (jnp.dot(jnp.tanh(jnp.concatenate([h, c], axis=-1)),
                           params["w_fc1_q"], precision=hi) + params["b_fc1_q"])
    out_bt = jnp.stack(outs, axis=1)                                    # (B, T, H)
    qst_out = jnp.dot(jnp.tanh(out_bt), params["w_fc2_q"], precision=hi) + params["b_fc2_q"]

    combined = jnp.tanh(img_feature * qst_feature)
    z = jnp.tanh(jnp.dot(combined, params["w_fc1"], precision=hi) + params["b_fc1"])
    ans = jnp.dot(z, params["w_fc2"], precision=hi) + params["b_fc2"]
    return ans, qst_out


# ------------------------------ main ---------------------------------------------
if __name__ == "__main__":
    key = jax.random.PRNGKey(0)
    k_param, k_img, k_qst = jax.random.split(key, 3)

    params = init_params(k_param)
    img = jax.random.normal(k_img, (BATCH, IMG_C, IMG_H, IMG_W), jnp.float32)   # NCHW
    qst = jax.random.randint(k_qst, (BATCH, SEQ_LEN), 0, QST_VOCAB, jnp.int32)

    ans_out, qst_out = vqa_forward(params, img, qst)
    jax.block_until_ready((ans_out, qst_out))

    assert ans_out.shape == (BATCH, ANS_VOCAB)
    assert qst_out.shape == (BATCH, SEQ_LEN, QST_VOCAB)

    ref_ans, ref_qst = vqa_forward_ref(params, img, qst)
    assert jnp.allclose(ans_out, ref_ans, rtol=5e-3, atol=5e-3)
    assert jnp.allclose(qst_out, ref_qst, rtol=5e-3, atol=5e-3)

    print("KERNEL_OK")
</pallas_src>

<mosaic_0001>
module attributes {stable_mosaic.version = 11 : i64} {
  func.func @vqa_fused_kernel(%arg0: memref<2x8xi32, #tpu.memory_space<smem>>, %arg1: memref<2x768xf32, #tpu.memory_space<vmem>>, %arg2: memref<768x64xf32, #tpu.memory_space<vmem>>, %arg3: memref<64x32xf32, #tpu.memory_space<vmem>>, %arg4: memref<1x32xf32, #tpu.memory_space<vmem>>, %arg5: memref<40x16xf32, #tpu.memory_space<vmem>>, %arg6: memref<16x128xf32, #tpu.memory_space<vmem>>, %arg7: memref<32x128xf32, #tpu.memory_space<vmem>>, %arg8: memref<1x128xf32, #tpu.memory_space<vmem>>, %arg9: memref<64x32xf32, #tpu.memory_space<vmem>>, %arg10: memref<1x32xf32, #tpu.memory_space<vmem>>, %arg11: memref<32x128xf32, #tpu.memory_space<vmem>>, %arg12: memref<1x128xf32, #tpu.memory_space<vmem>>, %arg13: memref<32x24xf32, #tpu.memory_space<vmem>>, %arg14: memref<1x24xf32, #tpu.memory_space<vmem>>, %arg15: memref<24x128xf32, #tpu.memory_space<vmem>>, %arg16: memref<1x128xf32, #tpu.memory_space<vmem>>, %arg17: memref<2x128xf32, #tpu.memory_space<vmem>>, %arg18: memref<16x128xf32, #tpu.memory_space<vmem>>) attributes {dimension_semantics = [], scalar_prefetch = 0 : i64, scratch_operands = 0 : i64, tpu.core_type = #tpu.core_type<tc>} {
    %c0 = arith.constant 0 : index
    %c0_0 = arith.constant 0 : index
    %0 = vector.load %arg1[%c0, %c0_0] : memref<2x768xf32, #tpu.memory_space<vmem>>, vector<2x768xf32>
    %c0_1 = arith.constant 0 : index
    %c0_2 = arith.constant 0 : index
    %1 = vector.load %arg2[%c0_1, %c0_2] : memref<768x64xf32, #tpu.memory_space<vmem>>, vector<768x64xf32>
    %cst = arith.constant dense<0.000000e+00> : vector<2x64xf32>
    %2 = tpu.matmul %0, %1, %cst {dimension_numbers = #tpu.dot_dimension_numbers<[1], [0], [0], [1], [0, 0, 1, 1], [], []>} : vector<2x768xf32>, vector<768x64xf32>, vector<2x64xf32> -> vector<2x64xf32>
    %c0_3 = arith.constant 0 : index
    %c0_4 = arith.constant 0 : index
    %3 = vector.load %arg3[%c0_3, %c0_4] : memref<64x32xf32, #tpu.memory_space<vmem>>, vector<64x32xf32>
    %cst_5 = arith.constant dense<0.000000e+00> : vector<2x32xf32>
    %4 = tpu.matmul %2, %3, %cst_5 {dimension_numbers = #tpu.dot_dimension_numbers<[1], [0], [0], [1], [0, 0, 1, 1], [], []>} : vector<2x64xf32>, vector<64x32xf32>, vector<2x32xf32> -> vector<2x32xf32>
    %c0_6 = arith.constant 0 : index
    %c0_7 = arith.constant 0 : index
    %5 = vector.load %arg4[%c0_6, %c0_7] : memref<1x32xf32, #tpu.memory_space<vmem>>, vector<1x32xf32>
    %6 = vector.broadcast %5 : vector<1x32xf32> to vector<2x32xf32>
    %7 = arith.addf %4, %6 : vector<2x32xf32>
    %8 = arith.mulf %7, %7 : vector<2x32xf32>
    %cst_8 = arith.constant dense<0.000000e+00> : vector<2xf32>
    %9 = vector.multi_reduction <add>, %8, %cst_8 [1] : vector<2x32xf32> to vector<2xf32>
    %10 = vector.shape_cast %9 : vector<2xf32> to vector<2x1xf32>
    %cst_9 = arith.constant 9.99999996E-13 : f32
    %11 = vector.broadcast %cst_9 : f32 to vector<2x1xf32>
    %12 = arith.addf %10, %11 : vector<2x1xf32>
    %13 = math.rsqrt %12 : vector<2x1xf32>
    %14 = vector.broadcast %13 : vector<2x1xf32> to vector<2x32xf32>
    %15 = arith.mulf %7, %14 : vector<2x32xf32>
    %16 = tpu.iota {dimensions = array<i32: 1>} : vector<1x40xi32>
    %c0_10 = arith.constant 0 : index
    %c0_11 = arith.constant 0 : index
    %17 = memref.load %arg0[%c0_10, %c0_11] : memref<2x8xi32, #tpu.memory_space<smem>>
    %18 = vector.broadcast %17 : i32 to vector<1x40xi32>
    %19 = arith.cmpi eq, %16, %18 : vector<1x40xi32>
    %20 = arith.extui %19 : vector<1x40xi1> to vector<1x40xi32>
    %21 = arith.sitofp %20 : vector<1x40xi32> to vector<1x40xf32>
    %c1 = arith.constant 1 : index
    %c0_12 = arith.constant 0 : index
    %22 = memref.load %arg0[%c1, %c0_12] : memref<2x8xi32, #tpu.memory_space<smem>>
    %23 = vector.broadcast %22 : i32 to vector<1x40xi32>
    %24 = arith.cmpi eq, %16, %23 : vector<1x40xi32>
    %25 = arith.extui %24 : vector<1x40xi1> to vector<1x40xi32>
    %26 = arith.sitofp %25 : vector<1x40xi32> to vector<1x40xf32>
    %c0_13 = arith.constant 0 : index
    %c1_14 = arith.constant 1 : index
    %27 = memref.load %arg0[%c0_13, %c1_14] : memref<2x8xi32, #tpu.memory_space<smem>>
    %28 = vector.broadcast %27 : i32 to vector<1x40xi32>
    %29 = arith.cmpi eq, %16, %28 : vector<1x40xi32>
    %30 = arith.extui %29 : vector<1x40xi1> to vector<1x40xi32>
    %31 = arith.sitofp %30 : vector<1x40xi32> to vector<1x40xf32>
    %c1_15 = arith.constant 1 : index
    %c1_16 = arith.constant 1 : index
    %32 = memref.load %arg0[%c1_15, %c1_16] : memref<2x8xi32, #tpu.memory_space<smem>>
    %33 = vector.broadcast %32 : i32 to vector<1x40xi32>
    %34 = arith.cmpi eq, %16, %33 : vector<1x40xi32>
    %35 = arith.extui %34 : vector<1x40xi1> to vector<1x40xi32>
    %36 = arith.sitofp %35 : vector<1x40xi32> to vector<1x40xf32>
    %c0_17 = arith.constant 0 : index
    %c2 = arith.constant 2 : index
    %37 = memref.load %arg0[%c0_17, %c2] : memref<2x8xi32, #tpu.memory_space<smem>>
    %38 = vector.broadcast %37 : i32 to vector<1x40xi32>
    %39 = arith.cmpi eq, %16, %38 : vector<1x40xi32>
    %40 = arith.extui %39 : vector<1x40xi1> to vector<1x40xi32>
    %41 = arith.sitofp %40 : vector<1x40xi32> to vector<1x40xf32>
    %c1_18 = arith.constant 1 : index
    %c2_19 = arith.constant 2 : index
    %42 = memref.load %arg0[%c1_18, %c2_19] : memref<2x8xi32, #tpu.memory_space<smem>>
    %43 = vector.broadcast %42 : i32 to vector<1x40xi32>
    %44 = arith.cmpi eq, %16, %43 : vector<1x40xi32>
    %45 = arith.extui %44 : vector<1x40xi1> to vector<1x40xi32>
    %46 = arith.sitofp %45 : vector<1x40xi32> to vector<1x40xf32>
    %c0_20 = arith.constant 0 : index
    %c3 = arith.constant 3 : index
    %47 = memref.load %arg0[%c0_20, %c3] : memref<2x8xi32, #tpu.memory_space<smem>>
    %48 = vector.broadcast %47 : i32 to vector<1x40xi32>
    %49 = arith.cmpi eq, %16, %48 : vector<1x40xi32>
    %50 = arith.extui %49 : vector<1x40xi1> to vector<1x40xi32>
    %51 = arith.sitofp %50 : vector<1x40xi32> to vector<1x40xf32>
    %c1_21 = arith.constant 1 : index
    %c3_22 = arith.constant 3 : index
    %52 = memref.load %arg0[%c1_21, %c3_22] : memref<2x8xi32, #tpu.memory_space<smem>>
    %53 = vector.broadcast %52 : i32 to vector<1x40xi32>
    %54 = arith.cmpi eq, %16, %53 : vector<1x40xi32>
    %55 = arith.extui %54 : vector<1x40xi1> to vector<1x40xi32>
    %56 = arith.sitofp %55 : vector<1x40xi32> to vector<1x40xf32>
    %c0_23 = arith.constant 0 : index
    %c4 = arith.constant 4 : index
    %57 = memref.load %arg0[%c0_23, %c4] : memref<2x8xi32, #tpu.memory_space<smem>>
    %58 = vector.broadcast %57 : i32 to vector<1x40xi32>
    %59 = arith.cmpi eq, %16, %58 : vector<1x40xi32>
    %60 = arith.extui %59 : vector<1x40xi1> to vector<1x40xi32>
    %61 = arith.sitofp %60 : vector<1x40xi32> to vector<1x40xf32>
    %c1_24 = arith.constant 1 : index
    %c4_25 = arith.constant 4 : index
    %62 = memref.load %arg0[%c1_24, %c4_25] : memref<2x8xi32, #tpu.memory_space<smem>>
    %63 = vector.broadcast %62 : i32 to vector<1x40xi32>
    %64 = arith.cmpi eq, %16, %63 : vector<1x40xi32>
    %65 = arith.extui %64 : vector<1x40xi1> to vector<1x40xi32>
    %66 = arith.sitofp %65 : vector<1x40xi32> to vector<1x40xf32>
    %c0_26 = arith.constant 0 : index
    %c5 = arith.constant 5 : index
    %67 = memref.load %arg0[%c0_26, %c5] : memref<2x8xi32, #tpu.memory_space<smem>>
    %68 = vector.broadcast %67 : i32 to vector<1x40xi32>
    %69 = arith.cmpi eq, %16, %68 : vector<1x40xi32>
    %70 = arith.extui %69 : vector<1x40xi1> to vector<1x40xi32>
    %71 = arith.sitofp %70 : vector<1x40xi32> to vector<1x40xf32>
    %c1_27 = arith.constant 1 : index
    %c5_28 = arith.constant 5 : index
    %72 = memref.load %arg0[%c1_27, %c5_28] : memref<2x8xi32, #tpu.memory_space<smem>>
    %73 = vector.broadcast %72 : i32 to vector<1x40xi32>
    %74 = arith.cmpi eq, %16, %73 : vector<1x40xi32>
    %75 = arith.extui %74 : vector<1x40xi1> to vector<1x40xi32>
    %76 = arith.sitofp %75 : vector<1x40xi32> to vector<1x40xf32>
    %c0_29 = arith.constant 0 : index
    %c6 = arith.constant 6 : index
    %77 = memref.load %arg0[%c0_29, %c6] : memref<2x8xi32, #tpu.memory_space<smem>>
    %78 = vector.broadcast %77 : i32 to vector<1x40xi32>
    %79 = arith.cmpi eq, %16, %78 : vector<1x40xi32>
    %80 = arith.extui %79 : vector<1x40xi1> to vector<1x40xi32>
    %81 = arith.sitofp %80 : vector<1x40xi32> to vector<1x40xf32>
    %c1_30 = arith.constant 1 : index
    %c6_31 = arith.constant 6 : index
    %82 = memref.load %arg0[%c1_30, %c6_31] : memref<2x8xi32, #tpu.memory_space<smem>>
    %83 = vector.broadcast %82 : i32 to vector<1x40xi32>
    %84 = arith.cmpi eq, %16, %83 : vector<1x40xi32>
    %85 = arith.extui %84 : vector<1x40xi1> to vector<1x40xi32>
    %86 = arith.sitofp %85 : vector<1x40xi32> to vector<1x40xf32>
    %c0_32 = arith.constant 0 : index
    %c7 = arith.constant 7 : index
    %87 = memref.load %arg0[%c0_32, %c7] : memref<2x8xi32, #tpu.memory_space<smem>>
    %88 = vector.broadcast %87 : i32 to vector<1x40xi32>
    %89 = arith.cmpi eq, %16, %88 : vector<1x40xi32>
    %90 = arith.extui %89 : vector<1x40xi1> to vector<1x40xi32>
    %91 = arith.sitofp %90 : vector<1x40xi32> to vector<1x40xf32>
    %c1_33 = arith.constant 1 : index
    %c7_34 = arith.constant 7 : index
    %92 = memref.load %arg0[%c1_33, %c7_34] : memref<2x8xi32, #tpu.memory_space<smem>>
    %93 = vector.broadcast %92 : i32 to vector<1x40xi32>
    %94 = arith.cmpi eq, %16, %93 : vector<1x40xi32>
    %95 = arith.extui %94 : vector<1x40xi1> to vector<1x40xi32>
    %96 = arith.sitofp %95 : vector<1x40xi32> to vector<1x40xf32>
    %97 = tpu.concatenate %21, %26, %31, %36, %41, %46, %51, %56, %61, %66, %71, %76, %81, %86, %91, %96 in 0 : vector<1x40xf32>, vector<1x40xf32>, vector<1x40xf32>, vector<1x40xf32>, vector<1x40xf32>, vector<1x40xf32>, vector<1x40xf32>, vector<1x40xf32>, vector<1x40xf32>, vector<1x40xf32>, vector<1x40xf32>, vector<1x40xf32>, vector<1x40xf32>, vector<1x40xf32>, vector<1x40xf32>, vector<1x40xf32> -> vector<16x40xf32>
    %c0_35 = arith.constant 0 : index
    %c0_36 = arith.constant 0 : index
    %98 = vector.load %arg5[%c0_35, %c0_36] : memref<40x16xf32, #tpu.memory_space<vmem>>, vector<40x16xf32>
    %cst_37 = arith.constant dense<0.000000e+00> : vector<16x16xf32>
    %99 = tpu.matmul %97, %98, %cst_37 {dimension_numbers = #tpu.dot_dimension_numbers<[1], [0], [0], [1], [0, 0, 1, 1], [], []>} : vector<16x40xf32>, vector<40x16xf32>, vector<16x16xf32> -> vector<16x16xf32>
    %100 = math.tanh %99 : vector<16x16xf32>
    %c0_38 = arith.constant 0 : index
    %c0_39 = arith.constant 0 : index
    %101 = vector.load %arg8[%c0_38, %c0_39] : memref<1x128xf32, #tpu.memory_space<vmem>>, vector<1x128xf32>
    %c0_40 = arith.constant 0 : index
    %c0_41 = arith.constant 0 : index
    %102 = vector.load %arg6[%c0_40, %c0_41] : memref<16x128xf32, #tpu.memory_space<vmem>>, vector<16x128xf32>
    %c0_42 = arith.constant 0 : index
    %c0_43 = arith.constant 0 : index
    %103 = vector.load %arg7[%c0_42, %c0_43] : memref<32x128xf32, #tpu.memory_space<vmem>>, vector<32x128xf32>
    %104 = vector.extract_strided_slice %100 {offsets = [0, 0], sizes = [2, 16], strides = [1, 1]} : vector<16x16xf32> to vector<2x16xf32>
    %cst_44 = arith.constant dense<0.000000e+00> : vector<2x128xf32>
    %105 = tpu.matmul %104, %102, %cst_44 {dimension_numbers = #tpu.dot_dimension_numbers<[1], [0], [0], [1], [0, 0, 1, 1], [], []>} : vector<2x16xf32>, vector<16x128xf32>, vector<2x128xf32> -> vector<2x128xf32>
    %cst_45 = arith.constant dense<0.000000e+00> : vector<2x128xf32>
    %106 = tpu.matmul %15, %103, %cst_45 {dimension_numbers = #tpu.dot_dimension_numbers<[1], [0], [0], [1], [0, 0, 1, 1], [], []>} : vector<2x32xf32>, vector<32x128xf32>, vector<2x128xf32> -> vector<2x128xf32>
    %107 = arith.addf %105, %106 : vector<2x128xf32>
    %108 = vector.broadcast %101 : vector<1x128xf32> to vector<2x128xf32>
    %109 = arith.addf %107, %108 : vector<2x128xf32>
    %110 = vector.extract_strided_slice %109 {offsets = [0, 0], sizes = [2, 32], strides = [1, 1]} : vector<2x128xf32> to vector<2x32xf32>
    %111 = arith.negf %110 : vector<2x32xf32>
    %112 = math.exp %111 : vector<2x32xf32>
    %cst_46 = arith.constant 1.000000e+00 : f32
    %113 = vector.broadcast %cst_46 : f32 to vector<2x32xf32>
    %114 = arith.addf %113, %112 : vector<2x32xf32>
    %115 = arith.divf %113, %114 : vector<2x32xf32>
    %116 = vector.extract_strided_slice %109 {offsets = [0, 32], sizes = [2, 32], strides = [1, 1]} : vector<2x128xf32> to vector<2x32xf32>
    %117 = arith.negf %116 : vector<2x32xf32>
    %118 = math.exp %117 : vector<2x32xf32>
    %cst_47 = arith.constant 1.000000e+00 : f32
    %119 = vector.broadcast %cst_47 : f32 to vector<2x32xf32>
    %120 = arith.addf %119, %118 : vector<2x32xf32>
    %121 = arith.divf %119, %120 : vector<2x32xf32>
    %122 = vector.extract_strided_slice %109 {offsets = [0, 64], sizes = [2, 32], strides = [1, 1]} : vector<2x128xf32> to vector<2x32xf32>
    %123 = math.tanh %122 : vector<2x32xf32>
    %124 = vector.extract_strided_slice %109 {offsets = [0, 96], sizes = [2, 32], strides = [1, 1]} : vector<2x128xf32> to vector<2x32xf32>
    %125 = arith.negf %124 : vector<2x32xf32>
    %126 = math.exp %125 : vector<2x32xf32>
    %cst_48 = arith.constant 1.000000e+00 : f32
    %127 = vector.broadcast %cst_48 : f32 to vector<2x32xf32>
    %128 = arith.addf %127, %126 : vector<2x32xf32>
    %129 = arith.divf %127, %128 : vector<2x32xf32>
    %130 = arith.mulf %121, %15 : vector<2x32xf32>
    %131 = arith.mulf %115, %123 : vector<2x32xf32>
    %132 = arith.addf %130, %131 : vector<2x32xf32>
    %133 = math.tanh %132 : vector<2x32xf32>
    %134 = arith.mulf %129, %133 : vector<2x32xf32>
    %135 = vector.extract_strided_slice %100 {offsets = [2, 0], sizes = [2, 16], strides = [1, 1]} : vector<16x16xf32> to vector<2x16xf32>
    %cst_49 = arith.constant dense<0.000000e+00> : vector<2x128xf32>
    %136 = tpu.matmul %135, %102, %cst_49 {dimension_numbers = #tpu.dot_dimension_numbers<[1], [0], [0], [1], [0, 0, 1, 1], [], []>} : vector<2x16xf32>, vector<16x128xf32>, vector<2x128xf32> -> vector<2x128xf32>
    %cst_50 = arith.constant dense<0.000000e+00> : vector<2x128xf32>
    %137 = tpu.matmul %134, %103, %cst_50 {dimension_numbers = #tpu.dot_dimension_numbers<[1], [0], [0], [1], [0, 0, 1, 1], [], []>} : vector<2x32xf32>, vector<32x128xf32>, vector<2x128xf32> -> vector<2x128xf32>
    %138 = arith.addf %136, %137 : vector<2x128xf32>
    %139 = vector.broadcast %101 : vector<1x128xf32> to vector<2x128xf32>
    %140 = arith.addf %138, %139 : vector<2x128xf32>
    %141 = vector.extract_strided_slice %140 {offsets = [0, 0], sizes = [2, 32], strides = [1, 1]} : vector<2x128xf32> to vector<2x32xf32>
    %142 = arith.negf %141 : vector<2x32xf32>
    %143 = math.exp %142 : vector<2x32xf32>
    %cst_51 = arith.constant 1.000000e+00 : f32
    %144 = vector.broadcast %cst_51 : f32 to vector<2x32xf32>
    %145 = arith.addf %144, %143 : vector<2x32xf32>
    %146 = arith.divf %144, %145 : vector<2x32xf32>
    %147 = vector.extract_strided_slice %140 {offsets = [0, 32], sizes = [2, 32], strides = [1, 1]} : vector<2x128xf32> to vector<2x32xf32>
    %148 = arith.negf %147 : vector<2x32xf32>
    %149 = math.exp %148 : vector<2x32xf32>
    %cst_52 = arith.constant 1.000000e+00 : f32
    %150 = vector.broadcast %cst_52 : f32 to vector<2x32xf32>
    %151 = arith.addf %150, %149 : vector<2x32xf32>
    %152 = arith.divf %150, %151 : vector<2x32xf32>
    %153 = vector.extract_strided_slice %140 {offsets = [0, 64], sizes = [2, 32], strides = [1, 1]} : vector<2x128xf32> to vector<2x32xf32>
    %154 = math.tanh %153 : vector<2x32xf32>
    %155 = vector.extract_strided_slice %140 {offsets = [0, 96], sizes = [2, 32], strides = [1, 1]} : vector<2x128xf32> to vector<2x32xf32>
    %156 = arith.negf %155 : vector<2x32xf32>
    %157 = math.exp %156 : vector<2x32xf32>
    %cst_53 = arith.constant 1.000000e+00 : f32
    %158 = vector.broadcast %cst_53 : f32 to vector<2x32xf32>
    %159 = arith.addf %158, %157 : vector<2x32xf32>
    %160 = arith.divf %158, %159 : vector<2x32xf32>
    %161 = arith.mulf %152, %132 : vector<2x32xf32>
    %162 = arith.mulf %146, %154 : vector<2x32xf32>
    %163 = arith.addf %161, %162 : vector<2x32xf32>
    %164 = math.tanh %163 : vector<2x32xf32>
    %165 = arith.mulf %160, %164 : vector<2x32xf32>
    %166 = vector.extract_strided_slice %100 {offsets = [4, 0], sizes = [2, 16], strides = [1, 1]} : vector<16x16xf32> to vector<2x16xf32>
    %cst_54 = arith.constant dense<0.000000e+00> : vector<2x128xf32>
    %167 = tpu.matmul %166, %102, %cst_54 {dimension_numbers = #tpu.dot_dimension_numbers<[1], [0], [0], [1], [0, 0, 1, 1], [], []>} : vector<2x16xf32>, vector<16x128xf32>, vector<2x128xf32> -> vector<2x128xf32>
    %cst_55 = arith.constant dense<0.000000e+00> : vector<2x128xf32>
    %168 = tpu.matmul %165, %103, %cst_55 {dimension_numbers = #tpu.dot_dimension_numbers<[1], [0], [0], [1], [0, 0, 1, 1], [], []>} : vector<2x32xf32>, vector<32x128xf32>, vector<2x128xf32> -> vector<2x128xf32>
    %169 = arith.addf %167, %168 : vector<2x128xf32>
    %170 = vector.broadcast %101 : vector<1x128xf32> to vector<2x128xf32>
    %171 = arith.addf %169, %170 : vector<2x128xf32>
    %172 = vector.extract_strided_slice %171 {offsets = [0, 0], sizes = [2, 32], strides = [1, 1]} : vector<2x128xf32> to vector<2x32xf32>
    %173 = arith.negf %172 : vector<2x32xf32>
    %174 = math.exp %173 : vector<2x32xf32>
    %cst_56 = arith.constant 1.000000e+00 : f32
    %175 = vector.broadcast %cst_56 : f32 to vector<2x32xf32>
    %176 = arith.addf %175, %174 : vector<2x32xf32>
    %177 = arith.divf %175, %176 : vector<2x32xf32>
    %178 = vector.extract_strided_slice %171 {offsets = [0, 32], sizes = [2, 32], strides = [1, 1]} : vector<2x128xf32> to vector<2x32xf32>
    %179 = arith.negf %178 : vector<2x32xf32>
    %180 = math.exp %179 : vector<2x32xf32>
    %cst_57 = arith.constant 1.000000e+00 : f32
    %181 = vector.broadcast %cst_57 : f32 to vector<2x32xf32>
    %182 = arith.addf %181, %180 : vector<2x32xf32>
    %183 = arith.divf %181, %182 : vector<2x32xf32>
    %184 = vector.extract_strided_slice %171 {offsets = [0, 64], sizes = [2, 32], strides = [1, 1]} : vector<2x128xf32> to vector<2x32xf32>
    %185 = math.tanh %184 : vector<2x32xf32>
    %186 = vector.extract_strided_slice %171 {offsets = [0, 96], sizes = [2, 32], strides = [1, 1]} : vector<2x128xf32> to vector<2x32xf32>
    %187 = arith.negf %186 : vector<2x32xf32>
    %188 = math.exp %187 : vector<2x32xf32>
    %cst_58 = arith.constant 1.000000e+00 : f32
    %189 = vector.broadcast %cst_58 : f32 to vector<2x32xf32>
    %190 = arith.addf %189, %188 : vector<2x32xf32>
    %191 = arith.divf %189, %190 : vector<2x32xf32>
    %192 = arith.mulf %183, %163 : vector<2x32xf32>
    %193 = arith.mulf %177, %185 : vector<2x32xf32>
    %194 = arith.addf %192, %193 : vector<2x32xf32>
    %195 = math.tanh %194 : vector<2x32xf32>
    %196 = arith.mulf %191, %195 : vector<2x32xf32>
    %197 = vector.extract_strided_slice %100 {offsets = [6, 0], sizes = [2, 16], strides = [1, 1]} : vector<16x16xf32> to vector<2x16xf32>
    %cst_59 = arith.constant dense<0.000000e+00> : vector<2x128xf32>
    %198 = tpu.matmul %197, %102, %cst_59 {dimension_numbers = #tpu.dot_dimension_numbers<[1], [0], [0], [1], [0, 0, 1, 1], [], []>} : vector<2x16xf32>, vector<16x128xf32>, vector<2x128xf32> -> vector<2x128xf32>
    %cst_60 = arith.constant dense<0.000000e+00> : vector<2x128xf32>
    %199 = tpu.matmul %196, %103, %cst_60 {dimension_numbers = #tpu.dot_dimension_numbers<[1], [0], [0], [1], [0, 0, 1, 1], [], []>} : vector<2x32xf32>, vector<32x128xf32>, vector<2x128xf32> -> vector<2x128xf32>
    %200 = arith.addf %198, %199 : vector<2x128xf32>
    %201 = vector.broadcast %101 : vector<1x128xf32> to vector<2x128xf32>
    %202 = arith.addf %200, %201 : vector<2x128xf32>
    %203 = vector.extract_strided_slice %202 {offsets = [0, 0], sizes = [2, 32], strides = [1, 1]} : vector<2x128xf32> to vector<2x32xf32>
    %204 = arith.negf %203 : vector<2x32xf32>
    %205 = math.exp %204 : vector<2x32xf32>
    %cst_61 = arith.constant 1.000000e+00 : f32
    %206 = vector.broadcast %cst_61 : f32 to vector<2x32xf32>
    %207 = arith.addf %206, %205 : vector<2x32xf32>
    %208 = arith.divf %206, %207 : vector<2x32xf32>
    %209 = vector.extract_strided_slice %202 {offsets = [0, 32], sizes = [2, 32], strides = [1, 1]} : vector<2x128xf32> to vector<2x32xf32>
    %210 = arith.negf %209 : vector<2x32xf32>
    %211 = math.exp %210 : vector<2x32xf32>
    %cst_62 = arith.constant 1.000000e+00 : f32
    %212 = vector.broadcast %cst_62 : f32 to vector<2x32xf32>
    %213 = arith.addf %212, %211 : vector<2x32xf32>
    %214 = arith.divf %212, %213 : vector<2x32xf32>
    %215 = vector.extract_strided_slice %202 {offsets = [0, 64], sizes = [2, 32], strides = [1, 1]} : vector<2x128xf32> to vector<2x32xf32>
    %216 = math.tanh %215 : vector<2x32xf32>
    %217 = vector.extract_strided_slice %202 {offsets = [0, 96], sizes = [2, 32], strides = [1, 1]} : vector<2x128xf32> to vector<2x32xf32>
    %218 = arith.negf %217 : vector<2x32xf32>
    %219 = math.exp %218 : vector<2x32xf32>
    %cst_63 = arith.constant 1.000000e+00 : f32
    %220 = vector.broadcast %cst_63 : f32 to vector<2x32xf32>
    %221 = arith.addf %220, %219 : vector<2x32xf32>
    %222 = arith.divf %220, %221 : vector<2x32xf32>
    %223 = arith.mulf %214, %194 : vector<2x32xf32>
    %224 = arith.mulf %208, %216 : vector<2x32xf32>
    %225 = arith.addf %223, %224 : vector<2x32xf32>
    %226 = math.tanh %225 : vector<2x32xf32>
    %227 = arith.mulf %222, %226 : vector<2x32xf32>
    %228 = vector.extract_strided_slice %100 {offsets = [8, 0], sizes = [2, 16], strides = [1, 1]} : vector<16x16xf32> to vector<2x16xf32>
    %cst_64 = arith.constant dense<0.000000e+00> : vector<2x128xf32>
    %229 = tpu.matmul %228, %102, %cst_64 {dimension_numbers = #tpu.dot_dimension_numbers<[1], [0], [0], [1], [0, 0, 1, 1], [], []>} : vector<2x16xf32>, vector<16x128xf32>, vector<2x128xf32> -> vector<2x128xf32>
    %cst_65 = arith.constant dense<0.000000e+00> : vector<2x128xf32>
    %230 = tpu.matmul %227, %103, %cst_65 {dimension_numbers = #tpu.dot_dimension_numbers<[1], [0], [0], [1], [0, 0, 1, 1], [], []>} : vector<2x32xf32>, vector<32x128xf32>, vector<2x128xf32> -> vector<2x128xf32>
    %231 = arith.addf %229, %230 : vector<2x128xf32>
    %232 = vector.broadcast %101 : vector<1x128xf32> to vector<2x128xf32>
    %233 = arith.addf %231, %232 : vector<2x128xf32>
    %234 = vector.extract_strided_slice %233 {offsets = [0, 0], sizes = [2, 32], strides = [1, 1]} : vector<2x128xf32> to vector<2x32xf32>
    %235 = arith.negf %234 : vector<2x32xf32>
    %236 = math.exp %235 : vector<2x32xf32>
    %cst_66 = arith.constant 1.000000e+00 : f32
    %237 = vector.broadcast %cst_66 : f32 to vector<2x32xf32>
    %238 = arith.addf %237, %236 : vector<2x32xf32>
    %239 = arith.divf %237, %238 : vector<2x32xf32>
    %240 = vector.extract_strided_slice %233 {offsets = [0, 32], sizes = [2, 32], strides = [1, 1]} : vector<2x128xf32> to vector<2x32xf32>
    %241 = arith.negf %240 : vector<2x32xf32>
    %242 = math.exp %241 : vector<2x32xf32>
    %cst_67 = arith.constant 1.000000e+00 : f32
    %243 = vector.broadcast %cst_67 : f32 to vector<2x32xf32>
    %244 = arith.addf %243, %242 : vector<2x32xf32>
    %245 = arith.divf %243, %244 : vector<2x32xf32>
    %246 = vector.extract_strided_slice %233 {offsets = [0, 64], sizes = [2, 32], strides = [1, 1]} : vector<2x128xf32> to vector<2x32xf32>
    %247 = math.tanh %246 : vector<2x32xf32>
    %248 = vector.extract_strided_slice %233 {offsets = [0, 96], sizes = [2, 32], strides = [1, 1]} : vector<2x128xf32> to vector<2x32xf32>
    %249 = arith.negf %248 : vector<2x32xf32>
    %250 = math.exp %249 : vector<2x32xf32>
    %cst_68 = arith.constant 1.000000e+00 : f32
    %251 = vector.broadcast %cst_68 : f32 to vector<2x32xf32>
    %252 = arith.addf %251, %250 : vector<2x32xf32>
    %253 = arith.divf %251, %252 : vector<2x32xf32>
    %254 = arith.mulf %245, %225 : vector<2x32xf32>
    %255 = arith.mulf %239, %247 : vector<2x32xf32>
    %256 = arith.addf %254, %255 : vector<2x32xf32>
    %257 = math.tanh %256 : vector<2x32xf32>
    %258 = arith.mulf %253, %257 : vector<2x32xf32>
    %259 = vector.extract_strided_slice %100 {offsets = [10, 0], sizes = [2, 16], strides = [1, 1]} : vector<16x16xf32> to vector<2x16xf32>
    %cst_69 = arith.constant dense<0.000000e+00> : vector<2x128xf32>
    %260 = tpu.matmul %259, %102, %cst_69 {dimension_numbers = #tpu.dot_dimension_numbers<[1], [0], [0], [1], [0, 0, 1, 1], [], []>} : vector<2x16xf32>, vector<16x128xf32>, vector<2x128xf32> -> vector<2x128xf32>
    %cst_70 = arith.constant dense<0.000000e+00> : vector<2x128xf32>
    %261 = tpu.matmul %258, %103, %cst_70 {dimension_numbers = #tpu.dot_dimension_numbers<[1], [0], [0], [1], [0, 0, 1, 1], [], []>} : vector<2x32xf32>, vector<32x128xf32>, vector<2x128xf32> -> vector<2x128xf32>
    %262 = arith.addf %260, %261 : vector<2x128xf32>
    %263 = vector.broadcast %101 : vector<1x128xf32> to vector<2x128xf32>
    %264 = arith.addf %262, %263 : vector<2x128xf32>
    %265 = vector.extract_strided_slice %264 {offsets = [0, 0], sizes = [2, 32], strides = [1, 1]} : vector<2x128xf32> to vector<2x32xf32>
    %266 = arith.negf %265 : vector<2x32xf32>
    %267 = math.exp %266 : vector<2x32xf32>
    %cst_71 = arith.constant 1.000000e+00 : f32
    %268 = vector.broadcast %cst_71 : f32 to vector<2x32xf32>
    %269 = arith.addf %268, %267 : vector<2x32xf32>
    %270 = arith.divf %268, %269 : vector<2x32xf32>
    %271 = vector.extract_strided_slice %264 {offsets = [0, 32], sizes = [2, 32], strides = [1, 1]} : vector<2x128xf32> to vector<2x32xf32>
    %272 = arith.negf %271 : vector<2x32xf32>
    %273 = math.exp %272 : vector<2x32xf32>
    %cst_72 = arith.constant 1.000000e+00 : f32
    %274 = vector.broadcast %cst_72 : f32 to vector<2x32xf32>
    %275 = arith.addf %274, %273 : vector<2x32xf32>
    %276 = arith.divf %274, %275 : vector<2x32xf32>
    %277 = vector.extract_strided_slice %264 {offsets = [0, 64], sizes = [2, 32], strides = [1, 1]} : vector<2x128xf32> to vector<2x32xf32>
    %278 = math.tanh %277 : vector<2x32xf32>
    %279 = vector.extract_strided_slice %264 {offsets = [0, 96], sizes = [2, 32], strides = [1, 1]} : vector<2x128xf32> to vector<2x32xf32>
    %280 = arith.negf %279 : vector<2x32xf32>
    %281 = math.exp %280 : vector<2x32xf32>
    %cst_73 = arith.constant 1.000000e+00 : f32
    %282 = vector.broadcast %cst_73 : f32 to vector<2x32xf32>
    %283 = arith.addf %282, %281 : vector<2x32xf32>
    %284 = arith.divf %282, %283 : vector<2x32xf32>
    %285 = arith.mulf %276, %256 : vector<2x32xf32>
    %286 = arith.mulf %270, %278 : vector<2x32xf32>
    %287 = arith.addf %285, %286 : vector<2x32xf32>
    %288 = math.tanh %287 : vector<2x32xf32>
    %289 = arith.mulf %284, %288 : vector<2x32xf32>
    %290 = vector.extract_strided_slice %100 {offsets = [12, 0], sizes = [2, 16], strides = [1, 1]} : vector<16x16xf32> to vector<2x16xf32>
    %cst_74 = arith.constant dense<0.000000e+00> : vector<2x128xf32>
    %291 = tpu.matmul %290, %102, %cst_74 {dimension_numbers = #tpu.dot_dimension_numbers<[1], [0], [0], [1], [0, 0, 1, 1], [], []>} : vector<2x16xf32>, vector<16x128xf32>, vector<2x128xf32> -> vector<2x128xf32>
    %cst_75 = arith.constant dense<0.000000e+00> : vector<2x128xf32>
    %292 = tpu.matmul %289, %103, %cst_75 {dimension_numbers = #tpu.dot_dimension_numbers<[1], [0], [0], [1], [0, 0, 1, 1], [], []>} : vector<2x32xf32>, vector<32x128xf32>, vector<2x128xf32> -> vector<2x128xf32>
    %293 = arith.addf %291, %292 : vector<2x128xf32>
    %294 = vector.broadcast %101 : vector<1x128xf32> to vector<2x128xf32>
    %295 = arith.addf %293, %294 : vector<2x128xf32>
    %296 = vector.extract_strided_slice %295 {offsets = [0, 0], sizes = [2, 32], strides = [1, 1]} : vector<2x128xf32> to vector<2x32xf32>
    %297 = arith.negf %296 : vector<2x32xf32>
    %298 = math.exp %297 : vector<2x32xf32>
    %cst_76 = arith.constant 1.000000e+00 : f32
    %299 = vector.broadcast %cst_76 : f32 to vector<2x32xf32>
    %300 = arith.addf %299, %298 : vector<2x32xf32>
    %301 = arith.divf %299, %300 : vector<2x32xf32>
    %302 = vector.extract_strided_slice %295 {offsets = [0, 32], sizes = [2, 32], strides = [1, 1]} : vector<2x128xf32> to vector<2x32xf32>
    %303 = arith.negf %302 : vector<2x32xf32>
    %304 = math.exp %303 : vector<2x32xf32>
    %cst_77 = arith.constant 1.000000e+00 : f32
    %305 = vector.broadcast %cst_77 : f32 to vector<2x32xf32>
    %306 = arith.addf %305, %304 : vector<2x32xf32>
    %307 = arith.divf %305, %306 : vector<2x32xf32>
    %308 = vector.extract_strided_slice %295 {offsets = [0, 64], sizes = [2, 32], strides = [1, 1]} : vector<2x128xf32> to vector<2x32xf32>
    %309 = math.tanh %308 : vector<2x32xf32>
    %310 = vector.extract_strided_slice %295 {offsets = [0, 96], sizes = [2, 32], strides = [1, 1]} : vector<2x128xf32> to vector<2x32xf32>
    %311 = arith.negf %310 : vector<2x32xf32>
    %312 = math.exp %311 : vector<2x32xf32>
    %cst_78 = arith.constant 1.000000e+00 : f32
    %313 = vector.broadcast %cst_78 : f32 to vector<2x32xf32>
    %314 = arith.addf %313, %312 : vector<2x32xf32>
    %315 = arith.divf %313, %314 : vector<2x32xf32>
    %316 = arith.mulf %307, %287 : vector<2x32xf32>
    %317 = arith.mulf %301, %309 : vector<2x32xf32>
    %318 = arith.addf %316, %317 : vector<2x32xf32>
    %319 = math.tanh %318 : vector<2x32xf32>
    %320 = arith.mulf %315, %319 : vector<2x32xf32>
    %321 = vector.extract_strided_slice %100 {offsets = [14, 0], sizes = [2, 16], strides = [1, 1]} : vector<16x16xf32> to vector<2x16xf32>
    %cst_79 = arith.constant dense<0.000000e+00> : vector<2x128xf32>
    %322 = tpu.matmul %321, %102, %cst_79 {dimension_numbers = #tpu.dot_dimension_numbers<[1], [0], [0], [1], [0, 0, 1, 1], [], []>} : vector<2x16xf32>, vector<16x128xf32>, vector<2x128xf32> -> vector<2x128xf32>
    %cst_80 = arith.constant dense<0.000000e+00> : vector<2x128xf32>
    %323 = tpu.matmul %320, %103, %cst_80 {dimension_numbers = #tpu.dot_dimension_numbers<[1], [0], [0], [1], [0, 0, 1, 1], [], []>} : vector<2x32xf32>, vector<32x128xf32>, vector<2x128xf32> -> vector<2x128xf32>
    %324 = arith.addf %322, %323 : vector<2x128xf32>
    %325 = vector.broadcast %101 : vector<1x128xf32> to vector<2x128xf32>
    %326 = arith.addf %324, %325 : vector<2x128xf32>
    %327 = vector.extract_strided_slice %326 {offsets = [0, 0], sizes = [2, 32], strides = [1, 1]} : vector<2x128xf32> to vector<2x32xf32>
    %328 = arith.negf %327 : vector<2x32xf32>
    %329 = math.exp %328 : vector<2x32xf32>
    %cst_81 = arith.constant 1.000000e+00 : f32
    %330 = vector.broadcast %cst_81 : f32 to vector<2x32xf32>
    %331 = arith.addf %330, %329 : vector<2x32xf32>
    %332 = arith.divf %330, %331 : vector<2x32xf32>
    %333 = vector.extract_strided_slice %326 {offsets = [0, 32], sizes = [2, 32], strides = [1, 1]} : vector<2x128xf32> to vector<2x32xf32>
    %334 = arith.negf %333 : vector<2x32xf32>
    %335 = math.exp %334 : vector<2x32xf32>
    %cst_82 = arith.constant 1.000000e+00 : f32
    %336 = vector.broadcast %cst_82 : f32 to vector<2x32xf32>
    %337 = arith.addf %336, %335 : vector<2x32xf32>
    %338 = arith.divf %336, %337 : vector<2x32xf32>
    %339 = vector.extract_strided_slice %326 {offsets = [0, 64], sizes = [2, 32], strides = [1, 1]} : vector<2x128xf32> to vector<2x32xf32>
    %340 = math.tanh %339 : vector<2x32xf32>
    %341 = vector.extract_strided_slice %326 {offsets = [0, 96], sizes = [2, 32], strides = [1, 1]} : vector<2x128xf32> to vector<2x32xf32>
    %342 = arith.negf %341 : vector<2x32xf32>
    %343 = math.exp %342 : vector<2x32xf32>
    %cst_83 = arith.constant 1.000000e+00 : f32
    %344 = vector.broadcast %cst_83 : f32 to vector<2x32xf32>
    %345 = arith.addf %344, %343 : vector<2x32xf32>
    %346 = arith.divf %344, %345 : vector<2x32xf32>
    %347 = arith.mulf %338, %318 : vector<2x32xf32>
    %348 = arith.mulf %332, %340 : vector<2x32xf32>
    %349 = arith.addf %347, %348 : vector<2x32xf32>
    %350 = math.tanh %349 : vector<2x32xf32>
    %351 = arith.mulf %346, %350 : vector<2x32xf32>
    %352 = vector.extract_strided_slice %134 {offsets = [0, 0], sizes = [1, 32], strides = [1, 1]} : vector<2x32xf32> to vector<1x32xf32>
    %353 = vector.extract_strided_slice %165 {offsets = [0, 0], sizes = [1, 32], strides = [1, 1]} : vector<2x32xf32> to vector<1x32xf32>
    %354 = vector.extract_strided_slice %196 {offsets = [0, 0], sizes = [1, 32], strides = [1, 1]} : vector<2x32xf32> to vector<1x32xf32>
    %355 = vector.extract_strided_slice %227 {offsets = [0, 0], sizes = [1, 32], strides = [1, 1]} : vector<2x32xf32> to vector<1x32xf32>
    %356 = vector.extract_strided_slice %258 {offsets = [0, 0], sizes = [1, 32], strides = [1, 1]} : vector<2x32xf32> to vector<1x32xf32>
    %357 = vector.extract_strided_slice %289 {offsets = [0, 0], sizes = [1, 32], strides = [1, 1]} : vector<2x32xf32> to vector<1x32xf32>
    %358 = vector.extract_strided_slice %320 {offsets = [0, 0], sizes = [1, 32], strides = [1, 1]} : vector<2x32xf32> to vector<1x32xf32>
    %359 = vector.extract_strided_slice %351 {offsets = [0, 0], sizes = [1, 32], strides = [1, 1]} : vector<2x32xf32> to vector<1x32xf32>
    %360 = vector.extract_strided_slice %134 {offsets = [1, 0], sizes = [1, 32], strides = [1, 1]} : vector<2x32xf32> to vector<1x32xf32>
    %361 = vector.extract_strided_slice %165 {offsets = [1, 0], sizes = [1, 32], strides = [1, 1]} : vector<2x32xf32> to vector<1x32xf32>
    %362 = vector.extract_strided_slice %196 {offsets = [1, 0], sizes = [1, 32], strides = [1, 1]} : vector<2x32xf32> to vector<1x32xf32>
    %363 = vector.extract_strided_slice %227 {offsets = [1, 0], sizes = [1, 32], strides = [1, 1]} : vector<2x32xf32> to vector<1x32xf32>
    %364 = vector.extract_strided_slice %258 {offsets = [1, 0], sizes = [1, 32], strides = [1, 1]} : vector<2x32xf32> to vector<1x32xf32>
    %365 = vector.extract_strided_slice %289 {offsets = [1, 0], sizes = [1, 32], strides = [1, 1]} : vector<2x32xf32> to vector<1x32xf32>
    %366 = vector.extract_strided_slice %320 {offsets = [1, 0], sizes = [1, 32], strides = [1, 1]} : vector<2x32xf32> to vector<1x32xf32>
    %367 = vector.extract_strided_slice %351 {offsets = [1, 0], sizes = [1, 32], strides = [1, 1]} : vector<2x32xf32> to vector<1x32xf32>
    %368 = tpu.concatenate %352, %353, %354, %355, %356, %357, %358, %359, %360, %361, %362, %363, %364, %365, %366, %367 in 0 : vector<1x32xf32>, vector<1x32xf32>, vector<1x32xf32>, vector<1x32xf32>, vector<1x32xf32>, vector<1x32xf32>, vector<1x32xf32>, vector<1x32xf32>, vector<1x32xf32>, vector<1x32xf32>, vector<1x32xf32>, vector<1x32xf32>, vector<1x32xf32>, vector<1x32xf32>, vector<1x32xf32>, vector<1x32xf32> -> vector<16x32xf32>
    %369 = math.tanh %368 : vector<16x32xf32>
    %c0_84 = arith.constant 0 : index
    %c0_85 = arith.constant 0 : index
    %370 = vector.load %arg11[%c0_84, %c0_85] : memref<32x128xf32, #tpu.memory_space<vmem>>, vector<32x128xf32>
    %cst_86 = arith.constant dense<0.000000e+00> : vector<16x128xf32>
    %371 = tpu.matmul %369, %370, %cst_86 {dimension_numbers = #tpu.dot_dimension_numbers<[1], [0], [0], [1], [0, 0, 1, 1], [], []>} : vector<16x32xf32>, vector<32x128xf32>, vector<16x128xf32> -> vector<16x128xf32>
    %c0_87 = arith.constant 0 : index
    %c0_88 = arith.constant 0 : index
    %372 = vector.load %arg12[%c0_87, %c0_88] : memref<1x128xf32, #tpu.memory_space<vmem>>, vector<1x128xf32>
    %373 = vector.broadcast %372 : vector<1x128xf32> to vector<16x128xf32>
    %374 = arith.addf %371, %373 : vector<16x128xf32>
    %c0_89 = arith.constant 0 : index
    %c0_90 = arith.constant 0 : index
    %375 = vector.load %arg18[%c0_89, %c0_90] : memref<16x128xf32, #tpu.memory_space<vmem>>, vector<16x128xf32>
    tpu.vector_store %arg18[%c0_89, %c0_90], %374 {strides = array<i32>} : memref<16x128xf32, #tpu.memory_space<vmem>>, vector<16x128xf32>,
    %376 = tpu.concatenate %351, %349 in 1 : vector<2x32xf32>, vector<2x32xf32> -> vector<2x64xf32>
    %377 = math.tanh %376 : vector<2x64xf32>
    %c0_91 = arith.constant 0 : index
    %c0_92 = arith.constant 0 : index
    %378 = vector.load %arg9[%c0_91, %c0_92] : memref<64x32xf32, #tpu.memory_space<vmem>>, vector<64x32xf32>
    %cst_93 = arith.constant dense<0.000000e+00> : vector<2x32xf32>
    %379 = tpu.matmul %377, %378, %cst_93 {dimension_numbers = #tpu.dot_dimension_numbers<[1], [0], [0], [1], [0, 0, 1, 1], [], []>} : vector<2x64xf32>, vector<64x32xf32>, vector<2x32xf32> -> vector<2x32xf32>
    %c0_94 = arith.constant 0 : index
    %c0_95 = arith.constant 0 : index
    %380 = vector.load %arg10[%c0_94, %c0_95] : memref<1x32xf32, #tpu.memory_space<vmem>>, vector<1x32xf32>
    %381 = vector.broadcast %380 : vector<1x32xf32> to vector<2x32xf32>
    %382 = arith.addf %379, %381 : vector<2x32xf32>
    %383 = arith.mulf %15, %382 : vector<2x32xf32>
    %384 = math.tanh %383 : vector<2x32xf32>
    %c0_96 = arith.constant 0 : index
    %c0_97 = arith.constant 0 : index
    %385 = vector.load %arg13[%c0_96, %c0_97] : memref<32x24xf32, #tpu.memory_space<vmem>>, vector<32x24xf32>
    %cst_98 = arith.constant dense<0.000000e+00> : vector<2x24xf32>
    %386 = tpu.matmul %384, %385, %cst_98 {dimension_numbers = #tpu.dot_dimension_numbers<[1], [0], [0], [1], [0, 0, 1, 1], [], []>} : vector<2x32xf32>, vector<32x24xf32>, vector<2x24xf32> -> vector<2x24xf32>
    %c0_99 = arith.constant 0 : index
    %c0_100 = arith.constant 0 : index
    %387 = vector.load %arg14[%c0_99, %c0_100] : memref<1x24xf32, #tpu.memory_space<vmem>>, vector<1x24xf32>
    %388 = vector.broadcast %387 : vector<1x24xf32> to vector<2x24xf32>
    %389 = arith.addf %386, %388 : vector<2x24xf32>
    %390 = math.tanh %389 : vector<2x24xf32>
    %c0_101 = arith.constant 0 : index
    %c0_102 = arith.constant 0 : index
    %391 = vector.load %arg15[%c0_101, %c0_102] : memref<24x128xf32, #tpu.memory_space<vmem>>, vector<24x128xf32>
    %cst_103 = arith.constant dense<0.000000e+00> : vector<2x128xf32>
    %392 = tpu.matmul %390, %391, %cst_103 {dimension_numbers = #tpu.dot_dimension_numbers<[1], [0], [0], [1], [0, 0, 1, 1], [], []>} : vector<2x24xf32>, vector<24x128xf32>, vector<2x128xf32> -> vector<2x128xf32>
    %c0_104 = arith.constant 0 : index
    %c0_105 = arith.constant 0 : index
    %393 = vector.load %arg16[%c0_104, %c0_105] : memref<1x128xf32, #tpu.memory_space<vmem>>, vector<1x128xf32>
    %394 = vector.broadcast %393 : vector<1x128xf32> to vector<2x128xf32>
    %395 = arith.addf %392, %394 : vector<2x128xf32>
    %c0_106 = arith.constant 0 : index
    %c0_107 = arith.constant 0 : index
    %396 = vector.load %arg17[%c0_106, %c0_107] : memref<2x128xf32, #tpu.memory_space<vmem>>, vector<2x128xf32>
    tpu.vector_store %arg17[%c0_106, %c0_107], %395 {strides = array<i32>} : memref<2x128xf32, #tpu.memory_space<vmem>>, vector<2x128xf32>,
    return
  }
}

</mosaic_0001>

<llo_original>
// kernel: vqa_forward.1
$region0: #{vqa_forward.1}
  #allocation0 [shape = 'u32[]', space=smem, size = 0x4, offset = 0x4, fixed_abs, tag = 'smem constant byte address 0x4 - core index']
  #allocation1 [shape = 'u32[144,128]{1,0:T(1,128)}', space=vmem, size = 0x12000, scoped, tag = 'internal scratch']
  %s0 = inlined_call_operand.vmem [shape: s32[2,8], index: 0, kind: input, shape index: {}]
  %s1 = inlined_call_operand.vmem [shape: f32[2,768], index: 1, kind: input, shape index: {}]
  %s2 = inlined_call_operand.vmem [shape: f32[768,64], index: 2, kind: input, shape index: {}]
  %s3 = inlined_call_operand.vmem [shape: f32[64,32], index: 3, kind: input, shape index: {}]
  %s4 = inlined_call_operand.vmem [shape: f32[1,32], index: 4, kind: input, shape index: {}]
  %s5 = inlined_call_operand.vmem [shape: f32[40,16], index: 5, kind: input, shape index: {}]
  %s6 = inlined_call_operand.vmem [shape: f32[16,128], index: 6, kind: input, shape index: {}]
  %s7 = inlined_call_operand.vmem [shape: f32[32,128], index: 7, kind: input, shape index: {}]
  %s8 = inlined_call_operand.vmem [shape: f32[1,128], index: 8, kind: input, shape index: {}]
  %s9 = inlined_call_operand.vmem [shape: f32[64,32], index: 9, kind: input, shape index: {}]
  %s10 = inlined_call_operand.vmem [shape: f32[1,32], index: 10, kind: input, shape index: {}]
  %s11 = inlined_call_operand.vmem [shape: f32[32,128], index: 11, kind: input, shape index: {}]
  %s12 = inlined_call_operand.vmem [shape: f32[1,128], index: 12, kind: input, shape index: {}]
  %s13 = inlined_call_operand.vmem [shape: f32[32,24], index: 13, kind: input, shape index: {}]
  %s14 = inlined_call_operand.vmem [shape: f32[1,24], index: 14, kind: input, shape index: {}]
  %s15 = inlined_call_operand.vmem [shape: f32[24,128], index: 15, kind: input, shape index: {}]
  %s16 = inlined_call_operand.vmem [shape: f32[1,128], index: 16, kind: input, shape index: {}]
  %s17 = inlined_call_operand.hbm [shape: f32[2,128], index: 17, kind: output, shape index: {0}]
  %s18 = inlined_call_operand.hbm [shape: f32[16,128], index: 18, kind: output, shape index: {1}]
  %19 = xla_tuple %s17, %s18
  %s20 = sld [smem:[#allocation0]]
  $region90: #{vqa_forward.1} parent=0
    _
  %s22 = ssub.s32 1, %s20
  %s23 = scalar_select 0, %s22, %s20
  $region1: #{vqa_forward.1} parent=0
    #allocation2 [shape = 'u8[1024]{0}', space=smem, size = 0x400, scoped, tag = 'input window, operand 0, single buffered']
    #allocation3 [shape = 's32[1]{0}', space=sflag, size = 0x4, scoped, tag = 'scoped memory for vqa_forward.1']
    #allocation4 [shape = 's32[1]{0}', space=sflag, size = 0x4, scoped, tag = 'scoped memory for vqa_forward.1']
    #allocation5 [shape = 'u8[1024]{0}', space=vmem, size = 0x400, scoped, tag = 'output window, operand 0, single buffered']
    #allocation6 [shape = 'u8[8192]{0}', space=vmem, size = 0x2000, scoped, tag = 'output window, operand 1, single buffered']
    #allocation7 [shape = 's32[1]{0}', space=sflag, size = 0x4, scoped, tag = 'scoped memory for vqa_forward.1']
    %24 = vsyncpa [#allocation4], 0
    %25 = vsyncpa [#allocation3], 0
    %26 = vsyncpa [#allocation7], 0
    // Predicated region
    $region2: #{vqa_forward.1} parent=1 // pred_check
      _
    $region3: #{vqa_forward.1} parent=1 // pred_check_branch
      %28 = sbr.rel (0) target = $region5
    $region4: #{vqa_forward.1} parent=1 // pred_region
      %s30 = ssub.s32 32, 32
      %31 = vsyncadd [#allocation4], %s30
      %s33 = sshll.u32 %s0, 4
      %s34 = int_to_ptr.vmem [resolvable:$true] %s33
      %36 = dma.vmem_to_smem %s34, 32, [#allocation2], [#allocation4]
    $region5: #{vqa_forward.1} parent=1 // pred_fallthru
      _
    // Predicated region
    $region6: #{vqa_forward.1} parent=1 // pred_check
      _
    $region7: #{vqa_forward.1} parent=1 // pred_check_branch
      %38 = sbr.rel (0) target = $region9
    $region8: #{vqa_forward.1} parent=1 // pred_region
      _
    $region9: #{vqa_forward.1} parent=1 // pred_fallthru
      _
    // Predicated region
    $region10: #{vqa_forward.1} parent=1 // pred_check
      _
    $region11: #{vqa_forward.1} parent=1 // pred_check_branch
      %40 = sbr.rel (0) target = $region13
    $region12: #{vqa_forward.1} parent=1 // pred_region
      _
    $region13: #{vqa_forward.1} parent=1 // pred_fallthru
      _
    // Predicated region
    $region14: #{vqa_forward.1} parent=1 // pred_check
      _
    $region15: #{vqa_forward.1} parent=1 // pred_check_branch
      %42 = sbr.rel (0) target = $region17
    $region16: #{vqa_forward.1} parent=1 // pred_region
      _
    $region17: #{vqa_forward.1} parent=1 // pred_fallthru
      _
    // Predicated region
    $region18: #{vqa_forward.1} parent=1 // pred_check
      _
    $region19: #{vqa_forward.1} parent=1 // pred_check_branch
      %44 = sbr.rel (0) target = $region21
    $region20: #{vqa_forward.1} parent=1 // pred_region
      _
    $region21: #{vqa_forward.1} parent=1 // pred_fallthru
      _
    // Predicated region
    $region22: #{vqa_forward.1} parent=1 // pred_check
      _
    $region23: #{vqa_forward.1} parent=1 // pred_check_branch
      %46 = sbr.rel (0) target = $region25
    $region24: #{vqa_forward.1} parent=1 // pred_region
      _
    $region25: #{vqa_forward.1} parent=1 // pred_fallthru
      _
    // Predicated region
    $region26: #{vqa_forward.1} parent=1 // pred_check
      _
    $region27: #{vqa_forward.1} parent=1 // pred_check_branch
      %48 = sbr.rel (0) target = $region29
    $region28: #{vqa_forward.1} parent=1 // pred_region
      _
    $region29: #{vqa_forward.1} parent=1 // pred_fallthru
      _
    // Predicated region
    $region30: #{vqa_forward.1} parent=1 // pred_check
      _
    $region31: #{vqa_forward.1} parent=1 // pred_check_branch
      %50 = sbr.rel (0) target = $region33
    $region32: #{vqa_forward.1} parent=1 // pred_region
      _
    $region33: #{vqa_forward.1} parent=1 // pred_fallthru
      _
    // Predicated region
    $region34: #{vqa_forward.1} parent=1 // pred_check
      _
    $region35: #{vqa_forward.1} parent=1 // pred_check_branch
      %52 = sbr.rel (0) target = $region37
    $region36: #{vqa_forward.1} parent=1 // pred_region
      _
    $region37: #{vqa_forward.1} parent=1 // pred_fallthru
      _
    // Predicated region
    $region38: #{vqa_forward.1} parent=1 // pred_check
      _
    $region39: #{vqa_forward.1} parent=1 // pred_check_branch
      %54 = sbr.rel (0) target = $region41
    $region40: #{vqa_forward.1} parent=1 // pred_region
      _
    $region41: #{vqa_forward.1} parent=1 // pred_fallthru
      _
    // Predicated region
    $region42: #{vqa_forward.1} parent=1 // pred_check
      _
    $region43: #{vqa_forward.1} parent=1 // pred_check_branch
      %56 = sbr.rel (0) target = $region45
    $region44: #{vqa_forward.1} parent=1 // pred_region
      _
    $region45: #{vqa_forward.1} parent=1 // pred_fallthru
      _
    // Predicated region
    $region46: #{vqa_forward.1} parent=1 // pred_check
      _
    $region47: #{vqa_forward.1} parent=1 // pred_check_branch
      %58 = sbr.rel (0) target = $region49
    $region48: #{vqa_forward.1} parent=1 // pred_region
      _
    $region49: #{vqa_forward.1} parent=1 // pred_fallthru
      _
    // Predicated region
    $region50: #{vqa_forward.1} parent=1 // pred_check
      _
    $region51: #{vqa_forward.1} parent=1 // pred_check_branch
      %60 = sbr.rel (0) target = $region53
    $region52: #{vqa_forward.1} parent=1 // pred_region
      _
    $region53: #{vqa_forward.1} parent=1 // pred_fallthru
      _
    // Predicated region
    $region54: #{vqa_forward.1} parent=1 // pred_check
      _
    $region55: #{vqa_forward.1} parent=1 // pred_check_branch
      %62 = sbr.rel (0) target = $region57
    $region56: #{vqa_forward.1} parent=1 // pred_region
      _
    $region57: #{vqa_forward.1} parent=1 // pred_fallthru
      _
    // Predicated region
    $region58: #{vqa_forward.1} parent=1 // pred_check
      _
    $region59: #{vqa_forward.1} parent=1 // pred_check_branch
      %64 = sbr.rel (0) target = $region61
    $region60: #{vqa_forward.1} parent=1 // pred_region
      _
    $region61: #{vqa_forward.1} parent=1 // pred_fallthru
      _
    // Predicated region
    $region62: #{vqa_forward.1} parent=1 // pred_check
      _
    $region63: #{vqa_forward.1} parent=1 // pred_check_branch
      %66 = sbr.rel (0) target = $region65
    $region64: #{vqa_forward.1} parent=1 // pred_region
      _
    $region65: #{vqa_forward.1} parent=1 // pred_fallthru
      _
    // Predicated region
    $region66: #{vqa_forward.1} parent=1 // pred_check
      _
    $region67: #{vqa_forward.1} parent=1 // pred_check_branch
      %68 = sbr.rel (0) target = $region69
    $region68: #{vqa_forward.1} parent=1 // pred_region
      _
    $region69: #{vqa_forward.1} parent=1 // pred_fallthru
      _
    // Predicated region
    $region70: #{vqa_forward.1} parent=1 // pred_check
      _
    $region71: #{vqa_forward.1} parent=1 // pred_check_branch
      %70 = sbr.rel (0) target = $region73
    $region72: #{vqa_forward.1} parent=1 // pred_region
      %71 = dma.done [#allocation4], 32
    $region73: #{vqa_forward.1} parent=1 // pred_fallthru
      _
    %72 = sfence
    %v73 = vld [vmem:[%s1] sm:$0xff]
    %v74 = vld [vmem:[%s1 + $0x8] sm:$0xf]
    %v75 = vld [vmem:[%s2] sm:$0xff]
    %v76 = vld [vmem:[%s2 + $0x8] sm:$0xff]
    %v77 = vld [vmem:[%s2 + $0x10] sm:$0xff]
    %v78 = vld [vmem:[%s2 + $0x18] sm:$0xff]
    %v79 = vld [vmem:[%s2 + $0x20] sm:$0xff]
    %v80 = vld [vmem:[%s2 + $0x28] sm:$0xff]
    %v81 = vld [vmem:[%s2 + $0x30] sm:$0xff]
    %v82 = vld [vmem:[%s2 + $0x38] sm:$0xff]
    %v83 = vld [vmem:[%s2 + $0x40] sm:$0xff]
    %v84 = vld [vmem:[%s2 + $0x48] sm:$0xff]
    %v85 = vld [vmem:[%s2 + $0x50] sm:$0xff]
    %v86 = vld [vmem:[%s2 + $0x58] sm:$0xff]
    %v87 = vld [vmem:[%s2 + $0x60] sm:$0xff]
    %v88 = vld [vmem:[%s2 + $0x68] sm:$0xff]
    %v89 = vld [vmem:[%s2 + $0x70] sm:$0xff]
    %v90 = vld [vmem:[%s2 + $0x78] sm:$0xff]
    %v91 = vld [vmem:[%s2 + $0x80] sm:$0xff]
    %v92 = vld [vmem:[%s2 + $0x88] sm:$0xff]
    %v93 = vld [vmem:[%s2 + $0x90] sm:$0xff]
    %v94 = vld [vmem:[%s2 + $0x98] sm:$0xff]
    %v95 = vld [vmem:[%s2 + $0xa0] sm:$0xff]
    %v96 = vld [vmem:[%s2 + $0xa8] sm:$0xff]
    %v97 = vld [vmem:[%s2 + $0xb0] sm:$0xff]
    %v98 = vld [vmem:[%s2 + $0xb8] sm:$0xff]
    %v99 = vld [vmem:[%s2 + $0xc0] sm:$0xff]
    %v100 = vld [vmem:[%s2 + $0xc8] sm:$0xff]
    %v101 = vld [vmem:[%s2 + $0xd0] sm:$0xff]
    %v102 = vld [vmem:[%s2 + $0xd8] sm:$0xff]
    %v103 = vld [vmem:[%s2 + $0xe0] sm:$0xff]
    %v104 = vld [vmem:[%s2 + $0xe8] sm:$0xff]
    %v105 = vld [vmem:[%s2 + $0xf0] sm:$0xff]
    %v106 = vld [vmem:[%s2 + $0xf8] sm:$0xff]
    %v107 = vld [vmem:[%s2 + $0x100] sm:$0xff]
    %v108 = vld [vmem:[%s2 + $0x108] sm:$0xff]
    %v109 = vld [vmem:[%s2 + $0x110] sm:$0xff]
    %v110 = vld [vmem:[%s2 + $0x118] sm:$0xff]
    %v111 = vld [vmem:[%s2 + $0x120] sm:$0xff]
    %v112 = vld [vmem:[%s2 + $0x128] sm:$0xff]
    %v113 = vld [vmem:[%s2 + $0x130] sm:$0xff]
    %v114 = vld [vmem:[%s2 + $0x138] sm:$0xff]
    %v115 = vld [vmem:[%s2 + $0x140] sm:$0xff]
    %v116 = vld [vmem:[%s2 + $0x148] sm:$0xff]
    %v117 = vld [vmem:[%s2 + $0x150] sm:$0xff]
    %v118 = vld [vmem:[%s2 + $0x158] sm:$0xff]
    %v119 = vld [vmem:[%s2 + $0x160] sm:$0xff]
    %v120 = vld [vmem:[%s2 + $0x168] sm:$0xff]
    %v121 = vld [vmem:[%s2 + $0x170] sm:$0xff]
    %v122 = vld [vmem:[%s2 + $0x178] sm:$0xff]
    %v123 = vld [vmem:[%s2 + $0x180] sm:$0xff]
    %v124 = vld [vmem:[%s2 + $0x188] sm:$0xff]
    %v125 = vld [vmem:[%s2 + $0x190] sm:$0xff]
    %v126 = vld [vmem:[%s2 + $0x198] sm:$0xff]
    %v127 = vld [vmem:[%s2 + $0x1a0] sm:$0xff]
    %v128 = vld [vmem:[%s2 + $0x1a8] sm:$0xff]
    %v129 = vld [vmem:[%s2 + $0x1b0] sm:$0xff]
    %v130 = vld [vmem:[%s2 + $0x1b8] sm:$0xff]
    %v131 = vld [vmem:[%s2 + $0x1c0] sm:$0xff]
    %v132 = vld [vmem:[%s2 + $0x1c8] sm:$0xff]
    %v133 = vld [vmem:[%s2 + $0x1d0] sm:$0xff]
    %v134 = vld [vmem:[%s2 + $0x1d8] sm:$0xff]
    %v135 = vld [vmem:[%s2 + $0x1e0] sm:$0xff]
    %v136 = vld [vmem:[%s2 + $0x1e8] sm:$0xff]
    %v137 = vld [vmem:[%s2 + $0x1f0] sm:$0xff]
    %v138 = vld [vmem:[%s2 + $0x1f8] sm:$0xff]
    %v139 = vld [vmem:[%s2 + $0x200] sm:$0xff]
    %v140 = vld [vmem:[%s2 + $0x208] sm:$0xff]
    %v141 = vld [vmem:[%s2 + $0x210] sm:$0xff]
    %v142 = vld [vmem:[%s2 + $0x218] sm:$0xff]
    %v143 = vld [vmem:[%s2 + $0x220] sm:$0xff]
    %v144 = vld [vmem:[%s2 + $0x228] sm:$0xff]
    %v145 = vld [vmem:[%s2 + $0x230] sm:$0xff]
    %v146 = vld [vmem:[%s2 + $0x238] sm:$0xff]
    %v147 = vld [vmem:[%s2 + $0x240] sm:$0xff]
    %v148 = vld [vmem:[%s2 + $0x248] sm:$0xff]
    %v149 = vld [vmem:[%s2 + $0x250] sm:$0xff]
    %v150 = vld [vmem:[%s2 + $0x258] sm:$0xff]
    %v151 = vld [vmem:[%s2 + $0x260] sm:$0xff]
    %v152 = vld [vmem:[%s2 + $0x268] sm:$0xff]
    %v153 = vld [vmem:[%s2 + $0x270] sm:$0xff]
    %v154 = vld [vmem:[%s2 + $0x278] sm:$0xff]
    %v155 = vld [vmem:[%s2 + $0x280] sm:$0xff]
    %v156 = vld [vmem:[%s2 + $0x288] sm:$0xff]
    %v157 = vld [vmem:[%s2 + $0x290] sm:$0xff]
    %v158 = vld [vmem:[%s2 + $0x298] sm:$0xff]
    %v159 = vld [vmem:[%s2 + $0x2a0] sm:$0xff]
    %v160 = vld [vmem:[%s2 + $0x2a8] sm:$0xff]
    %v161 = vld [vmem:[%s2 + $0x2b0] sm:$0xff]
    %v162 = vld [vmem:[%s2 + $0x2b8] sm:$0xff]
    %v163 = vld [vmem:[%s2 + $0x2c0] sm:$0xff]
    %v164 = vld [vmem:[%s2 + $0x2c8] sm:$0xff]
    %v165 = vld [vmem:[%s2 + $0x2d0] sm:$0xff]
    %v166 = vld [vmem:[%s2 + $0x2d8] sm:$0xff]
    %v167 = vld [vmem:[%s2 + $0x2e0] sm:$0xff]
    %v168 = vld [vmem:[%s2 + $0x2e8] sm:$0xff]
    %v169 = vld [vmem:[%s2 + $0x2f0] sm:$0xff]
    %v170 = vld [vmem:[%s2 + $0x2f8] sm:$0xff]
    %v173 = vcombine.high %v73, %v73
    %v175 = vunpack.c.l.s4 1983009808
    %v176 = vunpack.c.0.s8 %v175
    %v177 = vlaneseq
    %v178 = vshrl.u32 %v177, 7
    %v179 = vsub.s32 %v176, %v178
    %v180 = vrot.slane %v73, %v179
    %v182 = vunpack.c.l.s4 1983009808
    %v183 = vunpack.c.0.s8 %v182
    %v184 = vlaneseq
    %v185 = vshrl.u32 %v184, 7
    %v186 = vsub.s32 %v183, %v185
    %v187 = vrot.slane %v173, %v186
    %v188 = vcombine.high %v180, %v180
    %v189 = vcombine.high %v187, %v187
    %v191 = vunpack.c.l.s4 1983009808
    %v192 = vunpack.c.0.s8 %v191
    %v193 = vlaneseq
    %v194 = vshrl.u32 %v193, 7
    %v195 = vsub.s32 %v192, %v194
    %v196 = vrot.slane %v74, %v195
    %v197 = vcombine.high %v196, %v196
    %204 = vmatprep.subr.mxu0 0.0
    %205 = vmatpush1.msra.mxu0 %v90
    %206 = vmatprep.subr.mxu0 0.0
    %207 = vmatpush1.msra.mxu0 %v89
    %208 = vmatprep.subr.mxu0 0.0
    %209 = vmatpush1.msra.mxu0 %v88
    %210 = vmatprep.subr.mxu0 0.0
    %211 = vmatpush1.msra.mxu0 %v87
    %212 = vmatprep.subr.mxu0 0.0
    %213 = vmatpush1.msra.mxu0 %v86
    %214 = vmatprep.subr.mxu0 0.0
    %215 = vmatpush1.msra.mxu0 %v85
    %216 = vmatprep.subr.mxu0 0.0
    %217 = vmatpush1.msra.mxu0 %v84
    %218 = vmatprep.subr.mxu0 0.0
    %219 = vmatpush1.msra.mxu0 %v83
    %220 = vmatprep.subr.mxu0 0.0
    %221 = vmatpush1.msra.mxu0 %v82
    %222 = vmatprep.subr.mxu0 0.0
    %223 = vmatpush1.msra.mxu0 %v81
    %224 = vmatprep.subr.mxu0 0.0
    %225 = vmatpush1.msra.mxu0 %v80
    %226 = vmatprep.subr.mxu0 0.0
    %227 = vmatpush1.msra.mxu0 %v79
    %228 = vmatprep.subr.mxu0 0.0
    %229 = vmatpush1.msra.mxu0 %v78
    %230 = vmatprep.subr.mxu0 0.0
    %231 = vmatpush1.msra.mxu0 %v77
    %232 = vmatprep.subr.mxu0 0.0
    %233 = vmatpush1.msra.mxu0 %v76
    %234 = vmatprep.subr.mxu0 0.0
    %235 = vmatpush1.msra.mxu0 %v75
    %236 = vmatprep.subr.mxu0 0.0
    %237 = vmatpush2.msra.mxu0 %v106
    %238 = vmatprep.subr.mxu0 0.0
    %239 = vmatpush2.msra.mxu0 %v105
    %240 = vmatprep.subr.mxu0 0.0
    %241 = vmatpush2.msra.mxu0 %v104
    %242 = vmatprep.subr.mxu0 0.0
    %243 = vmatpush2.msra.mxu0 %v103
    %244 = vmatprep.subr.mxu0 0.0
    %245 = vmatpush2.msra.mxu0 %v102
    %246 = vmatprep.subr.mxu0 0.0
    %247 = vmatpush2.msra.mxu0 %v101
    %248 = vmatprep.subr.mxu0 0.0
    %249 = vmatpush2.msra.mxu0 %v100
    %250 = vmatprep.subr.mxu0 0.0
    %251 = vmatpush2.msra.mxu0 %v99
    %252 = vmatprep.subr.mxu0 0.0
    %253 = vmatpush2.msra.mxu0 %v98
    %254 = vmatprep.subr.mxu0 0.0
    %255 = vmatpush2.msra.mxu0 %v97
    %256 = vmatprep.subr.mxu0 0.0
    %257 = vmatpush2.msra.mxu0 %v96
    %258 = vmatprep.subr.mxu0 0.0
    %259 = vmatpush2.msra.mxu0 %v95
    %260 = vmatprep.subr.mxu0 0.0
    %261 = vmatpush2.msra.mxu0 %v94
    %262 = vmatprep.subr.mxu0 0.0
    %263 = vmatpush2.msra.mxu0 %v93
    %264 = vmatprep.subr.mxu0 0.0
    %265 = vmatpush2.msra.mxu0 %v92
    %266 = vmatprep.subr.mxu0 0.0
    %267 = vmatpush2.msra.mxu0 %v91
    %268 = vmatprep.mubr.f32.mxu0 %v188
    %269 = vmatmul.mubr.f32.gmra.mxu0 %v180
    %v270 = vpop.f32.mrf.mxu0
    %v271 = vadd.f32 0.0, %v270
    %v272 = vpop.f32.mrf.mxu0
    %273 = vdwg.mxu0
    %274 = vmatprep.subr.mxu0 0.0
    %275 = vmatpush1.msra.mxu0 %v122
    %276 = vmatprep.subr.mxu0 0.0
    %277 = vmatpush1.msra.mxu0 %v121
    %278 = vmatprep.subr.mxu0 0.0
    %279 = vmatpush1.msra.mxu0 %v120
    %280 = vmatprep.subr.mxu0 0.0
    %281 = vmatpush1.msra.mxu0 %v119
    %282 = vmatprep.subr.mxu0 0.0
    %283 = vmatpush1.msra.mxu0 %v118
    %284 = vmatprep.subr.mxu0 0.0
    %285 = vmatpush1.msra.mxu0 %v117
    %286 = vmatprep.subr.mxu0 0.0
    %287 = vmatpush1.msra.mxu0 %v116
    %288 = vmatprep.subr.mxu0 0.0
    %289 = vmatpush1.msra.mxu0 %v115
    %290 = vmatprep.subr.mxu0 0.0
    %291 = vmatpush1.msra.mxu0 %v114
    %292 = vmatprep.subr.mxu0 0.0
    %293 = vmatpush1.msra.mxu0 %v113
    %294 = vmatprep.subr.mxu0 0.0
    %295 = vmatpush1.msra.mxu0 %v112
    %296 = vmatprep.subr.mxu0 0.0
    %297 = vmatpush1.msra.mxu0 %v111
    %298 = vmatprep.subr.mxu0 0.0
    %299 = vmatpush1.msra.mxu0 %v110
    %300 = vmatprep.subr.mxu0 0.0
    %301 = vmatpush1.msra.mxu0 %v109
    %302 = vmatprep.subr.mxu0 0.0
    %303 = vmatpush1.msra.mxu0 %v108
    %304 = vmatprep.subr.mxu0 0.0
    %305 = vmatpush1.msra.mxu0 %v107
    %306 = vmatprep.subr.mxu0 0.0
    %307 = vmatpush2.msra.mxu0 %v138
    %308 = vmatprep.subr.mxu0 0.0
    %309 = vmatpush2.msra.mxu0 %v137
    %310 = vmatprep.subr.mxu0 0.0
    %311 = vmatpush2.msra.mxu0 %v136
    %312 = vmatprep.subr.mxu0 0.0
    %313 = vmatpush2.msra.mxu0 %v135
    %314 = vmatprep.subr.mxu0 0.0
    %315 = vmatpush2.msra.mxu0 %v134
    %316 = vmatprep.subr.mxu0 0.0
    %317 = vmatpush2.msra.mxu0 %v133
    %318 = vmatprep.subr.mxu0 0.0
    %319 = vmatpush2.msra.mxu0 %v132
    %320 = vmatprep.subr.mxu0 0.0
    %321 = vmatpush2.msra.mxu0 %v131
    %322 = vmatprep.subr.mxu0 0.0
    %323 = vmatpush2.msra.mxu0 %v130
    %324 = vmatprep.subr.mxu0 0.0
    %325 = vmatpush2.msra.mxu0 %v129
    %326 = vmatprep.subr.mxu0 0.0
    %327 = vmatpush2.msra.mxu0 %v128
    %328 = vmatprep.subr.mxu0 0.0
    %329 = vmatpush2.msra.mxu0 %v127
    %330 = vmatprep.subr.mxu0 0.0
    %331 = vmatpush2.msra.mxu0 %v126
    %332 = vmatprep.subr.mxu0 0.0
    %333 = vmatpush2.msra.mxu0 %v125
    %334 = vmatprep.subr.mxu0 0.0
    %335 = vmatpush2.msra.mxu0 %v124
    %336 = vmatprep.subr.mxu0 0.0
    %337 = vmatpush2.msra.mxu0 %v123
    %338 = vmatprep.mubr.f32.mxu0 %v189
    %339 = vmatmul.mubr.f32.gmra.mxu0 %v187
    %v340 = vpop.f32.mrf.mxu0
    %v341 = vadd.f32 %v271, %v340
    %v342 = vpop.f32.mrf.mxu0
    %343 = vdwg.mxu0
    %344 = vmatprep.subr.mxu0 0.0
    %345 = vmatpush1.msra.mxu0 %v154
    %346 = vmatprep.subr.mxu0 0.0
    %347 = vmatpush1.msra.mxu0 %v153
    %348 = vmatprep.subr.mxu0 0.0
    %349 = vmatpush1.msra.mxu0 %v152
    %350 = vmatprep.subr.mxu0 0.0
    %351 = vmatpush1.msra.mxu0 %v151
    %352 = vmatprep.subr.mxu0 0.0
    %353 = vmatpush1.msra.mxu0 %v150
    %354 = vmatprep.subr.mxu0 0.0
    %355 = vmatpush1.msra.mxu0 %v149
    %356 = vmatprep.subr.mxu0 0.0
    %357 = vmatpush1.msra.mxu0 %v148
    %358 = vmatprep.subr.mxu0 0.0
    %359 = vmatpush1.msra.mxu0 %v147
    %360 = vmatprep.subr.mxu0 0.0
    %361 = vmatpush1.msra.mxu0 %v146
    %362 = vmatprep.subr.mxu0 0.0
    %363 = vmatpush1.msra.mxu0 %v145
    %364 = vmatprep.subr.mxu0 0.0
    %365 = vmatpush1.msra.mxu0 %v144
    %366 = vmatprep.subr.mxu0 0.0
    %367 = vmatpush1.msra.mxu0 %v143
    %368 = vmatprep.subr.mxu0 0.0
    %369 = vmatpush1.msra.mxu0 %v142
    %370 = vmatprep.subr.mxu0 0.0
    %371 = vmatpush1.msra.mxu0 %v141
    %372 = vmatprep.subr.mxu0 0.0
    %373 = vmatpush1.msra.mxu0 %v140
    %374 = vmatprep.subr.mxu0 0.0
    %375 = vmatpush1.msra.mxu0 %v139
    %376 = vmatprep.subr.mxu0 0.0
    %377 = vmatpush2.msra.mxu0 %v170
    %378 = vmatprep.subr.mxu0 0.0
    %379 = vmatpush2.msra.mxu0 %v169
    %380 = vmatprep.subr.mxu0 0.0
    %381 = vmatpush2.msra.mxu0 %v168
    %382 = vmatprep.subr.mxu0 0.0
    %383 = vmatpush2.msra.mxu0 %v167
    %384 = vmatprep.subr.mxu0 0.0
    %385 = vmatpush2.msra.mxu0 %v166
    %386 = vmatprep.subr.mxu0 0.0
    %387 = vmatpush2.msra.mxu0 %v165
    %388 = vmatprep.subr.mxu0 0.0
    %389 = vmatpush2.msra.mxu0 %v164
    %390 = vmatprep.subr.mxu0 0.0
    %391 = vmatpush2.msra.mxu0 %v163
    %392 = vmatprep.subr.mxu0 0.0
    %393 = vmatpush2.msra.mxu0 %v162
    %394 = vmatprep.subr.mxu0 0.0
    %395 = vmatpush2.msra.mxu0 %v161
    %396 = vmatprep.subr.mxu0 0.0
    %397 = vmatpush2.msra.mxu0 %v160
    %398 = vmatprep.subr.mxu0 0.0
    %399 = vmatpush2.msra.mxu0 %v159
    %400 = vmatprep.subr.mxu0 0.0
    %401 = vmatpush2.msra.mxu0 %v158
    %402 = vmatprep.subr.mxu0 0.0
    %403 = vmatpush2.msra.mxu0 %v157
    %404 = vmatprep.subr.mxu0 0.0
    %405 = vmatpush2.msra.mxu0 %v156
    %406 = vmatprep.subr.mxu0 0.0
    %407 = vmatpush2.msra.mxu0 %v155
    %408 = vmatprep.mubr.f32.mxu0 %v197
    %409 = vmatmul.mubr.f32.gmra.mxu0 %v196
    %v410 = vpop.f32.mrf.mxu0
    %v411 = vadd.f32 %v341, %v410
    %v412 = vpop.f32.mrf.mxu0
    %413 = vdwg.mxu0
    %v414 = vld [vmem:[%s3] sm:$0xff]
    %v415 = vld [vmem:[%s3 + $0x8] sm:$0xff]
    %v416 = vld [vmem:[%s3 + $0x10] sm:$0xff]
    %v417 = vld [vmem:[%s3 + $0x18] sm:$0xff]
    %v418 = vld [vmem:[%s3 + $0x20] sm:$0xff]
    %v419 = vld [vmem:[%s3 + $0x28] sm:$0xff]
    %v420 = vld [vmem:[%s3 + $0x30] sm:$0xff]
    %v421 = vld [vmem:[%s3 + $0x38] sm:$0xff]
    %v422 = vld [vmem:[%s4] sm:$0x1]
    %v424 = vlaneseq
    %v425 = vshrl.u32 %v424, 7
    %v426 = vsub.s32 0, %v425
    %v427 = vrot.slane %v422, %v426
    %vm429 = vcmask 523264
    %v431 = vsel %vm429, %v411, 0
    %433 = vmatprep.subr.mxu0 0.0
    %434 = vmatpush1.msra.mxu0 0.0
    %435 = vmatprep.subr.mxu0 0.0
    %436 = vmatpush1.msra.mxu0 0.0
    %437 = vmatprep.subr.mxu0 0.0
    %438 = vmatpush1.msra.mxu0 0.0
    %439 = vmatprep.subr.mxu0 0.0
    %440 = vmatpush1.msra.mxu0 0.0
    %441 = vmatprep.subr.mxu0 0.0
    %442 = vmatpush1.msra.mxu0 0.0
    %443 = vmatprep.subr.mxu0 0.0
    %444 = vmatpush1.msra.mxu0 0.0
    %445 = vmatprep.subr.mxu0 0.0
    %446 = vmatpush1.msra.mxu0 0.0
    %447 = vmatprep.subr.mxu0 0.0
    %448 = vmatpush1.msra.mxu0 0.0
    %449 = vmatprep.subr.mxu0 0.0
    %450 = vmatpush1.msra.mxu0 %v421
    %451 = vmatprep.subr.mxu0 0.0
    %452 = vmatpush1.msra.mxu0 %v420
    %453 = vmatprep.subr.mxu0 0.0
    %454 = vmatpush1.msra.mxu0 %v419
    %455 = vmatprep.subr.mxu0 0.0
    %456 = vmatpush1.msra.mxu0 %v418
    %457 = vmatprep.subr.mxu0 0.0
    %458 = vmatpush1.msra.mxu0 %v417
    %459 = vmatprep.subr.mxu0 0.0
    %460 = vmatpush1.msra.mxu0 %v416
    %461 = vmatprep.subr.mxu0 0.0
    %462 = vmatpush1.msra.mxu0 %v415
    %463 = vmatprep.subr.mxu0 0.0
    %464 = vmatpush1.msra.mxu0 %v414
    %465 = vmatprep.subr.mxu0 0.0
    %466 = vmatpush2.msra.mxu0 0.0
    %467 = vmatprep.subr.mxu0 0.0
    %468 = vmatpush2.msra.mxu0 0.0
    %469 = vmatprep.subr.mxu0 0.0
    %470 = vmatpush2.msra.mxu0 0.0
    %471 = vmatprep.subr.mxu0 0.0
    %472 = vmatpush2.msra.mxu0 0.0
    %473 = vmatprep.subr.mxu0 0.0
    %474 = vmatpush2.msra.mxu0 0.0
    %475 = vmatprep.subr.mxu0 0.0
    %476 = vmatpush2.msra.mxu0 0.0
    %477 = vmatprep.subr.mxu0 0.0
    %478 = vmatpush2.msra.mxu0 0.0
    %479 = vmatprep.subr.mxu0 0.0
    %480 = vmatpush2.msra.mxu0 0.0
    %481 = vmatprep.subr.mxu0 0.0
    %482 = vmatpush2.msra.mxu0 0.0
    %483 = vmatprep.subr.mxu0 0.0
    %484 = vmatpush2.msra.mxu0 0.0
    %485 = vmatprep.subr.mxu0 0.0
    %486 = vmatpush2.msra.mxu0 0.0
    %487 = vmatprep.subr.mxu0 0.0
    %488 = vmatpush2.msra.mxu0 0.0
    %489 = vmatprep.subr.mxu0 0.0
    %490 = vmatpush2.msra.mxu0 0.0
    %491 = vmatprep.subr.mxu0 0.0
    %492 = vmatpush2.msra.mxu0 0.0
    %493 = vmatprep.subr.mxu0 0.0
    %494 = vmatpush2.msra.mxu0 0.0
    %495 = vmatprep.subr.mxu0 0.0
    %496 = vmatpush2.msra.mxu0 0.0
    %497 = vmatprep.mubr.f32.mxu0 0.0
    %498 = vmatmul.mubr.f32.gmra.mxu0 %v431
    %v499 = vpop.f32.mrf.mxu0
    %v500 = vadd.f32 %v427, %v499
    %v501 = vpop.f32.mrf.mxu0
    %502 = vdwg.mxu0
    %v503 = vmul.f32 %v500, %v500
    %vm504 = vcmask 254976
    %v505 = vsel %vm504, %v503, 0.0
    %506 = vadd.xlane.f32.xlu0 %v505
    %v507 = vpop.xlane.xlu0 %506
    %v508 = vadd.f32 %v507, 1e-12
    %v509 = vrsqrt.pop %v508
    %v510 = vmul.f32 %v500, %v509
    %v511 = vlaneseq
    %v512 = vand.u32 %v511, 127
    %s513 = sld [smem:[#allocation2]]
    %v514 = vstv %s513
    %vm515 = vcmp.eq.s32.totalorder %v512, %v514
    %v516 = vsel %vm515, 1, 0
    %v517 = vcvt.s32.f32 %v516
    %s518 = sld [smem:[#allocation2 + $0x80]]
    %v519 = vstv %s518
    %vm520 = vcmp.eq.s32.totalorder %v512, %v519
    %v521 = vsel %vm520, 1, 0
    %v522 = vcvt.s32.f32 %v521
    %s523 = sld [smem:[#allocation2 + $0x1]]
    %v524 = vstv %s523
    %vm525 = vcmp.eq.s32.totalorder %v512, %v524
    %v526 = vsel %vm525, 1, 0
    %v527 = vcvt.s32.f32 %v526
    %s528 = sld [smem:[#allocation2 + $0x81]]
    %v529 = vstv %s528
    %vm530 = vcmp.eq.s32.totalorder %v512, %v529
    %v531 = vsel %vm530, 1, 0
    %v532 = vcvt.s32.f32 %v531
    %s533 = sld [smem:[#allocation2 + $0x2]]
    %v534 = vstv %s533
    %vm535 = vcmp.eq.s32.totalorder %v512, %v534
    %v536 = vsel %vm535, 1, 0
    %v537 = vcvt.s32.f32 %v536
    %s538 = sld [smem:[#allocation2 + $0x82]]
    %v539 = vstv %s538
    %vm540 = vcmp.eq.s32.totalorder %v512, %v539
    %v541 = vsel %vm540, 1, 0
    %v542 = vcvt.s32.f32 %v541
    %s543 = sld [smem:[#allocation2 + $0x3]]
    %v544 = vstv %s543
    %vm545 = vcmp.eq.s32.totalorder %v512, %v544
    %v546 = vsel %vm545, 1, 0
    %v547 = vcvt.s32.f32 %v546
    %s548 = sld [smem:[#allocation2 + $0x83]]
    %v549 = vstv %s548
    %vm550 = vcmp.eq.s32.totalorder %v512, %v549
    %v551 = vsel %vm550, 1, 0
    %v552 = vcvt.s32.f32 %v551
    %s553 = sld [smem:[#allocation2 + $0x4]]
    %v554 = vstv %s553
    %vm555 = vcmp.eq.s32.totalorder %v512, %v554
    %v556 = vsel %vm555, 1, 0
    %v557 = vcvt.s32.f32 %v556
    %s558 = sld [smem:[#allocation2 + $0x84]]
    %v559 = vstv %s558
    %vm560 = vcmp.eq.s32.totalorder %v512, %v559
    %v561 = vsel %vm560, 1, 0
    %v562 = vcvt.s32.f32 %v561
    %s563 = sld [smem:[#allocation2 + $0x5]]
    %v564 = vstv %s563
    %vm565 = vcmp.eq.s32.totalorder %v512, %v564
    %v566 = vsel %vm565, 1, 0
    %v567 = vcvt.s32.f32 %v566
    %s568 = sld [smem:[#allocation2 + $0x85]]
    %v569 = vstv %s568
    %vm570 = vcmp.eq.s32.totalorder %v512, %v569
    %v571 = vsel %vm570, 1, 0
    %v572 = vcvt.s32.f32 %v571
    %s573 = sld [smem:[#allocation2 + $0x6]]
    %v574 = vstv %s573
    %vm575 = vcmp.eq.s32.totalorder %v512, %v574
    %v576 = vsel %vm575, 1, 0
    %v577 = vcvt.s32.f32 %v576
    %s578 = sld [smem:[#allocation2 + $0x86]]
    %v579 = vstv %s578
    %vm580 = vcmp.eq.s32.totalorder %v512, %v579
    %v581 = vsel %vm580, 1, 0
    %v582 = vcvt.s32.f32 %v581
    %s583 = sld [smem:[#allocation2 + $0x7]]
    %v584 = vstv %s583
    %vm585 = vcmp.eq.s32.totalorder %v512, %v584
    %v586 = vsel %vm585, 1, 0
    %v587 = vcvt.s32.f32 %v586
    %s588 = sld [smem:[#allocation2 + $0x87]]
    %v589 = vstv %s588
    %vm590 = vcmp.eq.s32.totalorder %v512, %v589
    %v591 = vsel %vm590, 1, 0
    %v592 = vcvt.s32.f32 %v591
    %vm593 = vcmask 1040384
    %v594 = vsel %vm593, %v517, %v522
    %vm595 = vcmask 1041408
    %v596 = vsel %vm595, %v594, %v527
    %vm597 = vcmask 1042432
    %v598 = vsel %vm597, %v596, %v532
    %vm599 = vcmask 1043456
    %v600 = vsel %vm599, %v598, %v537
    %vm601 = vcmask 1044480
    %v602 = vsel %vm601, %v600, %v542
    %vm603 = vcmask 1045504
    %v604 = vsel %vm603, %v602, %v547
    %vm605 = vcmask 1046528
    %v606 = vsel %vm605, %v604, %v552
    %v607 = vsel %vm593, %v557, %v562
    %v608 = vsel %vm595, %v607, %v567
    %v609 = vsel %vm597, %v608, %v572
    %v610 = vsel %vm599, %v609, %v577
    %v611 = vsel %vm601, %v610, %v582
    %v612 = vsel %vm603, %v611, %v587
    %v613 = vsel %vm605, %v612, %v592
    %v614 = vld [vmem:[%s5] sm:$0xff]
    %v615 = vld [vmem:[%s5 + $0x8] sm:$0xff]
    %v616 = vld [vmem:[%s5 + $0x10] sm:$0xff]
    %v617 = vld [vmem:[%s5 + $0x18] sm:$0xff]
    %v618 = vld [vmem:[%s5 + $0x20] sm:$0xff]
    %vm619 = vcmask 326656
    %v621 = vsel %vm619, %v606, 0
    %v624 = vsel %vm619, %v613, 0
    %626 = vmatprep.subr.mxu0 0.0
    %627 = vmatpush1.msra.mxu0 0.0
    %628 = vmatprep.subr.mxu0 0.0
    %629 = vmatpush1.msra.mxu0 0.0
    %630 = vmatprep.subr.mxu0 0.0
    %631 = vmatpush1.msra.mxu0 0.0
    %632 = vmatprep.subr.mxu0 0.0
    %633 = vmatpush1.msra.mxu0 0.0
    %634 = vmatprep.subr.mxu0 0.0
    %635 = vmatpush1.msra.mxu0 0.0
    %636 = vmatprep.subr.mxu0 0.0
    %637 = vmatpush1.msra.mxu0 0.0
    %638 = vmatprep.subr.mxu0 0.0
    %639 = vmatpush1.msra.mxu0 0.0
    %640 = vmatprep.subr.mxu0 0.0
    %641 = vmatpush1.msra.mxu0 0.0
    %642 = vmatprep.subr.mxu0 0.0
    %643 = vmatpush1.msra.mxu0 0.0
    %644 = vmatprep.subr.mxu0 0.0
    %645 = vmatpush1.msra.mxu0 0.0
    %646 = vmatprep.subr.mxu0 0.0
    %647 = vmatpush1.msra.mxu0 0.0
    %648 = vmatprep.subr.mxu0 0.0
    %649 = vmatpush1.msra.mxu0 %v618
    %650 = vmatprep.subr.mxu0 0.0
    %651 = vmatpush1.msra.mxu0 %v617
    %652 = vmatprep.subr.mxu0 0.0
    %653 = vmatpush1.msra.mxu0 %v616
    %654 = vmatprep.subr.mxu0 0.0
    %655 = vmatpush1.msra.mxu0 %v615
    %656 = vmatprep.subr.mxu0 0.0
    %657 = vmatpush1.msra.mxu0 %v614
    %658 = vmatprep.subr.mxu0 0.0
    %659 = vmatpush2.msra.mxu0 0.0
    %660 = vmatprep.subr.mxu0 0.0
    %661 = vmatpush2.msra.mxu0 0.0
    %662 = vmatprep.subr.mxu0 0.0
    %663 = vmatpush2.msra.mxu0 0.0
    %664 = vmatprep.subr.mxu0 0.0
    %665 = vmatpush2.msra.mxu0 0.0
    %666 = vmatprep.subr.mxu0 0.0
    %667 = vmatpush2.msra.mxu0 0.0
    %668 = vmatprep.subr.mxu0 0.0
    %669 = vmatpush2.msra.mxu0 0.0
    %670 = vmatprep.subr.mxu0 0.0
    %671 = vmatpush2.msra.mxu0 0.0
    %672 = vmatprep.subr.mxu0 0.0
    %673 = vmatpush2.msra.mxu0 0.0
    %674 = vmatprep.subr.mxu0 0.0
    %675 = vmatpush2.msra.mxu0 0.0
    %676 = vmatprep.subr.mxu0 0.0
    %677 = vmatpush2.msra.mxu0 0.0
    %678 = vmatprep.subr.mxu0 0.0
    %679 = vmatpush2.msra.mxu0 0.0
    %680 = vmatprep.subr.mxu0 0.0
    %681 = vmatpush2.msra.mxu0 0.0
    %682 = vmatprep.subr.mxu0 0.0
    %683 = vmatpush2.msra.mxu0 0.0
    %684 = vmatprep.subr.mxu0 0.0
    %685 = vmatpush2.msra.mxu0 0.0
    %686 = vmatprep.subr.mxu0 0.0
    %687 = vmatpush2.msra.mxu0 0.0
    %688 = vmatprep.subr.mxu0 0.0
    %689 = vmatpush2.msra.mxu0 0.0
    %690 = vmatprep.mubr.f32.mxu0 0.0
    %691 = vmatmul.mubr.f32.gmra.mxu0 %v621
    %v692 = vpop.f32.mrf.mxu0
    %v693 = vadd.f32 0.0, %v692
    %v694 = vpop.f32.mrf.mxu0
    %695 = vmatprep.mubr.f32.mxu0 0.0
    %696 = vmatmul.mubr.f32.gmra.mxu0 %v624
    %v697 = vpop.f32.mrf.mxu0
    %v698 = vadd.f32 0.0, %v697
    %v699 = vpop.f32.mrf.mxu0
    %700 = vdwg.mxu0
    %v701 = vtanh.pop %v693
    %v702 = vtanh.pop %v698
    %v703 = vld [vmem:[%s8] sm:$0x1]
    %v704 = vld [vmem:[%s6] sm:$0xff]
    %v705 = vld [vmem:[%s6 + $0x8] sm:$0xff]
    %v706 = vld [vmem:[%s7] sm:$0xff]
    %v707 = vld [vmem:[%s7 + $0x8] sm:$0xff]
    %v708 = vld [vmem:[%s7 + $0x10] sm:$0xff]
    %v709 = vld [vmem:[%s7 + $0x18] sm:$0xff]
    %vm710 = vcmask 261120
    %v712 = vsel %vm710, %v510, 0
    %714 = vmatprep.subr.mxu0 0.0
    %715 = vmatpush1.msra.mxu0 0.0
    %716 = vmatprep.subr.mxu0 0.0
    %717 = vmatpush1.msra.mxu0 0.0
    %718 = vmatprep.subr.mxu0 0.0
    %719 = vmatpush1.msra.mxu0 0.0
    %720 = vmatprep.subr.mxu0 0.0
    %721 = vmatpush1.msra.mxu0 0.0
    %722 = vmatprep.subr.mxu0 0.0
    %723 = vmatpush1.msra.mxu0 0.0
    %724 = vmatprep.subr.mxu0 0.0
    %725 = vmatpush1.msra.mxu0 0.0
    %726 = vmatprep.subr.mxu0 0.0
    %727 = vmatpush1.msra.mxu0 0.0
    %728 = vmatprep.subr.mxu0 0.0
    %729 = vmatpush1.msra.mxu0 0.0
    %730 = vmatprep.subr.mxu0 0.0
    %731 = vmatpush1.msra.mxu0 0.0
    %732 = vmatprep.subr.mxu0 0.0
    %733 = vmatpush1.msra.mxu0 0.0
    %734 = vmatprep.subr.mxu0 0.0
    %735 = vmatpush1.msra.mxu0 0.0
    %736 = vmatprep.subr.mxu0 0.0
    %737 = vmatpush1.msra.mxu0 0.0
    %738 = vmatprep.subr.mxu0 0.0
    %739 = vmatpush1.msra.mxu0 %v709
    %740 = vmatprep.subr.mxu0 0.0
    %741 = vmatpush1.msra.mxu0 %v708
    %742 = vmatprep.subr.mxu0 0.0
    %743 = vmatpush1.msra.mxu0 %v707
    %744 = vmatprep.subr.mxu0 0.0
    %745 = vmatpush1.msra.mxu0 %v706
    %746 = vmatprep.subr.mxu0 0.0
    %747 = vmatpush2.msra.mxu0 0.0
    %748 = vmatprep.subr.mxu0 0.0
    %749 = vmatpush2.msra.mxu0 0.0
    %750 = vmatprep.subr.mxu0 0.0
    %751 = vmatpush2.msra.mxu0 0.0
    %752 = vmatprep.subr.mxu0 0.0
    %753 = vmatpush2.msra.mxu0 0.0
    %754 = vmatprep.subr.mxu0 0.0
    %755 = vmatpush2.msra.mxu0 0.0
    %756 = vmatprep.subr.mxu0 0.0
    %757 = vmatpush2.msra.mxu0 0.0
    %758 = vmatprep.subr.mxu0 0.0
    %759 = vmatpush2.msra.mxu0 0.0
    %760 = vmatprep.subr.mxu0 0.0
    %761 = vmatpush2.msra.mxu0 0.0
    %762 = vmatprep.subr.mxu0 0.0
    %763 = vmatpush2.msra.mxu0 0.0
    %764 = vmatprep.subr.mxu0 0.0
    %765 = vmatpush2.msra.mxu0 0.0
    %766 = vmatprep.subr.mxu0 0.0
    %767 = vmatpush2.msra.mxu0 0.0
    %768 = vmatprep.subr.mxu0 0.0
    %769 = vmatpush2.msra.mxu0 0.0
    %770 = vmatprep.subr.mxu0 0.0
    %771 = vmatpush2.msra.mxu0 0.0
    %772 = vmatprep.subr.mxu0 0.0
    %773 = vmatpush2.msra.mxu0 0.0
    %774 = vmatprep.subr.mxu0 0.0
    %775 = vmatpush2.msra.mxu0 0.0
    %776 = vmatprep.subr.mxu0 0.0
    %777 = vmatpush2.msra.mxu0 0.0
    %778 = vmatprep.mubr.f32.mxu0 0.0
    %779 = vmatmul.mubr.f32.gmra.mxu0 %v712
    %v780 = vpop.f32.mrf.mxu0
    %v781 = vadd.f32 0.0, %v780
    %v782 = vpop.f32.mrf.mxu0
    %783 = vdwg.mxu0
    %vm784 = vcmask 130048
    %v786 = vsel %vm784, %v701, 0
    %788 = vmatprep.subr.mxu0 0.0
    %789 = vmatpush1.msra.mxu0 0.0
    %790 = vmatprep.subr.mxu0 0.0
    %791 = vmatpush1.msra.mxu0 0.0
    %792 = vmatprep.subr.mxu0 0.0
    %793 = vmatpush1.msra.mxu0 0.0
    %794 = vmatprep.subr.mxu0 0.0
    %795 = vmatpush1.msra.mxu0 0.0
    %796 = vmatprep.subr.mxu0 0.0
    %797 = vmatpush1.msra.mxu0 0.0
    %798 = vmatprep.subr.mxu0 0.0
    %799 = vmatpush1.msra.mxu0 0.0
    %800 = vmatprep.subr.mxu0 0.0
    %801 = vmatpush1.msra.mxu0 0.0
    %802 = vmatprep.subr.mxu0 0.0
    %803 = vmatpush1.msra.mxu0 0.0
    %804 = vmatprep.subr.mxu0 0.0
    %805 = vmatpush1.msra.mxu0 0.0
    %806 = vmatprep.subr.mxu0 0.0
    %807 = vmatpush1.msra.mxu0 0.0
    %808 = vmatprep.subr.mxu0 0.0
    %809 = vmatpush1.msra.mxu0 0.0
    %810 = vmatprep.subr.mxu0 0.0
    %811 = vmatpush1.msra.mxu0 0.0
    %812 = vmatprep.subr.mxu0 0.0
    %813 = vmatpush1.msra.mxu0 0.0
    %814 = vmatprep.subr.mxu0 0.0
    %815 = vmatpush1.msra.mxu0 0.0
    %816 = vmatprep.subr.mxu0 0.0
    %817 = vmatpush1.msra.mxu0 %v705
    %818 = vmatprep.subr.mxu0 0.0
    %819 = vmatpush1.msra.mxu0 %v704
    %820 = vmatprep.subr.mxu0 0.0
    %821 = vmatpush2.msra.mxu0 0.0
    %822 = vmatprep.subr.mxu0 0.0
    %823 = vmatpush2.msra.mxu0 0.0
    %824 = vmatprep.subr.mxu0 0.0
    %825 = vmatpush2.msra.mxu0 0.0
    %826 = vmatprep.subr.mxu0 0.0
    %827 = vmatpush2.msra.mxu0 0.0
    %828 = vmatprep.subr.mxu0 0.0
    %829 = vmatpush2.msra.mxu0 0.0
    %830 = vmatprep.subr.mxu0 0.0
    %831 = vmatpush2.msra.mxu0 0.0
    %832 = vmatprep.subr.mxu0 0.0
    %833 = vmatpush2.msra.mxu0 0.0
    %834 = vmatprep.subr.mxu0 0.0
    %835 = vmatpush2.msra.mxu0 0.0
    %836 = vmatprep.subr.mxu0 0.0
    %837 = vmatpush2.msra.mxu0 0.0
    %838 = vmatprep.subr.mxu0 0.0
    %839 = vmatpush2.msra.mxu0 0.0
    %840 = vmatprep.subr.mxu0 0.0
    %841 = vmatpush2.msra.mxu0 0.0
    %842 = vmatprep.subr.mxu0 0.0
    %843 = vmatpush2.msra.mxu0 0.0
    %844 = vmatprep.subr.mxu0 0.0
    %845 = vmatpush2.msra.mxu0 0.0
    %846 = vmatprep.subr.mxu0 0.0
    %847 = vmatpush2.msra.mxu0 0.0
    %848 = vmatprep.subr.mxu0 0.0
    %849 = vmatpush2.msra.mxu0 0.0
    %850 = vmatprep.subr.mxu0 0.0
    %851 = vmatpush2.msra.mxu0 0.0
    %852 = vmatprep.mubr.f32.mxu0 0.0
    %853 = vmatmul.mubr.f32.gmra.mxu0 %v786
    %v854 = vpop.f32.mrf.mxu0
    %v855 = vadd.f32 %v781, %v854
    %v856 = vpop.f32.mrf.mxu0
    %857 = vdwg.mxu0
    %v859 = vlaneseq
    %v860 = vshrl.u32 %v859, 7
    %v861 = vsub.s32 0, %v860
    %v862 = vrot.slane %v703, %v861
    %v864 = vadd.f32 %v855, %v862
    %v865 = vxor.u32 %v864, 2147483648
    %v866 = vmul.f32 %v865, 1.442695
    %v867 = vpow.pop %v866
    %v868 = vadd.f32 %v867, 1.0
    %v869 = vrcp.pop %v868
    %v870 = vmul.f32 1.0, %v869
    %v871 = vtanh.pop %v864
    %872 = vrot.lane.b32.xlu0 %v510, 32
    %v873 = vpop.permute.xlu0 %872
    %v875 = vmul.f32 %v870, %v873
    %877 = vrot.lane.b32.xlu0 %v871, 64
    %v878 = vpop.permute.xlu0 %877
    %v880 = vmul.f32 %v870, %v878
    %882 = vrot.lane.b32.xlu0 %v880, 32
    %v883 = vpop.permute.xlu0 %882
    %v885 = vadd.f32 %v875, %v883
    %v886 = vtanh.pop %v885
    %888 = vrot.lane.b32.xlu0 %v886, 64
    %v889 = vpop.permute.xlu0 %888
    %v891 = vmul.f32 %v870, %v889
    %893 = vrot.lane.b32.xlu0 %v891, 32
    %v894 = vpop.permute.xlu0 %893
    %v895 = vsel %vm710, %v894, 0
    %897 = vmatprep.subr.mxu0 0.0
    %898 = vmatpush1.msra.mxu0 0.0
    %899 = vmatprep.subr.mxu0 0.0
    %900 = vmatpush1.msra.mxu0 0.0
    %901 = vmatprep.subr.mxu0 0.0
    %902 = vmatpush1.msra.mxu0 0.0
    %903 = vmatprep.subr.mxu0 0.0
    %904 = vmatpush1.msra.mxu0 0.0
    %905 = vmatprep.subr.mxu0 0.0
    %906 = vmatpush1.msra.mxu0 0.0
    %907 = vmatprep.subr.mxu0 0.0
    %908 = vmatpush1.msra.mxu0 0.0
    %909 = vmatprep.subr.mxu0 0.0
    %910 = vmatpush1.msra.mxu0 0.0
    %911 = vmatprep.subr.mxu0 0.0
    %912 = vmatpush1.msra.mxu0 0.0
    %913 = vmatprep.subr.mxu0 0.0
    %914 = vmatpush1.msra.mxu0 0.0
    %915 = vmatprep.subr.mxu0 0.0
    %916 = vmatpush1.msra.mxu0 0.0
    %917 = vmatprep.subr.mxu0 0.0
    %918 = vmatpush1.msra.mxu0 0.0
    %919 = vmatprep.subr.mxu0 0.0
    %920 = vmatpush1.msra.mxu0 0.0
    %921 = vmatprep.subr.mxu0 0.0
    %922 = vmatpush1.msra.mxu0 %v709
    %923 = vmatprep.subr.mxu0 0.0
    %924 = vmatpush1.msra.mxu0 %v708
    %925 = vmatprep.subr.mxu0 0.0
    %926 = vmatpush1.msra.mxu0 %v707
    %927 = vmatprep.subr.mxu0 0.0
    %928 = vmatpush1.msra.mxu0 %v706
    %929 = vmatprep.subr.mxu0 0.0
    %930 = vmatpush2.msra.mxu0 0.0
    %931 = vmatprep.subr.mxu0 0.0
    %932 = vmatpush2.msra.mxu0 0.0
    %933 = vmatprep.subr.mxu0 0.0
    %934 = vmatpush2.msra.mxu0 0.0
    %935 = vmatprep.subr.mxu0 0.0
    %936 = vmatpush2.msra.mxu0 0.0
    %937 = vmatprep.subr.mxu0 0.0
    %938 = vmatpush2.msra.mxu0 0.0
    %939 = vmatprep.subr.mxu0 0.0
    %940 = vmatpush2.msra.mxu0 0.0
    %941 = vmatprep.subr.mxu0 0.0
    %942 = vmatpush2.msra.mxu0 0.0
    %943 = vmatprep.subr.mxu0 0.0
    %944 = vmatpush2.msra.mxu0 0.0
    %945 = vmatprep.subr.mxu0 0.0
    %946 = vmatpush2.msra.mxu0 0.0
    %947 = vmatprep.subr.mxu0 0.0
    %948 = vmatpush2.msra.mxu0 0.0
    %949 = vmatprep.subr.mxu0 0.0
    %950 = vmatpush2.msra.mxu0 0.0
    %951 = vmatprep.subr.mxu0 0.0
    %952 = vmatpush2.msra.mxu0 0.0
    %953 = vmatprep.subr.mxu0 0.0
    %954 = vmatpush2.msra.mxu0 0.0
    %955 = vmatprep.subr.mxu0 0.0
    %956 = vmatpush2.msra.mxu0 0.0
    %957 = vmatprep.subr.mxu0 0.0
    %958 = vmatpush2.msra.mxu0 0.0
    %959 = vmatprep.subr.mxu0 0.0
    %960 = vmatpush2.msra.mxu0 0.0
    %961 = vmatprep.mubr.f32.mxu0 0.0
    %962 = vmatmul.mubr.f32.gmra.mxu0 %v895
    %v963 = vpop.f32.mrf.mxu0
    %v964 = vadd.f32 0.0, %v963
    %v965 = vpop.f32.mrf.mxu0
    %966 = vdwg.mxu0
    %v967 = vrot.slane %v701, 2
    %v968 = vsel %vm784, %v967, 0
    %970 = vmatprep.subr.mxu0 0.0
    %971 = vmatpush1.msra.mxu0 0.0
    %972 = vmatprep.subr.mxu0 0.0
    %973 = vmatpush1.msra.mxu0 0.0
    %974 = vmatprep.subr.mxu0 0.0
    %975 = vmatpush1.msra.mxu0 0.0
    %976 = vmatprep.subr.mxu0 0.0
    %977 = vmatpush1.msra.mxu0 0.0
    %978 = vmatprep.subr.mxu0 0.0
    %979 = vmatpush1.msra.mxu0 0.0
    %980 = vmatprep.subr.mxu0 0.0
    %981 = vmatpush1.msra.mxu0 0.0
    %982 = vmatprep.subr.mxu0 0.0
    %983 = vmatpush1.msra.mxu0 0.0
    %984 = vmatprep.subr.mxu0 0.0
    %985 = vmatpush1.msra.mxu0 0.0
    %986 = vmatprep.subr.mxu0 0.0
    %987 = vmatpush1.msra.mxu0 0.0
    %988 = vmatprep.subr.mxu0 0.0
    %989 = vmatpush1.msra.mxu0 0.0
    %990 = vmatprep.subr.mxu0 0.0
    %991 = vmatpush1.msra.mxu0 0.0
    %992 = vmatprep.subr.mxu0 0.0
    %993 = vmatpush1.msra.mxu0 0.0
    %994 = vmatprep.subr.mxu0 0.0
    %995 = vmatpush1.msra.mxu0 0.0
    %996 = vmatprep.subr.mxu0 0.0
    %997 = vmatpush1.msra.mxu0 0.0
    %998 = vmatprep.subr.mxu0 0.0
    %999 = vmatpush1.msra.mxu0 %v705
    %1000 = vmatprep.subr.mxu0 0.0
    %1001 = vmatpush1.msra.mxu0 %v704
    %1002 = vmatprep.subr.mxu0 0.0
    %1003 = vmatpush2.msra.mxu0 0.0
    %1004 = vmatprep.subr.mxu0 0.0
    %1005 = vmatpush2.msra.mxu0 0.0
    %1006 = vmatprep.subr.mxu0 0.0
    %1007 = vmatpush2.msra.mxu0 0.0
    %1008 = vmatprep.subr.mxu0 0.0
    %1009 = vmatpush2.msra.mxu0 0.0
    %1010 = vmatprep.subr.mxu0 0.0
    %1011 = vmatpush2.msra.mxu0 0.0
    %1012 = vmatprep.subr.mxu0 0.0
    %1013 = vmatpush2.msra.mxu0 0.0
    %1014 = vmatprep.subr.mxu0 0.0
    %1015 = vmatpush2.msra.mxu0 0.0
    %1016 = vmatprep.subr.mxu0 0.0
    %1017 = vmatpush2.msra.mxu0 0.0
    %1018 = vmatprep.subr.mxu0 0.0
    %1019 = vmatpush2.msra.mxu0 0.0
    %1020 = vmatprep.subr.mxu0 0.0
    %1021 = vmatpush2.msra.mxu0 0.0
    %1022 = vmatprep.subr.mxu0 0.0
    %1023 = vmatpush2.msra.mxu0 0.0
    %1024 = vmatprep.subr.mxu0 0.0
    %1025 = vmatpush2.msra.mxu0 0.0
    %1026 = vmatprep.subr.mxu0 0.0
    %1027 = vmatpush2.msra.mxu0 0.0
    %1028 = vmatprep.subr.mxu0 0.0
    %1029 = vmatpush2.msra.mxu0 0.0
    %1030 = vmatprep.subr.mxu0 0.0
    %1031 = vmatpush2.msra.mxu0 0.0
    %1032 = vmatprep.subr.mxu0 0.0
    %1033 = vmatpush2.msra.mxu0 0.0
    %1034 = vmatprep.mubr.f32.mxu0 0.0
    %1035 = vmatmul.mubr.f32.gmra.mxu0 %v968
    %v1036 = vpop.f32.mrf.mxu0
    %v1037 = vadd.f32 %v964, %v1036
    %v1038 = vpop.f32.mrf.mxu0
    %1039 = vdwg.mxu0
    %v1040 = vadd.f32 %v1037, %v862
    %v1041 = vxor.u32 %v1040, 2147483648
    %v1042 = vmul.f32 %v1041, 1.442695
    %v1043 = vpow.pop %v1042
    %v1044 = vadd.f32 %v1043, 1.0
    %v1045 = vrcp.pop %v1044
    %v1046 = vmul.f32 1.0, %v1045
    %v1047 = vtanh.pop %v1040
    %v1048 = vmul.f32 %v1046, %v885
    %1050 = vrot.lane.b32.xlu0 %v1047, 64
    %v1051 = vpop.permute.xlu0 %1050
    %v1053 = vmul.f32 %v1046, %v1051
    %1055 = vrot.lane.b32.xlu0 %v1053, 32
    %v1056 = vpop.permute.xlu0 %1055
    %v1058 = vadd.f32 %v1048, %v1056
    %v1059 = vtanh.pop %v1058
    %1061 = vrot.lane.b32.xlu0 %v1059, 64
    %v1062 = vpop.permute.xlu0 %1061
    %v1064 = vmul.f32 %v1046, %v1062
    %1066 = vrot.lane.b32.xlu0 %v1064, 32
    %v1067 = vpop.permute.xlu0 %1066
    %v1068 = vsel %vm710, %v1067, 0
    %1070 = vmatprep.subr.mxu0 0.0
    %1071 = vmatpush1.msra.mxu0 0.0
    %1072 = vmatprep.subr.mxu0 0.0
    %1073 = vmatpush1.msra.mxu0 0.0
    %1074 = vmatprep.subr.mxu0 0.0
    %1075 = vmatpush1.msra.mxu0 0.0
    %1076 = vmatprep.subr.mxu0 0.0
    %1077 = vmatpush1.msra.mxu0 0.0
    %1078 = vmatprep.subr.mxu0 0.0
    %1079 = vmatpush1.msra.mxu0 0.0
    %1080 = vmatprep.subr.mxu0 0.0
    %1081 = vmatpush1.msra.mxu0 0.0
    %1082 = vmatprep.subr.mxu0 0.0
    %1083 = vmatpush1.msra.mxu0 0.0
    %1084 = vmatprep.subr.mxu0 0.0
    %1085 = vmatpush1.msra.mxu0 0.0
    %1086 = vmatprep.subr.mxu0 0.0
    %1087 = vmatpush1.msra.mxu0 0.0
    %1088 = vmatprep.subr.mxu0 0.0
    %1089 = vmatpush1.msra.mxu0 0.0
    %1090 = vmatprep.subr.mxu0 0.0
    %1091 = vmatpush1.msra.mxu0 0.0
    %1092 = vmatprep.subr.mxu0 0.0
    %1093 = vmatpush1.msra.mxu0 0.0
    %1094 = vmatprep.subr.mxu0 0.0
    %1095 = vmatpush1.msra.mxu0 %v709
    %1096 = vmatprep.subr.mxu0 0.0
    %1097 = vmatpush1.msra.mxu0 %v708
    %1098 = vmatprep.subr.mxu0 0.0
    %1099 = vmatpush1.msra.mxu0 %v707
    %1100 = vmatprep.subr.mxu0 0.0
    %1101 = vmatpush1.msra.mxu0 %v706
    %1102 = vmatprep.subr.mxu0 0.0
    %1103 = vmatpush2.msra.mxu0 0.0
    %1104 = vmatprep.subr.mxu0 0.0
    %1105 = vmatpush2.msra.mxu0 0.0
    %1106 = vmatprep.subr.mxu0 0.0
    %1107 = vmatpush2.msra.mxu0 0.0
    %1108 = vmatprep.subr.mxu0 0.0
    %1109 = vmatpush2.msra.mxu0 0.0
    %1110 = vmatprep.subr.mxu0 0.0
    %1111 = vmatpush2.msra.mxu0 0.0
    %1112 = vmatprep.subr.mxu0 0.0
    %1113 = vmatpush2.msra.mxu0 0.0
    %1114 = vmatprep.subr.mxu0 0.0
    %1115 = vmatpush2.msra.mxu0 0.0
    %1116 = vmatprep.subr.mxu0 0.0
    %1117 = vmatpush2.msra.mxu0 0.0
    %1118 = vmatprep.subr.mxu0 0.0
    %1119 = vmatpush2.msra.mxu0 0.0
    %1120 = vmatprep.subr.mxu0 0.0
    %1121 = vmatpush2.msra.mxu0 0.0
    %1122 = vmatprep.subr.mxu0 0.0
    %1123 = vmatpush2.msra.mxu0 0.0
    %1124 = vmatprep.subr.mxu0 0.0
    %1125 = vmatpush2.msra.mxu0 0.0
    %1126 = vmatprep.subr.mxu0 0.0
    %1127 = vmatpush2.msra.mxu0 0.0
    %1128 = vmatprep.subr.mxu0 0.0
    %1129 = vmatpush2.msra.mxu0 0.0
    %1130 = vmatprep.subr.mxu0 0.0
    %1131 = vmatpush2.msra.mxu0 0.0
    %1132 = vmatprep.subr.mxu0 0.0
    %1133 = vmatpush2.msra.mxu0 0.0
    %1134 = vmatprep.mubr.f32.mxu0 0.0
    %1135 = vmatmul.mubr.f32.gmra.mxu0 %v1068
    %v1136 = vpop.f32.mrf.mxu0
    %v1137 = vadd.f32 0.0, %v1136
    %v1138 = vpop.f32.mrf.mxu0
    %1139 = vdwg.mxu0
    %v1140 = vrot.slane %v701, 4
    %v1141 = vsel %vm784, %v1140, 0
    %1143 = vmatprep.subr.mxu0 0.0
    %1144 = vmatpush1.msra.mxu0 0.0
    %1145 = vmatprep.subr.mxu0 0.0
    %1146 = vmatpush1.msra.mxu0 0.0
    %1147 = vmatprep.subr.mxu0 0.0
    %1148 = vmatpush1.msra.mxu0 0.0
    %1149 = vmatprep.subr.mxu0 0.0
    %1150 = vmatpush1.msra.mxu0 0.0
    %1151 = vmatprep.subr.mxu0 0.0
    %1152 = vmatpush1.msra.mxu0 0.0
    %1153 = vmatprep.subr.mxu0 0.0
    %1154 = vmatpush1.msra.mxu0 0.0
    %1155 = vmatprep.subr.mxu0 0.0
    %1156 = vmatpush1.msra.mxu0 0.0
    %1157 = vmatprep.subr.mxu0 0.0
    %1158 = vmatpush1.msra.mxu0 0.0
    %1159 = vmatprep.subr.mxu0 0.0
    %1160 = vmatpush1.msra.mxu0 0.0
    %1161 = vmatprep.subr.mxu0 0.0
    %1162 = vmatpush1.msra.mxu0 0.0
    %1163 = vmatprep.subr.mxu0 0.0
    %1164 = vmatpush1.msra.mxu0 0.0
    %1165 = vmatprep.subr.mxu0 0.0
    %1166 = vmatpush1.msra.mxu0 0.0
    %1167 = vmatprep.subr.mxu0 0.0
    %1168 = vmatpush1.msra.mxu0 0.0
    %1169 = vmatprep.subr.mxu0 0.0
    %1170 = vmatpush1.msra.mxu0 0.0
    %1171 = vmatprep.subr.mxu0 0.0
    %1172 = vmatpush1.msra.mxu0 %v705
    %1173 = vmatprep.subr.mxu0 0.0
    %1174 = vmatpush1.msra.mxu0 %v704
    %1175 = vmatprep.subr.mxu0 0.0
    %1176 = vmatpush2.msra.mxu0 0.0
    %1177 = vmatprep.subr.mxu0 0.0
    %1178 = vmatpush2.msra.mxu0 0.0
    %1179 = vmatprep.subr.mxu0 0.0
    %1180 = vmatpush2.msra.mxu0 0.0
    %1181 = vmatprep.subr.mxu0 0.0
    %1182 = vmatpush2.msra.mxu0 0.0
    %1183 = vmatprep.subr.mxu0 0.0
    %1184 = vmatpush2.msra.mxu0 0.0
    %1185 = vmatprep.subr.mxu0 0.0
    %1186 = vmatpush2.msra.mxu0 0.0
    %1187 = vmatprep.subr.mxu0 0.0
    %1188 = vmatpush2.msra.mxu0 0.0
    %1189 = vmatprep.subr.mxu0 0.0
    %1190 = vmatpush2.msra.mxu0 0.0
    %1191 = vmatprep.subr.mxu0 0.0
    %1192 = vmatpush2.msra.mxu0 0.0
    %1193 = vmatprep.subr.mxu0 0.0
    %1194 = vmatpush2.msra.mxu0 0.0
    %1195 = vmatprep.subr.mxu0 0.0
    %1196 = vmatpush2.msra.mxu0 0.0
    %1197 = vmatprep.subr.mxu0 0.0
    %1198 = vmatpush2.msra.mxu0 0.0
    %1199 = vmatprep.subr.mxu0 0.0
    %1200 = vmatpush2.msra.mxu0 0.0
    %1201 = vmatprep.subr.mxu0 0.0
    %1202 = vmatpush2.msra.mxu0 0.0
    %1203 = vmatprep.subr.mxu0 0.0
    %1204 = vmatpush2.msra.mxu0 0.0
    %1205 = vmatprep.subr.mxu0 0.0
    %1206 = vmatpush2.msra.mxu0 0.0
    %1207 = vmatprep.mubr.f32.mxu0 0.0
    %1208 = vmatmul.mubr.f32.gmra.mxu0 %v1141
    %v1209 = vpop.f32.mrf.mxu0
    %v1210 = vadd.f32 %v1137, %v1209
    %v1211 = vpop.f32.mrf.mxu0
    %1212 = vdwg.mxu0
    %v1213 = vadd.f32 %v1210, %v862
    %v1214 = vxor.u32 %v1213, 2147483648
    %v1215 = vmul.f32 %v1214, 1.442695
    %v1216 = vpow.pop %v1215
    %v1217 = vadd.f32 %v1216, 1.0
    %v1218 = vrcp.pop %v1217
    %v1219 = vmul.f32 1.0, %v1218
    %v1220 = vtanh.pop %v1213
    %v1221 = vmul.f32 %v1219, %v1058
    %1223 = vrot.lane.b32.xlu0 %v1220, 64
    %v1224 = vpop.permute.xlu0 %1223
    %v1226 = vmul.f32 %v1219, %v1224
    %1228 = vrot.lane.b32.xlu0 %v1226, 32
    %v1229 = vpop.permute.xlu0 %1228
    %v1231 = vadd.f32 %v1221, %v1229
    %v1232 = vtanh.pop %v1231
    %1234 = vrot.lane.b32.xlu0 %v1232, 64
    %v1235 = vpop.permute.xlu0 %1234
    %v1237 = vmul.f32 %v1219, %v1235
    %1239 = vrot.lane.b32.xlu0 %v1237, 32
    %v1240 = vpop.permute.xlu0 %1239
    %v1241 = vsel %vm710, %v1240, 0
    %1243 = vmatprep.subr.mxu0 0.0
    %1244 = vmatpush1.msra.mxu0 0.0
    %1245 = vmatprep.subr.mxu0 0.0
    %1246 = vmatpush1.msra.mxu0 0.0
    %1247 = vmatprep.subr.mxu0 0.0
    %1248 = vmatpush1.msra.mxu0 0.0
    %1249 = vmatprep.subr.mxu0 0.0
    %1250 = vmatpush1.msra.mxu0 0.0
    %1251 = vmatprep.subr.mxu0 0.0
    %1252 = vmatpush1.msra.mxu0 0.0
    %1253 = vmatprep.subr.mxu0 0.0
    %1254 = vmatpush1.msra.mxu0 0.0
    %1255 = vmatprep.subr.mxu0 0.0
    %1256 = vmatpush1.msra.mxu0 0.0
    %1257 = vmatprep.subr.mxu0 0.0
    %1258 = vmatpush1.msra.mxu0 0.0
    %1259 = vmatprep.subr.mxu0 0.0
    %1260 = vmatpush1.msra.mxu0 0.0
    %1261 = vmatprep.subr.mxu0 0.0
    %1262 = vmatpush1.msra.mxu0 0.0
    %1263 = vmatprep.subr.mxu0 0.0
    %1264 = vmatpush1.msra.mxu0 0.0
    %1265 = vmatprep.subr.mxu0 0.0
    %1266 = vmatpush1.msra.mxu0 0.0
    %1267 = vmatprep.subr.mxu0 0.0
    %1268 = vmatpush1.msra.mxu0 %v709
    %1269 = vmatprep.subr.mxu0 0.0
    %1270 = vmatpush1.msra.mxu0 %v708
    %1271 = vmatprep.subr.mxu0 0.0
    %1272 = vmatpush1.msra.mxu0 %v707
    %1273 = vmatprep.subr.mxu0 0.0
    %1274 = vmatpush1.msra.mxu0 %v706
    %1275 = vmatprep.subr.mxu0 0.0
    %1276 = vmatpush2.msra.mxu0 0.0
    %1277 = vmatprep.subr.mxu0 0.0
    %1278 = vmatpush2.msra.mxu0 0.0
    %1279 = vmatprep.subr.mxu0 0.0
    %1280 = vmatpush2.msra.mxu0 0.0
    %1281 = vmatprep.subr.mxu0 0.0
    %1282 = vmatpush2.msra.mxu0 0.0
    %1283 = vmatprep.subr.mxu0 0.0
    %1284 = vmatpush2.msra.mxu0 0.0
    %1285 = vmatprep.subr.mxu0 0.0
    %1286 = vmatpush2.msra.mxu0 0.0
    %1287 = vmatprep.subr.mxu0 0.0
    %1288 = vmatpush2.msra.mxu0 0.0
    %1289 = vmatprep.subr.mxu0 0.0
    %1290 = vmatpush2.msra.mxu0 0.0
    %1291 = vmatprep.subr.mxu0 0.0
    %1292 = vmatpush2.msra.mxu0 0.0
    %1293 = vmatprep.subr.mxu0 0.0
    %1294 = vmatpush2.msra.mxu0 0.0
    %1295 = vmatprep.subr.mxu0 0.0
    %1296 = vmatpush2.msra.mxu0 0.0
    %1297 = vmatprep.subr.mxu0 0.0
    %1298 = vmatpush2.msra.mxu0 0.0
    %1299 = vmatprep.subr.mxu0 0.0
    %1300 = vmatpush2.msra.mxu0 0.0
    %1301 = vmatprep.subr.mxu0 0.0
    %1302 = vmatpush2.msra.mxu0 0.0
    %1303 = vmatprep.subr.mxu0 0.0
    %1304 = vmatpush2.msra.mxu0 0.0
    %1305 = vmatprep.subr.mxu0 0.0
    %1306 = vmatpush2.msra.mxu0 0.0
    %1307 = vmatprep.mubr.f32.mxu0 0.0
    %1308 = vmatmul.mubr.f32.gmra.mxu0 %v1241
    %v1309 = vpop.f32.mrf.mxu0
    %v1310 = vadd.f32 0.0, %v1309
    %v1311 = vpop.f32.mrf.mxu0
    %1312 = vdwg.mxu0
    %v1313 = vrot.slane %v701, 6
    %v1314 = vsel %vm784, %v1313, 0
    %1316 = vmatprep.subr.mxu0 0.0
    %1317 = vmatpush1.msra.mxu0 0.0
    %1318 = vmatprep.subr.mxu0 0.0
    %1319 = vmatpush1.msra.mxu0 0.0
    %1320 = vmatprep.subr.mxu0 0.0
    %1321 = vmatpush1.msra.mxu0 0.0
    %1322 = vmatprep.subr.mxu0 0.0
    %1323 = vmatpush1.msra.mxu0 0.0
    %1324 = vmatprep.subr.mxu0 0.0
    %1325 = vmatpush1.msra.mxu0 0.0
    %1326 = vmatprep.subr.mxu0 0.0
    %1327 = vmatpush1.msra.mxu0 0.0
    %1328 = vmatprep.subr.mxu0 0.0
    %1329 = vmatpush1.msra.mxu0 0.0
    %1330 = vmatprep.subr.mxu0 0.0
    %1331 = vmatpush1.msra.mxu0 0.0
    %1332 = vmatprep.subr.mxu0 0.0
    %1333 = vmatpush1.msra.mxu0 0.0
    %1334 = vmatprep.subr.mxu0 0.0
    %1335 = vmatpush1.msra.mxu0 0.0
    %1336 = vmatprep.subr.mxu0 0.0
    %1337 = vmatpush1.msra.mxu0 0.0
    %1338 = vmatprep.subr.mxu0 0.0
    %1339 = vmatpush1.msra.mxu0 0.0
    %1340 = vmatprep.subr.mxu0 0.0
    %1341 = vmatpush1.msra.mxu0 0.0
    %1342 = vmatprep.subr.mxu0 0.0
    %1343 = vmatpush1.msra.mxu0 0.0
    %1344 = vmatprep.subr.mxu0 0.0
    %1345 = vmatpush1.msra.mxu0 %v705
    %1346 = vmatprep.subr.mxu0 0.0
    %1347 = vmatpush1.msra.mxu0 %v704
    %1348 = vmatprep.subr.mxu0 0.0
    %1349 = vmatpush2.msra.mxu0 0.0
    %1350 = vmatprep.subr.mxu0 0.0
    %1351 = vmatpush2.msra.mxu0 0.0
    %1352 = vmatprep.subr.mxu0 0.0
    %1353 = vmatpush2.msra.mxu0 0.0
    %1354 = vmatprep.subr.mxu0 0.0
    %1355 = vmatpush2.msra.mxu0 0.0
    %1356 = vmatprep.subr.mxu0 0.0
    %1357 = vmatpush2.msra.mxu0 0.0
    %1358 = vmatprep.subr.mxu0 0.0
    %1359 = vmatpush2.msra.mxu0 0.0
    %1360 = vmatprep.subr.mxu0 0.0
    %1361 = vmatpush2.msra.mxu0 0.0
    %1362 = vmatprep.subr.mxu0 0.0
    %1363 = vmatpush2.msra.mxu0 0.0
    %1364 = vmatprep.subr.mxu0 0.0
    %1365 = vmatpush2.msra.mxu0 0.0
    %1366 = vmatprep.subr.mxu0 0.0
    %1367 = vmatpush2.msra.mxu0 0.0
    %1368 = vmatprep.subr.mxu0 0.0
    %1369 = vmatpush2.msra.mxu0 0.0
    %1370 = vmatprep.subr.mxu0 0.0
    %1371 = vmatpush2.msra.mxu0 0.0
    %1372 = vmatprep.subr.mxu0 0.0
    %1373 = vmatpush2.msra.mxu0 0.0
    %1374 = vmatprep.subr.mxu0 0.0
    %1375 = vmatpush2.msra.mxu0 0.0
    %1376 = vmatprep.subr.mxu0 0.0
    %1377 = vmatpush2.msra.mxu0 0.0
    %1378 = vmatprep.subr.mxu0 0.0
    %1379 = vmatpush2.msra.mxu0 0.0
    %1380 = vmatprep.mubr.f32.mxu0 0.0
    %1381 = vmatmul.mubr.f32.gmra.mxu0 %v1314
    %v1382 = vpop.f32.mrf.mxu0
    %v1383 = vadd.f32 %v1310, %v1382
    %v1384 = vpop.f32.mrf.mxu0
    %1385 = vdwg.mxu0
    %v1386 = vadd.f32 %v1383, %v862
    %v1387 = vxor.u32 %v1386, 2147483648
    %v1388 = vmul.f32 %v1387, 1.442695
    %v1389 = vpow.pop %v1388
    %v1390 = vadd.f32 %v1389, 1.0
    %v1391 = vrcp.pop %v1390
    %v1392 = vmul.f32 1.0, %v1391
    %v1393 = vtanh.pop %v1386
    %v1394 = vmul.f32 %v1392, %v1231
    %1396 = vrot.lane.b32.xlu0 %v1393, 64
    %v1397 = vpop.permute.xlu0 %1396
    %v1399 = vmul.f32 %v1392, %v1397
    %1401 = vrot.lane.b32.xlu0 %v1399, 32
    %v1402 = vpop.permute.xlu0 %1401
    %v1404 = vadd.f32 %v1394, %v1402
    %v1405 = vtanh.pop %v1404
    %1407 = vrot.lane.b32.xlu0 %v1405, 64
    %v1408 = vpop.permute.xlu0 %1407
    %v1410 = vmul.f32 %v1392, %v1408
    %1412 = vrot.lane.b32.xlu0 %v1410, 32
    %v1413 = vpop.permute.xlu0 %1412
    %v1414 = vsel %vm710, %v1413, 0
    %1416 = vmatprep.subr.mxu0 0.0
    %1417 = vmatpush1.msra.mxu0 0.0
    %1418 = vmatprep.subr.mxu0 0.0
    %1419 = vmatpush1.msra.mxu0 0.0
    %1420 = vmatprep.subr.mxu0 0.0
    %1421 = vmatpush1.msra.mxu0 0.0
    %1422 = vmatprep.subr.mxu0 0.0
    %1423 = vmatpush1.msra.mxu0 0.0
    %1424 = vmatprep.subr.mxu0 0.0
    %1425 = vmatpush1.msra.mxu0 0.0
    %1426 = vmatprep.subr.mxu0 0.0
    %1427 = vmatpush1.msra.mxu0 0.0
    %1428 = vmatprep.subr.mxu0 0.0
    %1429 = vmatpush1.msra.mxu0 0.0
    %1430 = vmatprep.subr.mxu0 0.0
    %1431 = vmatpush1.msra.mxu0 0.0
    %1432 = vmatprep.subr.mxu0 0.0
    %1433 = vmatpush1.msra.mxu0 0.0
    %1434 = vmatprep.subr.mxu0 0.0
    %1435 = vmatpush1.msra.mxu0 0.0
    %1436 = vmatprep.subr.mxu0 0.0
    %1437 = vmatpush1.msra.mxu0 0.0
    %1438 = vmatprep.subr.mxu0 0.0
    %1439 = vmatpush1.msra.mxu0 0.0
    %1440 = vmatprep.subr.mxu0 0.0
    %1441 = vmatpush1.msra.mxu0 %v709
    %1442 = vmatprep.subr.mxu0 0.0
    %1443 = vmatpush1.msra.mxu0 %v708
    %1444 = vmatprep.subr.mxu0 0.0
    %1445 = vmatpush1.msra.mxu0 %v707
    %1446 = vmatprep.subr.mxu0 0.0
    %1447 = vmatpush1.msra.mxu0 %v706
    %1448 = vmatprep.subr.mxu0 0.0
    %1449 = vmatpush2.msra.mxu0 0.0
    %1450 = vmatprep.subr.mxu0 0.0
    %1451 = vmatpush2.msra.mxu0 0.0
    %1452 = vmatprep.subr.mxu0 0.0
    %1453 = vmatpush2.msra.mxu0 0.0
    %1454 = vmatprep.subr.mxu0 0.0
    %1455 = vmatpush2.msra.mxu0 0.0
    %1456 = vmatprep.subr.mxu0 0.0
    %1457 = vmatpush2.msra.mxu0 0.0
    %1458 = vmatprep.subr.mxu0 0.0
    %1459 = vmatpush2.msra.mxu0 0.0
    %1460 = vmatprep.subr.mxu0 0.0
    %1461 = vmatpush2.msra.mxu0 0.0
    %1462 = vmatprep.subr.mxu0 0.0
    %1463 = vmatpush2.msra.mxu0 0.0
    %1464 = vmatprep.subr.mxu0 0.0
    %1465 = vmatpush2.msra.mxu0 0.0
    %1466 = vmatprep.subr.mxu0 0.0
    %1467 = vmatpush2.msra.mxu0 0.0
    %1468 = vmatprep.subr.mxu0 0.0
    %1469 = vmatpush2.msra.mxu0 0.0
    %1470 = vmatprep.subr.mxu0 0.0
    %1471 = vmatpush2.msra.mxu0 0.0
    %1472 = vmatprep.subr.mxu0 0.0
    %1473 = vmatpush2.msra.mxu0 0.0
    %1474 = vmatprep.subr.mxu0 0.0
    %1475 = vmatpush2.msra.mxu0 0.0
    %1476 = vmatprep.subr.mxu0 0.0
    %1477 = vmatpush2.msra.mxu0 0.0
    %1478 = vmatprep.subr.mxu0 0.0
    %1479 = vmatpush2.msra.mxu0 0.0
    %1480 = vmatprep.mubr.f32.mxu0 0.0
    %1481 = vmatmul.mubr.f32.gmra.mxu0 %v1414
    %v1482 = vpop.f32.mrf.mxu0
    %v1483 = vadd.f32 0.0, %v1482
    %v1484 = vpop.f32.mrf.mxu0
    %1485 = vdwg.mxu0
    %v1487 = vsel %vm784, %v702, 0
    %1489 = vmatprep.subr.mxu0 0.0
    %1490 = vmatpush1.msra.mxu0 0.0
    %1491 = vmatprep.subr.mxu0 0.0
    %1492 = vmatpush1.msra.mxu0 0.0
    %1493 = vmatprep.subr.mxu0 0.0
    %1494 = vmatpush1.msra.mxu0 0.0
    %1495 = vmatprep.subr.mxu0 0.0
    %1496 = vmatpush1.msra.mxu0 0.0
    %1497 = vmatprep.subr.mxu0 0.0
    %1498 = vmatpush1.msra.mxu0 0.0
    %1499 = vmatprep.subr.mxu0 0.0
    %1500 = vmatpush1.msra.mxu0 0.0
    %1501 = vmatprep.subr.mxu0 0.0
    %1502 = vmatpush1.msra.mxu0 0.0
    %1503 = vmatprep.subr.mxu0 0.0
    %1504 = vmatpush1.msra.mxu0 0.0
    %1505 = vmatprep.subr.mxu0 0.0
    %1506 = vmatpush1.msra.mxu0 0.0
    %1507 = vmatprep.subr.mxu0 0.0
    %1508 = vmatpush1.msra.mxu0 0.0
    %1509 = vmatprep.subr.mxu0 0.0
    %1510 = vmatpush1.msra.mxu0 0.0
    %1511 = vmatprep.subr.mxu0 0.0
    %1512 = vmatpush1.msra.mxu0 0.0
    %1513 = vmatprep.subr.mxu0 0.0
    %1514 = vmatpush1.msra.mxu0 0.0
    %1515 = vmatprep.subr.mxu0 0.0
    %1516 = vmatpush1.msra.mxu0 0.0
    %1517 = vmatprep.subr.mxu0 0.0
    %1518 = vmatpush1.msra.mxu0 %v705
    %1519 = vmatprep.subr.mxu0 0.0
    %1520 = vmatpush1.msra.mxu0 %v704
    %1521 = vmatprep.subr.mxu0 0.0
    %1522 = vmatpush2.msra.mxu0 0.0
    %1523 = vmatprep.subr.mxu0 0.0
    %1524 = vmatpush2.msra.mxu0 0.0
    %1525 = vmatprep.subr.mxu0 0.0
    %1526 = vmatpush2.msra.mxu0 0.0
    %1527 = vmatprep.subr.mxu0 0.0
    %1528 = vmatpush2.msra.mxu0 0.0
    %1529 = vmatprep.subr.mxu0 0.0
    %1530 = vmatpush2.msra.mxu0 0.0
    %1531 = vmatprep.subr.mxu0 0.0
    %1532 = vmatpush2.msra.mxu0 0.0
    %1533 = vmatprep.subr.mxu0 0.0
    %1534 = vmatpush2.msra.mxu0 0.0
    %1535 = vmatprep.subr.mxu0 0.0
    %1536 = vmatpush2.msra.mxu0 0.0
    %1537 = vmatprep.subr.mxu0 0.0
    %1538 = vmatpush2.msra.mxu0 0.0
    %1539 = vmatprep.subr.mxu0 0.0
    %1540 = vmatpush2.msra.mxu0 0.0
    %1541 = vmatprep.subr.mxu0 0.0
    %1542 = vmatpush2.msra.mxu0 0.0
    %1543 = vmatprep.subr.mxu0 0.0
    %1544 = vmatpush2.msra.mxu0 0.0
    %1545 = vmatprep.subr.mxu0 0.0
    %1546 = vmatpush2.msra.mxu0 0.0
    %1547 = vmatprep.subr.mxu0 0.0
    %1548 = vmatpush2.msra.mxu0 0.0
    %1549 = vmatprep.subr.mxu0 0.0
    %1550 = vmatpush2.msra.mxu0 0.0
    %1551 = vmatprep.subr.mxu0 0.0
    %1552 = vmatpush2.msra.mxu0 0.0
    %1553 = vmatprep.mubr.f32.mxu0 0.0
    %1554 = vmatmul.mubr.f32.gmra.mxu0 %v1487
    %v1555 = vpop.f32.mrf.mxu0
    %v1556 = vadd.f32 %v1483, %v1555
    %v1557 = vpop.f32.mrf.mxu0
    %1558 = vdwg.mxu0
    %v1559 = vadd.f32 %v1556, %v862
    %v1560 = vxor.u32 %v1559, 2147483648
    %v1561 = vmul.f32 %v1560, 1.442695
    %v1562 = vpow.pop %v1561
    %v1563 = vadd.f32 %v1562, 1.0
    %v1564 = vrcp.pop %v1563
    %v1565 = vmul.f32 1.0, %v1564
    %v1566 = vtanh.pop %v1559
    %v1567 = vmul.f32 %v1565, %v1404
    %1569 = vrot.lane.b32.xlu0 %v1566, 64
    %v1570 = vpop.permute.xlu0 %1569
    %v1572 = vmul.f32 %v1565, %v1570
    %1574 = vrot.lane.b32.xlu0 %v1572, 32
    %v1575 = vpop.permute.xlu0 %1574
    %v1577 = vadd.f32 %v1567, %v1575
    %v1578 = vtanh.pop %v1577
    %1580 = vrot.lane.b32.xlu0 %v1578, 64
    %v1581 = vpop.permute.xlu0 %1580
    %v1583 = vmul.f32 %v1565, %v1581
    %1585 = vrot.lane.b32.xlu0 %v1583, 32
    %v1586 = vpop.permute.xlu0 %1585
    %v1587 = vsel %vm710, %v1586, 0
    %1589 = vmatprep.subr.mxu0 0.0
    %1590 = vmatpush1.msra.mxu0 0.0
    %1591 = vmatprep.subr.mxu0 0.0
    %1592 = vmatpush1.msra.mxu0 0.0
    %1593 = vmatprep.subr.mxu0 0.0
    %1594 = vmatpush1.msra.mxu0 0.0
    %1595 = vmatprep.subr.mxu0 0.0
    %1596 = vmatpush1.msra.mxu0 0.0
    %1597 = vmatprep.subr.mxu0 0.0
    %1598 = vmatpush1.msra.mxu0 0.0
    %1599 = vmatprep.subr.mxu0 0.0
    %1600 = vmatpush1.msra.mxu0 0.0
    %1601 = vmatprep.subr.mxu0 0.0
    %1602 = vmatpush1.msra.mxu0 0.0
    %1603 = vmatprep.subr.mxu0 0.0
    %1604 = vmatpush1.msra.mxu0 0.0
    %1605 = vmatprep.subr.mxu0 0.0
    %1606 = vmatpush1.msra.mxu0 0.0
    %1607 = vmatprep.subr.mxu0 0.0
    %1608 = vmatpush1.msra.mxu0 0.0
    %1609 = vmatprep.subr.mxu0 0.0
    %1610 = vmatpush1.msra.mxu0 0.0
    %1611 = vmatprep.subr.mxu0 0.0
    %1612 = vmatpush1.msra.mxu0 0.0
    %1613 = vmatprep.subr.mxu0 0.0
    %1614 = vmatpush1.msra.mxu0 %v709
    %1615 = vmatprep.subr.mxu0 0.0
    %1616 = vmatpush1.msra.mxu0 %v708
    %1617 = vmatprep.subr.mxu0 0.0
    %1618 = vmatpush1.msra.mxu0 %v707
    %1619 = vmatprep.subr.mxu0 0.0
    %1620 = vmatpush1.msra.mxu0 %v706
    %1621 = vmatprep.subr.mxu0 0.0
    %1622 = vmatpush2.msra.mxu0 0.0
    %1623 = vmatprep.subr.mxu0 0.0
    %1624 = vmatpush2.msra.mxu0 0.0
    %1625 = vmatprep.subr.mxu0 0.0
    %1626 = vmatpush2.msra.mxu0 0.0
    %1627 = vmatprep.subr.mxu0 0.0
    %1628 = vmatpush2.msra.mxu0 0.0
    %1629 = vmatprep.subr.mxu0 0.0
    %1630 = vmatpush2.msra.mxu0 0.0
    %1631 = vmatprep.subr.mxu0 0.0
    %1632 = vmatpush2.msra.mxu0 0.0
    %1633 = vmatprep.subr.mxu0 0.0
    %1634 = vmatpush2.msra.mxu0 0.0
    %1635 = vmatprep.subr.mxu0 0.0
    %1636 = vmatpush2.msra.mxu0 0.0
    %1637 = vmatprep.subr.mxu0 0.0
    %1638 = vmatpush2.msra.mxu0 0.0
    %1639 = vmatprep.subr.mxu0 0.0
    %1640 = vmatpush2.msra.mxu0 0.0
    %1641 = vmatprep.subr.mxu0 0.0
    %1642 = vmatpush2.msra.mxu0 0.0
    %1643 = vmatprep.subr.mxu0 0.0
    %1644 = vmatpush2.msra.mxu0 0.0
    %1645 = vmatprep.subr.mxu0 0.0
    %1646 = vmatpush2.msra.mxu0 0.0
    %1647 = vmatprep.subr.mxu0 0.0
    %1648 = vmatpush2.msra.mxu0 0.0
    %1649 = vmatprep.subr.mxu0 0.0
    %1650 = vmatpush2.msra.mxu0 0.0
    %1651 = vmatprep.subr.mxu0 0.0
    %1652 = vmatpush2.msra.mxu0 0.0
    %1653 = vmatprep.mubr.f32.mxu0 0.0
    %1654 = vmatmul.mubr.f32.gmra.mxu0 %v1587
    %v1655 = vpop.f32.mrf.mxu0
    %v1656 = vadd.f32 0.0, %v1655
    %v1657 = vpop.f32.mrf.mxu0
    %1658 = vdwg.mxu0
    %v1659 = vrot.slane %v702, 2
    %v1660 = vsel %vm784, %v1659, 0
    %1662 = vmatprep.subr.mxu0 0.0
    %1663 = vmatpush1.msra.mxu0 0.0
    %1664 = vmatprep.subr.mxu0 0.0
    %1665 = vmatpush1.msra.mxu0 0.0
    %1666 = vmatprep.subr.mxu0 0.0
    %1667 = vmatpush1.msra.mxu0 0.0
    %1668 = vmatprep.subr.mxu0 0.0
    %1669 = vmatpush1.msra.mxu0 0.0
    %1670 = vmatprep.subr.mxu0 0.0
    %1671 = vmatpush1.msra.mxu0 0.0
    %1672 = vmatprep.subr.mxu0 0.0
    %1673 = vmatpush1.msra.mxu0 0.0
    %1674 = vmatprep.subr.mxu0 0.0
    %1675 = vmatpush1.msra.mxu0 0.0
    %1676 = vmatprep.subr.mxu0 0.0
    %1677 = vmatpush1.msra.mxu0 0.0
    %1678 = vmatprep.subr.mxu0 0.0
    %1679 = vmatpush1.msra.mxu0 0.0
    %1680 = vmatprep.subr.mxu0 0.0
    %1681 = vmatpush1.msra.mxu0 0.0
    %1682 = vmatprep.subr.mxu0 0.0
    %1683 = vmatpush1.msra.mxu0 0.0
    %1684 = vmatprep.subr.mxu0 0.0
    %1685 = vmatpush1.msra.mxu0 0.0
    %1686 = vmatprep.subr.mxu0 0.0
    %1687 = vmatpush1.msra.mxu0 0.0
    %1688 = vmatprep.subr.mxu0 0.0
    %1689 = vmatpush1.msra.mxu0 0.0
    %1690 = vmatprep.subr.mxu0 0.0
    %1691 = vmatpush1.msra.mxu0 %v705
    %1692 = vmatprep.subr.mxu0 0.0
    %1693 = vmatpush1.msra.mxu0 %v704
    %1694 = vmatprep.subr.mxu0 0.0
    %1695 = vmatpush2.msra.mxu0 0.0
    %1696 = vmatprep.subr.mxu0 0.0
    %1697 = vmatpush2.msra.mxu0 0.0
    %1698 = vmatprep.subr.mxu0 0.0
    %1699 = vmatpush2.msra.mxu0 0.0
    %1700 = vmatprep.subr.mxu0 0.0
    %1701 = vmatpush2.msra.mxu0 0.0
    %1702 = vmatprep.subr.mxu0 0.0
    %1703 = vmatpush2.msra.mxu0 0.0
    %1704 = vmatprep.subr.mxu0 0.0
    %1705 = vmatpush2.msra.mxu0 0.0
    %1706 = vmatprep.subr.mxu0 0.0
    %1707 = vmatpush2.msra.mxu0 0.0
    %1708 = vmatprep.subr.mxu0 0.0
    %1709 = vmatpush2.msra.mxu0 0.0
    %1710 = vmatprep.subr.mxu0 0.0
    %1711 = vmatpush2.msra.mxu0 0.0
    %1712 = vmatprep.subr.mxu0 0.0
    %1713 = vmatpush2.msra.mxu0 0.0
    %1714 = vmatprep.subr.mxu0 0.0
    %1715 = vmatpush2.msra.mxu0 0.0
    %1716 = vmatprep.subr.mxu0 0.0
    %1717 = vmatpush2.msra.mxu0 0.0
    %1718 = vmatprep.subr.mxu0 0.0
    %1719 = vmatpush2.msra.mxu0 0.0
    %1720 = vmatprep.subr.mxu0 0.0
    %1721 = vmatpush2.msra.mxu0 0.0
    %1722 = vmatprep.subr.mxu0 0.0
    %1723 = vmatpush2.msra.mxu0 0.0
    %1724 = vmatprep.subr.mxu0 0.0
    %1725 = vmatpush2.msra.mxu0 0.0
    %1726 = vmatprep.mubr.f32.mxu0 0.0
    %1727 = vmatmul.mubr.f32.gmra.mxu0 %v1660
    %v1728 = vpop.f32.mrf.mxu0
    %v1729 = vadd.f32 %v1656, %v1728
    %v1730 = vpop.f32.mrf.mxu0
    %1731 = vdwg.mxu0
    %v1732 = vadd.f32 %v1729, %v862
    %v1733 = vxor.u32 %v1732, 2147483648
    %v1734 = vmul.f32 %v1733, 1.442695
    %v1735 = vpow.pop %v1734
    %v1736 = vadd.f32 %v1735, 1.0
    %v1737 = vrcp.pop %v1736
    %v1738 = vmul.f32 1.0, %v1737
    %v1739 = vtanh.pop %v1732
    %v1740 = vmul.f32 %v1738, %v1577
    %1742 = vrot.lane.b32.xlu0 %v1739, 64
    %v1743 = vpop.permute.xlu0 %1742
    %v1745 = vmul.f32 %v1738, %v1743
    %1747 = vrot.lane.b32.xlu0 %v1745, 32
    %v1748 = vpop.permute.xlu0 %1747
    %v1750 = vadd.f32 %v1740, %v1748
    %v1751 = vtanh.pop %v1750
    %1753 = vrot.lane.b32.xlu0 %v1751, 64
    %v1754 = vpop.permute.xlu0 %1753
    %v1756 = vmul.f32 %v1738, %v1754
    %1758 = vrot.lane.b32.xlu0 %v1756, 32
    %v1759 = vpop.permute.xlu0 %1758
    %v1760 = vsel %vm710, %v1759, 0
    %1762 = vmatprep.subr.mxu0 0.0
    %1763 = vmatpush1.msra.mxu0 0.0
    %1764 = vmatprep.subr.mxu0 0.0
    %1765 = vmatpush1.msra.mxu0 0.0
    %1766 = vmatprep.subr.mxu0 0.0
    %1767 = vmatpush1.msra.mxu0 0.0
    %1768 = vmatprep.subr.mxu0 0.0
    %1769 = vmatpush1.msra.mxu0 0.0
    %1770 = vmatprep.subr.mxu0 0.0
    %1771 = vmatpush1.msra.mxu0 0.0
    %1772 = vmatprep.subr.mxu0 0.0
    %1773 = vmatpush1.msra.mxu0 0.0
    %1774 = vmatprep.subr.mxu0 0.0
    %1775 = vmatpush1.msra.mxu0 0.0
    %1776 = vmatprep.subr.mxu0 0.0
    %1777 = vmatpush1.msra.mxu0 0.0
    %1778 = vmatprep.subr.mxu0 0.0
    %1779 = vmatpush1.msra.mxu0 0.0
    %1780 = vmatprep.subr.mxu0 0.0
    %1781 = vmatpush1.msra.mxu0 0.0
    %1782 = vmatprep.subr.mxu0 0.0
    %1783 = vmatpush1.msra.mxu0 0.0
    %1784 = vmatprep.subr.mxu0 0.0
    %1785 = vmatpush1.msra.mxu0 0.0
    %1786 = vmatprep.subr.mxu0 0.0
    %1787 = vmatpush1.msra.mxu0 %v709
    %1788 = vmatprep.subr.mxu0 0.0
    %1789 = vmatpush1.msra.mxu0 %v708
    %1790 = vmatprep.subr.mxu0 0.0
    %1791 = vmatpush1.msra.mxu0 %v707
    %1792 = vmatprep.subr.mxu0 0.0
    %1793 = vmatpush1.msra.mxu0 %v706
    %1794 = vmatprep.subr.mxu0 0.0
    %1795 = vmatpush2.msra.mxu0 0.0
    %1796 = vmatprep.subr.mxu0 0.0
    %1797 = vmatpush2.msra.mxu0 0.0
    %1798 = vmatprep.subr.mxu0 0.0
    %1799 = vmatpush2.msra.mxu0 0.0
    %1800 = vmatprep.subr.mxu0 0.0
    %1801 = vmatpush2.msra.mxu0 0.0
    %1802 = vmatprep.subr.mxu0 0.0
    %1803 = vmatpush2.msra.mxu0 0.0
    %1804 = vmatprep.subr.mxu0 0.0
    %1805 = vmatpush2.msra.mxu0 0.0
    %1806 = vmatprep.subr.mxu0 0.0
    %1807 = vmatpush2.msra.mxu0 0.0
    %1808 = vmatprep.subr.mxu0 0.0
    %1809 = vmatpush2.msra.mxu0 0.0
    %1810 = vmatprep.subr.mxu0 0.0
    %1811 = vmatpush2.msra.mxu0 0.0
    %1812 = vmatprep.subr.mxu0 0.0
    %1813 = vmatpush2.msra.mxu0 0.0
    %1814 = vmatprep.subr.mxu0 0.0
    %1815 = vmatpush2.msra.mxu0 0.0
    %1816 = vmatprep.subr.mxu0 0.0
    %1817 = vmatpush2.msra.mxu0 0.0
    %1818 = vmatprep.subr.mxu0 0.0
    %1819 = vmatpush2.msra.mxu0 0.0
    %1820 = vmatprep.subr.mxu0 0.0
    %1821 = vmatpush2.msra.mxu0 0.0
    %1822 = vmatprep.subr.mxu0 0.0
    %1823 = vmatpush2.msra.mxu0 0.0
    %1824 = vmatprep.subr.mxu0 0.0
    %1825 = vmatpush2.msra.mxu0 0.0
    %1826 = vmatprep.mubr.f32.mxu0 0.0
    %1827 = vmatmul.mubr.f32.gmra.mxu0 %v1760
    %v1828 = vpop.f32.mrf.mxu0
    %v1829 = vadd.f32 0.0, %v1828
    %v1830 = vpop.f32.mrf.mxu0
    %1831 = vdwg.mxu0
    %v1832 = vrot.slane %v702, 4
    %v1833 = vsel %vm784, %v1832, 0
    %1835 = vmatprep.subr.mxu0 0.0
    %1836 = vmatpush1.msra.mxu0 0.0
    %1837 = vmatprep.subr.mxu0 0.0
    %1838 = vmatpush1.msra.mxu0 0.0
    %1839 = vmatprep.subr.mxu0 0.0
    %1840 = vmatpush1.msra.mxu0 0.0
    %1841 = vmatprep.subr.mxu0 0.0
    %1842 = vmatpush1.msra.mxu0 0.0
    %1843 = vmatprep.subr.mxu0 0.0
    %1844 = vmatpush1.msra.mxu0 0.0
    %1845 = vmatprep.subr.mxu0 0.0
    %1846 = vmatpush1.msra.mxu0 0.0
    %1847 = vmatprep.subr.mxu0 0.0
    %1848 = vmatpush1.msra.mxu0 0.0
    %1849 = vmatprep.subr.mxu0 0.0
    %1850 = vmatpush1.msra.mxu0 0.0
    %1851 = vmatprep.subr.mxu0 0.0
    %1852 = vmatpush1.msra.mxu0 0.0
    %1853 = vmatprep.subr.mxu0 0.0
    %1854 = vmatpush1.msra.mxu0 0.0
    %1855 = vmatprep.subr.mxu0 0.0
    %1856 = vmatpush1.msra.mxu0 0.0
    %1857 = vmatprep.subr.mxu0 0.0
    %1858 = vmatpush1.msra.mxu0 0.0
    %1859 = vmatprep.subr.mxu0 0.0
    %1860 = vmatpush1.msra.mxu0 0.0
    %1861 = vmatprep.subr.mxu0 0.0
    %1862 = vmatpush1.msra.mxu0 0.0
    %1863 = vmatprep.subr.mxu0 0.0
    %1864 = vmatpush1.msra.mxu0 %v705
    %1865 = vmatprep.subr.mxu0 0.0
    %1866 = vmatpush1.msra.mxu0 %v704
    %1867 = vmatprep.subr.mxu0 0.0
    %1868 = vmatpush2.msra.mxu0 0.0
    %1869 = vmatprep.subr.mxu0 0.0
    %1870 = vmatpush2.msra.mxu0 0.0
    %1871 = vmatprep.subr.mxu0 0.0
    %1872 = vmatpush2.msra.mxu0 0.0
    %1873 = vmatprep.subr.mxu0 0.0
    %1874 = vmatpush2.msra.mxu0 0.0
    %1875 = vmatprep.subr.mxu0 0.0
    %1876 = vmatpush2.msra.mxu0 0.0
    %1877 = vmatprep.subr.mxu0 0.0
    %1878 = vmatpush2.msra.mxu0 0.0
    %1879 = vmatprep.subr.mxu0 0.0
    %1880 = vmatpush2.msra.mxu0 0.0
    %1881 = vmatprep.subr.mxu0 0.0
    %1882 = vmatpush2.msra.mxu0 0.0
    %1883 = vmatprep.subr.mxu0 0.0
    %1884 = vmatpush2.msra.mxu0 0.0
    %1885 = vmatprep.subr.mxu0 0.0
    %1886 = vmatpush2.msra.mxu0 0.0
    %1887 = vmatprep.subr.mxu0 0.0
    %1888 = vmatpush2.msra.mxu0 0.0
    %1889 = vmatprep.subr.mxu0 0.0
    %1890 = vmatpush2.msra.mxu0 0.0
    %1891 = vmatprep.subr.mxu0 0.0
    %1892 = vmatpush2.msra.mxu0 0.0
    %1893 = vmatprep.subr.mxu0 0.0
    %1894 = vmatpush2.msra.mxu0 0.0
    %1895 = vmatprep.subr.mxu0 0.0
    %1896 = vmatpush2.msra.mxu0 0.0
    %1897 = vmatprep.subr.mxu0 0.0
    %1898 = vmatpush2.msra.mxu0 0.0
    %1899 = vmatprep.mubr.f32.mxu0 0.0
    %1900 = vmatmul.mubr.f32.gmra.mxu0 %v1833
    %v1901 = vpop.f32.mrf.mxu0
    %v1902 = vadd.f32 %v1829, %v1901
    %v1903 = vpop.f32.mrf.mxu0
    %1904 = vdwg.mxu0
    %v1905 = vadd.f32 %v1902, %v862
    %v1906 = vxor.u32 %v1905, 2147483648
    %v1907 = vmul.f32 %v1906, 1.442695
    %v1908 = vpow.pop %v1907
    %v1909 = vadd.f32 %v1908, 1.0
    %v1910 = vrcp.pop %v1909
    %v1911 = vmul.f32 1.0, %v1910
    %v1912 = vtanh.pop %v1905
    %v1913 = vmul.f32 %v1911, %v1750
    %1915 = vrot.lane.b32.xlu0 %v1912, 64
    %v1916 = vpop.permute.xlu0 %1915
    %v1918 = vmul.f32 %v1911, %v1916
    %1920 = vrot.lane.b32.xlu0 %v1918, 32
    %v1921 = vpop.permute.xlu0 %1920
    %v1923 = vadd.f32 %v1913, %v1921
    %v1924 = vtanh.pop %v1923
    %1926 = vrot.lane.b32.xlu0 %v1924, 64
    %v1927 = vpop.permute.xlu0 %1926
    %v1929 = vmul.f32 %v1911, %v1927
    %1931 = vrot.lane.b32.xlu0 %v1929, 32
    %v1932 = vpop.permute.xlu0 %1931
    %v1933 = vsel %vm710, %v1932, 0
    %1935 = vmatprep.subr.mxu0 0.0
    %1936 = vmatpush1.msra.mxu0 0.0
    %1937 = vmatprep.subr.mxu0 0.0
    %1938 = vmatpush1.msra.mxu0 0.0
    %1939 = vmatprep.subr.mxu0 0.0
    %1940 = vmatpush1.msra.mxu0 0.0
    %1941 = vmatprep.subr.mxu0 0.0
    %1942 = vmatpush1.msra.mxu0 0.0
    %1943 = vmatprep.subr.mxu0 0.0
    %1944 = vmatpush1.msra.mxu0 0.0
    %1945 = vmatprep.subr.mxu0 0.0
    %1946 = vmatpush1.msra.mxu0 0.0
    %1947 = vmatprep.subr.mxu0 0.0
    %1948 = vmatpush1.msra.mxu0 0.0
    %1949 = vmatprep.subr.mxu0 0.0
    %1950 = vmatpush1.msra.mxu0 0.0
    %1951 = vmatprep.subr.mxu0 0.0
    %1952 = vmatpush1.msra.mxu0 0.0
    %1953 = vmatprep.subr.mxu0 0.0
    %1954 = vmatpush1.msra.mxu0 0.0
    %1955 = vmatprep.subr.mxu0 0.0
    %1956 = vmatpush1.msra.mxu0 0.0
    %1957 = vmatprep.subr.mxu0 0.0
    %1958 = vmatpush1.msra.mxu0 0.0
    %1959 = vmatprep.subr.mxu0 0.0
    %1960 = vmatpush1.msra.mxu0 %v709
    %1961 = vmatprep.subr.mxu0 0.0
    %1962 = vmatpush1.msra.mxu0 %v708
    %1963 = vmatprep.subr.mxu0 0.0
    %1964 = vmatpush1.msra.mxu0 %v707
    %1965 = vmatprep.subr.mxu0 0.0
    %1966 = vmatpush1.msra.mxu0 %v706
    %1967 = vmatprep.subr.mxu0 0.0
    %1968 = vmatpush2.msra.mxu0 0.0
    %1969 = vmatprep.subr.mxu0 0.0
    %1970 = vmatpush2.msra.mxu0 0.0
    %1971 = vmatprep.subr.mxu0 0.0
    %1972 = vmatpush2.msra.mxu0 0.0
    %1973 = vmatprep.subr.mxu0 0.0
    %1974 = vmatpush2.msra.mxu0 0.0
    %1975 = vmatprep.subr.mxu0 0.0
    %1976 = vmatpush2.msra.mxu0 0.0
    %1977 = vmatprep.subr.mxu0 0.0
    %1978 = vmatpush2.msra.mxu0 0.0
    %1979 = vmatprep.subr.mxu0 0.0
    %1980 = vmatpush2.msra.mxu0 0.0
    %1981 = vmatprep.subr.mxu0 0.0
    %1982 = vmatpush2.msra.mxu0 0.0
    %1983 = vmatprep.subr.mxu0 0.0
    %1984 = vmatpush2.msra.mxu0 0.0
    %1985 = vmatprep.subr.mxu0 0.0
    %1986 = vmatpush2.msra.mxu0 0.0
    %1987 = vmatprep.subr.mxu0 0.0
    %1988 = vmatpush2.msra.mxu0 0.0
    %1989 = vmatprep.subr.mxu0 0.0
    %1990 = vmatpush2.msra.mxu0 0.0
    %1991 = vmatprep.subr.mxu0 0.0
    %1992 = vmatpush2.msra.mxu0 0.0
    %1993 = vmatprep.subr.mxu0 0.0
    %1994 = vmatpush2.msra.mxu0 0.0
    %1995 = vmatprep.subr.mxu0 0.0
    %1996 = vmatpush2.msra.mxu0 0.0
    %1997 = vmatprep.subr.mxu0 0.0
    %1998 = vmatpush2.msra.mxu0 0.0
    %1999 = vmatprep.mubr.f32.mxu0 0.0
    %2000 = vmatmul.mubr.f32.gmra.mxu0 %v1933
    %v2001 = vpop.f32.mrf.mxu0
    %v2002 = vadd.f32 0.0, %v2001
    %v2003 = vpop.f32.mrf.mxu0
    %2004 = vdwg.mxu0
    %v2005 = vrot.slane %v702, 6
    %v2006 = vsel %vm784, %v2005, 0
    %2008 = vmatprep.subr.mxu0 0.0
    %2009 = vmatpush1.msra.mxu0 0.0
    %2010 = vmatprep.subr.mxu0 0.0
    %2011 = vmatpush1.msra.mxu0 0.0
    %2012 = vmatprep.subr.mxu0 0.0
    %2013 = vmatpush1.msra.mxu0 0.0
    %2014 = vmatprep.subr.mxu0 0.0
    %2015 = vmatpush1.msra.mxu0 0.0
    %2016 = vmatprep.subr.mxu0 0.0
    %2017 = vmatpush1.msra.mxu0 0.0
    %2018 = vmatprep.subr.mxu0 0.0
    %2019 = vmatpush1.msra.mxu0 0.0
    %2020 = vmatprep.subr.mxu0 0.0
    %2021 = vmatpush1.msra.mxu0 0.0
    %2022 = vmatprep.subr.mxu0 0.0
    %2023 = vmatpush1.msra.mxu0 0.0
    %2024 = vmatprep.subr.mxu0 0.0
    %2025 = vmatpush1.msra.mxu0 0.0
    %2026 = vmatprep.subr.mxu0 0.0
    %2027 = vmatpush1.msra.mxu0 0.0
    %2028 = vmatprep.subr.mxu0 0.0
    %2029 = vmatpush1.msra.mxu0 0.0
    %2030 = vmatprep.subr.mxu0 0.0
    %2031 = vmatpush1.msra.mxu0 0.0
    %2032 = vmatprep.subr.mxu0 0.0
    %2033 = vmatpush1.msra.mxu0 0.0
    %2034 = vmatprep.subr.mxu0 0.0
    %2035 = vmatpush1.msra.mxu0 0.0
    %2036 = vmatprep.subr.mxu0 0.0
    %2037 = vmatpush1.msra.mxu0 %v705
    %2038 = vmatprep.subr.mxu0 0.0
    %2039 = vmatpush1.msra.mxu0 %v704
    %2040 = vmatprep.subr.mxu0 0.0
    %2041 = vmatpush2.msra.mxu0 0.0
    %2042 = vmatprep.subr.mxu0 0.0
    %2043 = vmatpush2.msra.mxu0 0.0
    %2044 = vmatprep.subr.mxu0 0.0
    %2045 = vmatpush2.msra.mxu0 0.0
    %2046 = vmatprep.subr.mxu0 0.0
    %2047 = vmatpush2.msra.mxu0 0.0
    %2048 = vmatprep.subr.mxu0 0.0
    %2049 = vmatpush2.msra.mxu0 0.0
    %2050 = vmatprep.subr.mxu0 0.0
    %2051 = vmatpush2.msra.mxu0 0.0
    %2052 = vmatprep.subr.mxu0 0.0
    %2053 = vmatpush2.msra.mxu0 0.0
    %2054 = vmatprep.subr.mxu0 0.0
    %2055 = vmatpush2.msra.mxu0 0.0
    %2056 = vmatprep.subr.mxu0 0.0
    %2057 = vmatpush2.msra.mxu0 0.0
    %2058 = vmatprep.subr.mxu0 0.0
    %2059 = vmatpush2.msra.mxu0 0.0
    %2060 = vmatprep.subr.mxu0 0.0
    %2061 = vmatpush2.msra.mxu0 0.0
    %2062 = vmatprep.subr.mxu0 0.0
    %2063 = vmatpush2.msra.mxu0 0.0
    %2064 = vmatprep.subr.mxu0 0.0
    %2065 = vmatpush2.msra.mxu0 0.0
    %2066 = vmatprep.subr.mxu0 0.0
    %2067 = vmatpush2.msra.mxu0 0.0
    %2068 = vmatprep.subr.mxu0 0.0
    %2069 = vmatpush2.msra.mxu0 0.0
    %2070 = vmatprep.subr.mxu0 0.0
    %2071 = vmatpush2.msra.mxu0 0.0
    %2072 = vmatprep.mubr.f32.mxu0 0.0
    %2073 = vmatmul.mubr.f32.gmra.mxu0 %v2006
    %v2074 = vpop.f32.mrf.mxu0
    %v2075 = vadd.f32 %v2002, %v2074
    %v2076 = vpop.f32.mrf.mxu0
    %2077 = vdwg.mxu0
    %v2078 = vadd.f32 %v2075, %v862
    %v2079 = vxor.u32 %v2078, 2147483648
    %v2080 = vmul.f32 %v2079, 1.442695
    %v2081 = vpow.pop %v2080
    %v2082 = vadd.f32 %v2081, 1.0
    %v2083 = vrcp.pop %v2082
    %v2084 = vmul.f32 1.0, %v2083
    %v2085 = vtanh.pop %v2078
    %v2086 = vmul.f32 %v2084, %v1923
    %2088 = vrot.lane.b32.xlu0 %v2085, 64
    %v2089 = vpop.permute.xlu0 %2088
    %v2091 = vmul.f32 %v2084, %v2089
    %2093 = vrot.lane.b32.xlu0 %v2091, 32
    %v2094 = vpop.permute.xlu0 %2093
    %v2096 = vadd.f32 %v2086, %v2094
    %v2097 = vtanh.pop %v2096
    %2099 = vrot.lane.b32.xlu0 %v2097, 64
    %v2100 = vpop.permute.xlu0 %2099
    %v2102 = vmul.f32 %v2084, %v2100
    %v2103 = vrot.slane %v1064, 7
    %v2105 = vrot.slane %v1237, 6
    %v2107 = vrot.slane %v1410, 5
    %v2109 = vrot.slane %v1583, 4
    %v2111 = vrot.slane %v1756, 3
    %v2113 = vrot.slane %v1929, 2
    %v2116 = vrot.slane %v2102, 1
    %v2118 = vrot.slane %v891, 1
    %v2120 = vrot.slane %v1237, 7
    %v2122 = vrot.slane %v1410, 6
    %v2124 = vrot.slane %v1583, 5
    %v2126 = vrot.slane %v1756, 4
    %v2128 = vrot.slane %v1929, 3
    %v2130 = vrot.slane %v2102, 2
    %v2132 = vsel %vm593, %v891, %v2103
    %v2133 = vsel %vm595, %v2132, %v2105
    %v2134 = vsel %vm597, %v2133, %v2107
    %v2135 = vsel %vm599, %v2134, %v2109
    %v2136 = vsel %vm601, %v2135, %v2111
    %v2137 = vsel %vm603, %v2136, %v2113
    %v2138 = vsel %vm605, %v2137, %v2116
    %v2139 = vsel %vm593, %v2118, %v1064
    %v2140 = vsel %vm595, %v2139, %v2120
    %v2141 = vsel %vm597, %v2140, %v2122
    %v2142 = vsel %vm599, %v2141, %v2124
    %v2143 = vsel %vm601, %v2142, %v2126
    %v2144 = vsel %vm603, %v2143, %v2128
    %v2145 = vsel %vm605, %v2144, %v2130
    %v2146 = vtanh.pop %v2138
    %v2147 = vtanh.pop %v2145
    %v2148 = vld [vmem:[%s11] sm:$0xff]
    %v2149 = vld [vmem:[%s11 + $0x8] sm:$0xff]
    %v2150 = vld [vmem:[%s11 + $0x10] sm:$0xff]
    %v2151 = vld [vmem:[%s11 + $0x18] sm:$0xff]
    %v2152 = vld [vmem:[%s12] sm:$0x1]
    %v2154 = vlaneseq
    %v2155 = vshrl.u32 %v2154, 7
    %v2156 = vsub.s32 0, %v2155
    %v2157 = vrot.slane %v2152, %v2156
    %2161 = vrot.lane.b32.xlu0 %v2146, 32
    %v2162 = vpop.permute.xlu0 %2161
    %2163 = vrot.lane.b32.xlu0 %v2147, 32
    %v2164 = vpop.permute.xlu0 %2163
    %v2165 = vsel %vm710, %v2162, 0
    %v2167 = vsel %vm710, %v2164, 0
    %2169 = vmatprep.subr.mxu0 0.0
    %2170 = vmatpush1.msra.mxu0 0.0
    %2171 = vmatprep.subr.mxu0 0.0
    %2172 = vmatpush1.msra.mxu0 0.0
    %2173 = vmatprep.subr.mxu0 0.0
    %2174 = vmatpush1.msra.mxu0 0.0
    %2175 = vmatprep.subr.mxu0 0.0
    %2176 = vmatpush1.msra.mxu0 0.0
    %2177 = vmatprep.subr.mxu0 0.0
    %2178 = vmatpush1.msra.mxu0 0.0
    %2179 = vmatprep.subr.mxu0 0.0
    %2180 = vmatpush1.msra.mxu0 0.0
    %2181 = vmatprep.subr.mxu0 0.0
    %2182 = vmatpush1.msra.mxu0 0.0
    %2183 = vmatprep.subr.mxu0 0.0
    %2184 = vmatpush1.msra.mxu0 0.0
    %2185 = vmatprep.subr.mxu0 0.0
    %2186 = vmatpush1.msra.mxu0 0.0
    %2187 = vmatprep.subr.mxu0 0.0
    %2188 = vmatpush1.msra.mxu0 0.0
    %2189 = vmatprep.subr.mxu0 0.0
    %2190 = vmatpush1.msra.mxu0 0.0
    %2191 = vmatprep.subr.mxu0 0.0
    %2192 = vmatpush1.msra.mxu0 0.0
    %2193 = vmatprep.subr.mxu0 0.0
    %2194 = vmatpush1.msra.mxu0 %v2151
    %2195 = vmatprep.subr.mxu0 0.0
    %2196 = vmatpush1.msra.mxu0 %v2150
    %2197 = vmatprep.subr.mxu0 0.0
    %2198 = vmatpush1.msra.mxu0 %v2149
    %2199 = vmatprep.subr.mxu0 0.0
    %2200 = vmatpush1.msra.mxu0 %v2148
    %2201 = vmatprep.subr.mxu0 0.0
    %2202 = vmatpush2.msra.mxu0 0.0
    %2203 = vmatprep.subr.mxu0 0.0
    %2204 = vmatpush2.msra.mxu0 0.0
    %2205 = vmatprep.subr.mxu0 0.0
    %2206 = vmatpush2.msra.mxu0 0.0
    %2207 = vmatprep.subr.mxu0 0.0
    %2208 = vmatpush2.msra.mxu0 0.0
    %2209 = vmatprep.subr.mxu0 0.0
    %2210 = vmatpush2.msra.mxu0 0.0
    %2211 = vmatprep.subr.mxu0 0.0
    %2212 = vmatpush2.msra.mxu0 0.0
    %2213 = vmatprep.subr.mxu0 0.0
    %2214 = vmatpush2.msra.mxu0 0.0
    %2215 = vmatprep.subr.mxu0 0.0
    %2216 = vmatpush2.msra.mxu0 0.0
    %2217 = vmatprep.subr.mxu0 0.0
    %2218 = vmatpush2.msra.mxu0 0.0
    %2219 = vmatprep.subr.mxu0 0.0
    %2220 = vmatpush2.msra.mxu0 0.0
    %2221 = vmatprep.subr.mxu0 0.0
    %2222 = vmatpush2.msra.mxu0 0.0
    %2223 = vmatprep.subr.mxu0 0.0
    %2224 = vmatpush2.msra.mxu0 0.0
    %2225 = vmatprep.subr.mxu0 0.0
    %2226 = vmatpush2.msra.mxu0 0.0
    %2227 = vmatprep.subr.mxu0 0.0
    %2228 = vmatpush2.msra.mxu0 0.0
    %2229 = vmatprep.subr.mxu0 0.0
    %2230 = vmatpush2.msra.mxu0 0.0
    %2231 = vmatprep.subr.mxu0 0.0
    %2232 = vmatpush2.msra.mxu0 0.0
    %2233 = vmatprep.mubr.f32.mxu0 0.0
    %2234 = vmatmul.mubr.f32.gmra.mxu0 %v2165
    %v2235 = vpop.f32.mrf.mxu0
    %v2236 = vadd.f32 %v2157, %v2235
    %v2237 = vpop.f32.mrf.mxu0
    %2238 = vmatprep.mubr.f32.mxu0 0.0
    %2239 = vmatmul.mubr.f32.gmra.mxu0 %v2167
    %v2240 = vpop.f32.mrf.mxu0
    %v2241 = vadd.f32 %v2157, %v2240
    %v2242 = vpop.f32.mrf.mxu0
    %2243 = vdwg.mxu0
    %2244 = vst [vmem:[#allocation6] sm:$0xff] %v2236
    %2245 = vst [vmem:[#allocation6 + $0x8] sm:$0xff] %v2241
    %2246 = vrot.lane.b32.xlu0 %v2102, 32
    %v2247 = vpop.permute.xlu0 %2246
    %v2249 = vsel %vm710, %v2247, %v2096
    %v2250 = vtanh.pop %v2249
    %v2251 = vld [vmem:[%s9] sm:$0xff]
    %v2252 = vld [vmem:[%s9 + $0x8] sm:$0xff]
    %v2253 = vld [vmem:[%s9 + $0x10] sm:$0xff]
    %v2254 = vld [vmem:[%s9 + $0x18] sm:$0xff]
    %v2255 = vld [vmem:[%s9 + $0x20] sm:$0xff]
    %v2256 = vld [vmem:[%s9 + $0x28] sm:$0xff]
    %v2257 = vld [vmem:[%s9 + $0x30] sm:$0xff]
    %v2258 = vld [vmem:[%s9 + $0x38] sm:$0xff]
    %v2259 = vld [vmem:[%s10] sm:$0x1]
    %v2261 = vlaneseq
    %v2262 = vshrl.u32 %v2261, 7
    %v2263 = vsub.s32 0, %v2262
    %v2264 = vrot.slane %v2259, %v2263
    %v2267 = vsel %vm429, %v2250, 0
    %2269 = vmatprep.subr.mxu0 0.0
    %2270 = vmatpush1.msra.mxu0 0.0
    %2271 = vmatprep.subr.mxu0 0.0
    %2272 = vmatpush1.msra.mxu0 0.0
    %2273 = vmatprep.subr.mxu0 0.0
    %2274 = vmatpush1.msra.mxu0 0.0
    %2275 = vmatprep.subr.mxu0 0.0
    %2276 = vmatpush1.msra.mxu0 0.0
    %2277 = vmatprep.subr.mxu0 0.0
    %2278 = vmatpush1.msra.mxu0 0.0
    %2279 = vmatprep.subr.mxu0 0.0
    %2280 = vmatpush1.msra.mxu0 0.0
    %2281 = vmatprep.subr.mxu0 0.0
    %2282 = vmatpush1.msra.mxu0 0.0
    %2283 = vmatprep.subr.mxu0 0.0
    %2284 = vmatpush1.msra.mxu0 0.0
    %2285 = vmatprep.subr.mxu0 0.0
    %2286 = vmatpush1.msra.mxu0 %v2258
    %2287 = vmatprep.subr.mxu0 0.0
    %2288 = vmatpush1.msra.mxu0 %v2257
    %2289 = vmatprep.subr.mxu0 0.0
    %2290 = vmatpush1.msra.mxu0 %v2256
    %2291 = vmatprep.subr.mxu0 0.0
    %2292 = vmatpush1.msra.mxu0 %v2255
    %2293 = vmatprep.subr.mxu0 0.0
    %2294 = vmatpush1.msra.mxu0 %v2254
    %2295 = vmatprep.subr.mxu0 0.0
    %2296 = vmatpush1.msra.mxu0 %v2253
    %2297 = vmatprep.subr.mxu0 0.0
    %2298 = vmatpush1.msra.mxu0 %v2252
    %2299 = vmatprep.subr.mxu0 0.0
    %2300 = vmatpush1.msra.mxu0 %v2251
    %2301 = vmatprep.subr.mxu0 0.0
    %2302 = vmatpush2.msra.mxu0 0.0
    %2303 = vmatprep.subr.mxu0 0.0
    %2304 = vmatpush2.msra.mxu0 0.0
    %2305 = vmatprep.subr.mxu0 0.0
    %2306 = vmatpush2.msra.mxu0 0.0
    %2307 = vmatprep.subr.mxu0 0.0
    %2308 = vmatpush2.msra.mxu0 0.0
    %2309 = vmatprep.subr.mxu0 0.0
    %2310 = vmatpush2.msra.mxu0 0.0
    %2311 = vmatprep.subr.mxu0 0.0
    %2312 = vmatpush2.msra.mxu0 0.0
    %2313 = vmatprep.subr.mxu0 0.0
    %2314 = vmatpush2.msra.mxu0 0.0
    %2315 = vmatprep.subr.mxu0 0.0
    %2316 = vmatpush2.msra.mxu0 0.0
    %2317 = vmatprep.subr.mxu0 0.0
    %2318 = vmatpush2.msra.mxu0 0.0
    %2319 = vmatprep.subr.mxu0 0.0
    %2320 = vmatpush2.msra.mxu0 0.0
    %2321 = vmatprep.subr.mxu0 0.0
    %2322 = vmatpush2.msra.mxu0 0.0
    %2323 = vmatprep.subr.mxu0 0.0
    %2324 = vmatpush2.msra.mxu0 0.0
    %2325 = vmatprep.subr.mxu0 0.0
    %2326 = vmatpush2.msra.mxu0 0.0
    %2327 = vmatprep.subr.mxu0 0.0
    %2328 = vmatpush2.msra.mxu0 0.0
    %2329 = vmatprep.subr.mxu0 0.0
    %2330 = vmatpush2.msra.mxu0 0.0
    %2331 = vmatprep.subr.mxu0 0.0
    %2332 = vmatpush2.msra.mxu0 0.0
    %2333 = vmatprep.mubr.f32.mxu0 0.0
    %2334 = vmatmul.mubr.f32.gmra.mxu0 %v2267
    %v2335 = vpop.f32.mrf.mxu0
    %v2336 = vadd.f32 %v2264, %v2335
    %v2337 = vpop.f32.mrf.mxu0
    %2338 = vdwg.mxu0
    %v2339 = vmul.f32 %v510, %v2336
    %v2340 = vtanh.pop %v2339
    %v2341 = vld [vmem:[%s13] sm:$0xff]
    %v2342 = vld [vmem:[%s13 + $0x8] sm:$0xff]
    %v2343 = vld [vmem:[%s13 + $0x10] sm:$0xff]
    %v2344 = vld [vmem:[%s13 + $0x18] sm:$0xff]
    %v2345 = vld [vmem:[%s14] sm:$0x1]
    %v2347 = vlaneseq
    %v2348 = vshrl.u32 %v2347, 7
    %v2349 = vsub.s32 0, %v2348
    %v2350 = vrot.slane %v2345, %v2349
    %v2353 = vsel %vm710, %v2340, 0
    %2355 = vmatprep.subr.mxu0 0.0
    %2356 = vmatpush1.msra.mxu0 0.0
    %2357 = vmatprep.subr.mxu0 0.0
    %2358 = vmatpush1.msra.mxu0 0.0
    %2359 = vmatprep.subr.mxu0 0.0
    %2360 = vmatpush1.msra.mxu0 0.0
    %2361 = vmatprep.subr.mxu0 0.0
    %2362 = vmatpush1.msra.mxu0 0.0
    %2363 = vmatprep.subr.mxu0 0.0
    %2364 = vmatpush1.msra.mxu0 0.0
    %2365 = vmatprep.subr.mxu0 0.0
    %2366 = vmatpush1.msra.mxu0 0.0
    %2367 = vmatprep.subr.mxu0 0.0
    %2368 = vmatpush1.msra.mxu0 0.0
    %2369 = vmatprep.subr.mxu0 0.0
    %2370 = vmatpush1.msra.mxu0 0.0
    %2371 = vmatprep.subr.mxu0 0.0
    %2372 = vmatpush1.msra.mxu0 0.0
    %2373 = vmatprep.subr.mxu0 0.0
    %2374 = vmatpush1.msra.mxu0 0.0
    %2375 = vmatprep.subr.mxu0 0.0
    %2376 = vmatpush1.msra.mxu0 0.0
    %2377 = vmatprep.subr.mxu0 0.0
    %2378 = vmatpush1.msra.mxu0 0.0
    %2379 = vmatprep.subr.mxu0 0.0
    %2380 = vmatpush1.msra.mxu0 %v2344
    %2381 = vmatprep.subr.mxu0 0.0
    %2382 = vmatpush1.msra.mxu0 %v2343
    %2383 = vmatprep.subr.mxu0 0.0
    %2384 = vmatpush1.msra.mxu0 %v2342
    %2385 = vmatprep.subr.mxu0 0.0
    %2386 = vmatpush1.msra.mxu0 %v2341
    %2387 = vmatprep.subr.mxu0 0.0
    %2388 = vmatpush2.msra.mxu0 0.0
    %2389 = vmatprep.subr.mxu0 0.0
    %2390 = vmatpush2.msra.mxu0 0.0
    %2391 = vmatprep.subr.mxu0 0.0
    %2392 = vmatpush2.msra.mxu0 0.0
    %2393 = vmatprep.subr.mxu0 0.0
    %2394 = vmatpush2.msra.mxu0 0.0
    %2395 = vmatprep.subr.mxu0 0.0
    %2396 = vmatpush2.msra.mxu0 0.0
    %2397 = vmatprep.subr.mxu0 0.0
    %2398 = vmatpush2.msra.mxu0 0.0
    %2399 = vmatprep.subr.mxu0 0.0
    %2400 = vmatpush2.msra.mxu0 0.0
    %2401 = vmatprep.subr.mxu0 0.0
    %2402 = vmatpush2.msra.mxu0 0.0
    %2403 = vmatprep.subr.mxu0 0.0
    %2404 = vmatpush2.msra.mxu0 0.0
    %2405 = vmatprep.subr.mxu0 0.0
    %2406 = vmatpush2.msra.mxu0 0.0
    %2407 = vmatprep.subr.mxu0 0.0
    %2408 = vmatpush2.msra.mxu0 0.0
    %2409 = vmatprep.subr.mxu0 0.0
    %2410 = vmatpush2.msra.mxu0 0.0
    %2411 = vmatprep.subr.mxu0 0.0
    %2412 = vmatpush2.msra.mxu0 0.0
    %2413 = vmatprep.subr.mxu0 0.0
    %2414 = vmatpush2.msra.mxu0 0.0
    %2415 = vmatprep.subr.mxu0 0.0
    %2416 = vmatpush2.msra.mxu0 0.0
    %2417 = vmatprep.subr.mxu0 0.0
    %2418 = vmatpush2.msra.mxu0 0.0
    %2419 = vmatprep.mubr.f32.mxu0 0.0
    %2420 = vmatmul.mubr.f32.gmra.mxu0 %v2353
    %v2421 = vpop.f32.mrf.mxu0
    %v2422 = vadd.f32 %v2350, %v2421
    %v2423 = vpop.f32.mrf.mxu0
    %2424 = vdwg.mxu0
    %v2425 = vtanh.pop %v2422
    %v2426 = vld [vmem:[%s15] sm:$0xff]
    %v2427 = vld [vmem:[%s15 + $0x8] sm:$0xff]
    %v2428 = vld [vmem:[%s15 + $0x10] sm:$0xff]
    %v2429 = vld [vmem:[%s16] sm:$0x1]
    %v2431 = vlaneseq
    %v2432 = vshrl.u32 %v2431, 7
    %v2433 = vsub.s32 0, %v2432
    %v2434 = vrot.slane %v2429, %v2433
    %vm2436 = vcmask 195584
    %v2438 = vsel %vm2436, %v2425, 0
    %2440 = vmatprep.subr.mxu0 0.0
    %2441 = vmatpush1.msra.mxu0 0.0
    %2442 = vmatprep.subr.mxu0 0.0
    %2443 = vmatpush1.msra.mxu0 0.0
    %2444 = vmatprep.subr.mxu0 0.0
    %2445 = vmatpush1.msra.mxu0 0.0
    %2446 = vmatprep.subr.mxu0 0.0
    %2447 = vmatpush1.msra.mxu0 0.0
    %2448 = vmatprep.subr.mxu0 0.0
    %2449 = vmatpush1.msra.mxu0 0.0
    %2450 = vmatprep.subr.mxu0 0.0
    %2451 = vmatpush1.msra.mxu0 0.0
    %2452 = vmatprep.subr.mxu0 0.0
    %2453 = vmatpush1.msra.mxu0 0.0
    %2454 = vmatprep.subr.mxu0 0.0
    %2455 = vmatpush1.msra.mxu0 0.0
    %2456 = vmatprep.subr.mxu0 0.0
    %2457 = vmatpush1.msra.mxu0 0.0
    %2458 = vmatprep.subr.mxu0 0.0
    %2459 = vmatpush1.msra.mxu0 0.0
    %2460 = vmatprep.subr.mxu0 0.0
    %2461 = vmatpush1.msra.mxu0 0.0
    %2462 = vmatprep.subr.mxu0 0.0
    %2463 = vmatpush1.msra.mxu0 0.0
    %2464 = vmatprep.subr.mxu0 0.0
    %2465 = vmatpush1.msra.mxu0 0.0
    %2466 = vmatprep.subr.mxu0 0.0
    %2467 = vmatpush1.msra.mxu0 %v2428
    %2468 = vmatprep.subr.mxu0 0.0
    %2469 = vmatpush1.msra.mxu0 %v2427
    %2470 = vmatprep.subr.mxu0 0.0
    %2471 = vmatpush1.msra.mxu0 %v2426
    %2472 = vmatprep.subr.mxu0 0.0
    %2473 = vmatpush2.msra.mxu0 0.0
    %2474 = vmatprep.subr.mxu0 0.0
    %2475 = vmatpush2.msra.mxu0 0.0
    %2476 = vmatprep.subr.mxu0 0.0
    %2477 = vmatpush2.msra.mxu0 0.0
    %2478 = vmatprep.subr.mxu0 0.0
    %2479 = vmatpush2.msra.mxu0 0.0
    %2480 = vmatprep.subr.mxu0 0.0
    %2481 = vmatpush2.msra.mxu0 0.0
    %2482 = vmatprep.subr.mxu0 0.0
    %2483 = vmatpush2.msra.mxu0 0.0
    %2484 = vmatprep.subr.mxu0 0.0
    %2485 = vmatpush2.msra.mxu0 0.0
    %2486 = vmatprep.subr.mxu0 0.0
    %2487 = vmatpush2.msra.mxu0 0.0
    %2488 = vmatprep.subr.mxu0 0.0
    %2489 = vmatpush2.msra.mxu0 0.0
    %2490 = vmatprep.subr.mxu0 0.0
    %2491 = vmatpush2.msra.mxu0 0.0
    %2492 = vmatprep.subr.mxu0 0.0
    %2493 = vmatpush2.msra.mxu0 0.0
    %2494 = vmatprep.subr.mxu0 0.0
    %2495 = vmatpush2.msra.mxu0 0.0
    %2496 = vmatprep.subr.mxu0 0.0
    %2497 = vmatpush2.msra.mxu0 0.0
    %2498 = vmatprep.subr.mxu0 0.0
    %2499 = vmatpush2.msra.mxu0 0.0
    %2500 = vmatprep.subr.mxu0 0.0
    %2501 = vmatpush2.msra.mxu0 0.0
    %2502 = vmatprep.subr.mxu0 0.0
    %2503 = vmatpush2.msra.mxu0 0.0
    %2504 = vmatprep.mubr.f32.mxu0 0.0
    %2505 = vmatmul.mubr.f32.gmra.mxu0 %v2438
    %v2506 = vpop.f32.mrf.mxu0
    %v2507 = vadd.f32 %v2434, %v2506
    %v2508 = vpop.f32.mrf.mxu0
    %2509 = vdwg.mxu0
    %2510 = vst [vmem:[#allocation5] sm:$0x3] %v2507
    // Predicated region
    $region74: #{vqa_forward.1} parent=1 // pred_check
      _
    $region75: #{vqa_forward.1} parent=1 // pred_check_branch
      %2512 = sbr.rel (0) target = $region77
    $region76: #{vqa_forward.1} parent=1 // pred_region
      %s2514 = ssub.s32 32, 32
      %2515 = vsyncadd [#allocation3], %s2514
      %s2517 = sshll.u32 [#allocation5], 4
      %s2518 = int_to_ptr.vmem [resolvable:$true] %s2517
      %2520 = dma.vmem_to_hbm [thread:$0]  %s2518, 32, %s17, [#allocation3]
    $region77: #{vqa_forward.1} parent=1 // pred_fallthru
      _
    // Predicated region
    $region78: #{vqa_forward.1} parent=1 // pred_check
      _
    $region79: #{vqa_forward.1} parent=1 // pred_check_branch
      %2522 = sbr.rel (0) target = $region81
    $region80: #{vqa_forward.1} parent=1 // pred_region
      %s2524 = ssub.s32 256, 256
      %2525 = vsyncadd [#allocation7], %s2524
      %s2526 = sshll.u32 [#allocation6], 4
      %s2527 = int_to_ptr.vmem [resolvable:$true] %s2526
      %2532 = dma.vmem_to_hbm [thread:$0]  %s2527, 256, %s18, [#allocation7], 128, 128, 8
    $region81: #{vqa_forward.1} parent=1 // pred_fallthru
      _
    // Predicated region
    $region82: #{vqa_forward.1} parent=1 // pred_check
      _
    $region83: #{vqa_forward.1} parent=1 // pred_check_branch
      %2534 = sbr.rel (0) target = $region85
    $region84: #{vqa_forward.1} parent=1 // pred_region
      %2535 = dma.done [#allocation3], 32
    $region85: #{vqa_forward.1} parent=1 // pred_fallthru
      _
    // Predicated region
    $region86: #{vqa_forward.1} parent=1 // pred_check
      _
    $region87: #{vqa_forward.1} parent=1 // pred_check_branch
      %2537 = sbr.rel (0) target = $region89
    $region88: #{vqa_forward.1} parent=1 // pred_region
      %2538 = dma.done [#allocation7], 256
    $region89: #{vqa_forward.1} parent=1 // pred_fallthru
      _
    %2539 = vsyncpa [#allocation3], 1
    %2540 = vsyncpa [#allocation7], 1
    %2541 = vsyncpa [#allocation4], 1

</llo_original>
